<compile_context>
chip_gen: v6e
topology: v6e:2x2x1
jax: 0.10.0
libtpu: 0.0.40
codegen_flags: <defaults>
</compile_context>

<pallas_src>
import functools

import jax
import jax.numpy as jnp
from jax.experimental import pallas as pl
from jax.experimental.pallas import tpu as pltpu

EPS = 1e-5
LANE = 128

# Pixel-tile cap.  Per grid step the VMEM footprint is ~2*(TILE_M*Kpad*2B + TILE_M*Cpad*4B)
# + Kpad*Cpad*2B, well inside the scoped-VMEM default for the channel counts used here,
# while >=512-row tiles keep the HBM pipeline near roofline.
TILE_M_MAX = 1024


def _round_up(x, m):
    return (x + m - 1) // m * m


# --------------------------------------------------------------------------------------
# Pallas kernels
# --------------------------------------------------------------------------------------
def _fused_single_tile_kernel(a_ref, w_ref, m_ref, g_ref, b_ref, o_ref, *,
                              inv_count, pooled):
    """One-shot layer: bf16 matmul (MXU, f32 acc) -> batch stats -> BN affine -> ReLU."""
    y = jnp.dot(a_ref[...], w_ref[...], preferred_element_type=jnp.float32)
    if pooled:
        # Pool contributions of columns that share a BatchNorm channel (the 4 output
        # parities of ConvTranspose2d) with a 0/1 matmul: lane-dense, no lane reshapes.
        yp = jnp.dot(y, m_ref[...], preferred_element_type=jnp.float32)
        y2p = jnp.dot(y * y, m_ref[...], preferred_element_type=jnp.float32)
    else:
        yp, y2p = y, y * y
    mean = jnp.sum(yp, axis=0, keepdims=True) * inv_count          # (1, cpad)
    ey2 = jnp.sum(y2p, axis=0, keepdims=True) * inv_count
    var = ey2 - mean * mean                                        # biased batch var
    scale = g_ref[...] * jax.lax.rsqrt(var + EPS)
    shift = b_ref[...] - mean * scale
    o_ref[...] = jnp.maximum(y * scale + shift, 0.0).astype(o_ref.dtype)


def _matmul_stats_kernel(a_ref, w_ref, y_ref, s_ref):
    """Tiled path, phase 1: bf16 matmul + per-tile per-channel sum / sum-of-squares."""
    y = jnp.dot(a_ref[...], w_ref[...], preferred_element_type=jnp.float32)
    y_ref[...] = y
    s_ref[...] = jnp.zeros_like(s_ref)
    s_ref[0:1, :] = jnp.sum(y, axis=0, keepdims=True)
    s_ref[1:2, :] = jnp.sum(y * y, axis=0, keepdims=True)


def _affine_relu_kernel(y_ref, sc_ref, sh_ref, o_ref):
    """Tiled path, phase 2: folded BatchNorm (y*scale + shift) and ReLU on a pixel tile."""
    o_ref[...] = jnp.maximum(y_ref[...] * sc_ref[...] + sh_ref[...],
                             0.0).astype(o_ref.dtype)


# --------------------------------------------------------------------------------------
# Fused  matmul -> BatchNorm(batch stats) -> ReLU  driver
# --------------------------------------------------------------------------------------
def _fused_matmul_bn_relu(patches, wmat, gamma_cols, beta_cols, count,
                          pool_mat=None, out_dtype=jnp.bfloat16, tile_m_max=TILE_M_MAX):
    """patches (Npix, K) x wmat (K, cols) -> BN(batch stats) -> ReLU -> (Npix, cols).

    `pool_mat` (cols, cols), if given, is the 0/1 matrix that pools per-column statistics
    across columns sharing a BatchNorm channel; `count` is the pooled sample count.
    """
    npix, k = patches.shape
    cols = wmat.shape[1]
    kpad = _round_up(k, LANE)
    cpad = _round_up(cols, LANE)
    pooled = pool_mat is not None

    # Lane-dense bf16 MXU operands; zero padding is exact (padded rows/cols contribute
    # exactly 0 to the matmul and the statistics; no bias is added in-kernel).
    wp = jnp.pad(wmat.astype(jnp.bfloat16), ((0, kpad - k), (0, cpad - cols)))
    gp = jnp.pad(gamma_cols.astype(jnp.float32), (0, cpad - cols)).reshape(1, cpad)
    bp = jnp.pad(beta_cols.astype(jnp.float32), (0, cpad - cols)).reshape(1, cpad)

    tile_cap = max(16, _round_up(tile_m_max, 16))   # 16-row multiple: bf16 block tiling

    # ---------------------------------------------------------------- fused path ------
    if npix <= tile_cap:
        mpad = _round_up(npix, 8)
        a = jnp.pad(patches.astype(jnp.bfloat16), ((0, mpad - npix), (0, kpad - k)))
        if pooled:
            mp = jnp.pad(pool_mat.astype(jnp.float32),
                         ((0, cpad - cols), (0, cpad - cols)))
        else:
            mp = jnp.zeros((8, LANE), jnp.float32)   # unread placeholder
        out_pad = pl.pallas_call(
            functools.partial(_fused_single_tile_kernel,
                              inv_count=1.0 / count, pooled=pooled),
            out_shape=jax.ShapeDtypeStruct((mpad, cpad), out_dtype),
            grid=(1,),
            in_specs=[
                pl.BlockSpec((mpad, kpad), lambda i: (0, 0)),
                pl.BlockSpec((kpad, cpad), lambda i: (0, 0)),
                pl.BlockSpec(mp.shape, lambda i: (0, 0)),
                pl.BlockSpec((1, cpad), lambda i: (0, 0)),
                pl.BlockSpec((1, cpad), lambda i: (0, 0)),
            ],
            out_specs=pl.BlockSpec((mpad, cpad), lambda i: (0, 0)),
        )(a, wp, mp, gp, bp)
        return out_pad[:npix, :cols]

    # ------------------------------------------------ tiled two-phase fallback --------
    tile_m = tile_cap
    mpad = _round_up(npix, tile_m)
    grid_m = mpad // tile_m
    a = jnp.pad(patches.astype(jnp.bfloat16), ((0, mpad - npix), (0, kpad - k)))

    y_pad, stats = pl.pallas_call(
        _matmul_stats_kernel,
        out_shape=(jax.ShapeDtypeStruct((mpad, cpad), jnp.float32),
                   jax.ShapeDtypeStruct((grid_m * 8, cpad), jnp.float32)),
        grid=(grid_m,),
        in_specs=[
            pl.BlockSpec((tile_m, kpad), lambda i: (i, 0)),
            pl.BlockSpec((kpad, cpad), lambda i: (0, 0)),
        ],
        out_specs=(
            pl.BlockSpec((tile_m, cpad), lambda i: (i, 0)),
            pl.BlockSpec((8, cpad), lambda i: (i, 0)),
        ),
        compiler_params=pltpu.CompilerParams(dimension_semantics=("parallel",)),
    )(a, wp)

    # Tiny cross-tile fold of the partial statistics (plain JAX, negligible cost).
    part = stats.reshape(grid_m, 8, cpad)
    s = jnp.sum(part[:, 0, :], axis=0)[:cols]
    ss = jnp.sum(part[:, 1, :], axis=0)[:cols]
    if pooled:
        s = jnp.dot(s, pool_mat, precision=jax.lax.Precision.HIGHEST)
        ss = jnp.dot(ss, pool_mat, precision=jax.lax.Precision.HIGHEST)
    mean = s / count
    var = ss / count - mean * mean
    scale = gamma_cols * jax.lax.rsqrt(var + EPS)
    shift = beta_cols - mean * scale

    sc = jnp.pad(scale.astype(jnp.float32), (0, cpad - cols)).reshape(1, cpad)
    sh = jnp.pad(shift.astype(jnp.float32), (0, cpad - cols)).reshape(1, cpad)

    out_pad = pl.pallas_call(
        _affine_relu_kernel,
        out_shape=jax.ShapeDtypeStruct((mpad, cpad), out_dtype),
        grid=(grid_m,),
        in_specs=[
            pl.BlockSpec((tile_m, cpad), lambda i: (i, 0)),
            pl.BlockSpec((1, cpad), lambda i: (0, 0)),
            pl.BlockSpec((1, cpad), lambda i: (0, 0)),
        ],
        out_specs=pl.BlockSpec((tile_m, cpad), lambda i: (i, 0)),
        compiler_params=pltpu.CompilerParams(dimension_semantics=("parallel",)),
    )(y_pad, sc, sh)

    return out_pad[:npix, :cols]


# --------------------------------------------------------------------------------------
# Layer wrappers (JAX glue: patch extraction, weight packing)
# --------------------------------------------------------------------------------------
def _im2col(xp, ho, wo, stride):
    # xp: already-padded NHWC input (bf16); returns (N*Ho*Wo, 9*C), cols = (kh, kw, ci)
    cols = []
    for kh in range(3):
        for kw in range(3):
            sl = xp[:, kh: kh + (ho - 1) * stride + 1: stride,
                       kw: kw + (wo - 1) * stride + 1: stride, :]
            cols.append(sl)
    patches = jnp.concatenate(cols, axis=-1)
    return patches.reshape(-1, patches.shape[-1])


def conv_bn_relu(x, p, stride, out_dtype=jnp.bfloat16, tile_m_max=TILE_M_MAX):
    # Conv2d(k=3, padding=1, stride=stride) as im2col matmul (bias dropped: cancelled
    # exactly by training-mode BatchNorm mean subtraction).
    # TODO(synk): replace the JAX-side im2col with in-kernel 9-tap accumulation
    # (manual halo DMA) to remove the up-to-9x activation duplication in HBM.
    w = p["w"]                                    # OIHW (Cout, Cin, 3, 3)
    cout, cin = w.shape[0], w.shape[1]
    n, h, wd, _ = x.shape
    ho = (h + 2 - 3) // stride + 1
    wo = (wd + 2 - 3) // stride + 1
    xp = jnp.pad(x.astype(jnp.bfloat16), ((0, 0), (1, 1), (1, 1), (0, 0)))
    patches = _im2col(xp, ho, wo, stride)
    wmat = jnp.transpose(w, (2, 3, 1, 0)).reshape(9 * cin, cout)

    y = _fused_matmul_bn_relu(patches, wmat, p["gamma"], p["beta"],
                              count=n * ho * wo, pool_mat=None,
                              out_dtype=out_dtype, tile_m_max=tile_m_max)
    return y.reshape(n, ho, wo, cout)


def _convT_weight_mat(w):
    """(Cin, Cout, 3, 3) ConvTranspose2d weight -> (4*Cin, 4*Cout) phase matmul matrix.

    Row index    = (di*2 + dj)*Cin + ci  with (di, dj) the 2x2 input-window tap,
    column index = (py*2 + px)*Cout + co with (py, px) the output-pixel parity.
    Output pixel (2i+py, 2j+px) = sum over taps x[i+di, j+dj] @ W[:, :, kh, kw] with
    kh = 1 (py=0, di=0), 2 (py=1, di=0), 0 (py=1, di=1); same map for kw/(px, dj).
    All other (parity, tap) pairs hit the zeros of the dilated input and stay 0.
    """
    cin, cout = w.shape[0], w.shape[1]
    kidx = {(0, 0): 1, (1, 0): 2, (1, 1): 0}       # (parity, tap) -> kernel index
    wmat = jnp.zeros((2, 2, cin, 2, 2, cout), w.dtype)
    for di in range(2):
        for dj in range(2):
            for py in range(2):
                for px in range(2):
                    if (py, di) in kidx and (px, dj) in kidx:
                        wmat = wmat.at[di, dj, :, py, px, :].set(
                            w[:, :, kidx[(py, di)], kidx[(px, dj)]])
    return wmat.reshape(4 * cin, 4 * cout)


def convT_bn_relu(x, p, out_dtype=jnp.bfloat16, tile_m_max=TILE_M_MAX):
    # ConvTranspose2d(k=3, stride=2, padding=1, output_padding=1) via the 4-parity
    # decomposition: one (N*H*W, 4*Cin) x (4*Cin, 4*Cout) matmul yields all 2H x 2W
    # outputs without the zero-dilated 3x3 im2col (~2.25x fewer MACs, ~9x less traffic).
    w = p["w"]                                    # (Cin, Cout, 3, 3)
    cin, cout = w.shape[0], w.shape[1]
    n, h, wd, _ = x.shape
    xp = jnp.pad(x.astype(jnp.bfloat16), ((0, 0), (0, 1), (0, 1), (0, 0)))
    taps = [xp[:, di:di + h, dj:dj + wd, :] for di in (0, 1) for dj in (0, 1)]
    patches = jnp.concatenate(taps, axis=-1).reshape(-1, 4 * cin)
    wmat = _convT_weight_mat(w)

    # BN pools the four parity phases that share a channel: 0/1 pooling matrix.
    pool_mat = jnp.tile(jnp.eye(cout, dtype=jnp.float32), (4, 4))
    gamma_cols = jnp.tile(p["gamma"], 4)
    beta_cols = jnp.tile(p["beta"], 4)

    y = _fused_matmul_bn_relu(patches, wmat, gamma_cols, beta_cols,
                              count=4 * n * h * wd, pool_mat=pool_mat,
                              out_dtype=out_dtype, tile_m_max=tile_m_max)
    y = y.reshape(n, h, wd, 2, 2, cout).transpose(0, 1, 3, 2, 4, 5)
    return y.reshape(n, 2 * h, 2 * wd, cout)


# --------------------------------------------------------------------------------------
# Params + recursion (mirrors the PyTorch UNet)
# --------------------------------------------------------------------------------------
def _conv_block_init(key, cin, cout, transposed=False):
    k1, k2, k3, k4 = jax.random.split(key, 4)
    wshape = (cin, cout, 3, 3) if transposed else (cout, cin, 3, 3)
    return {
        "w": 0.1 * jax.random.normal(k1, wshape, jnp.float32),
        # "b" exists for parity with the PyTorch module but has exactly zero effect on
        # the forward pass (training-mode BN subtracts the batch mean); the Pallas path
        # therefore skips it, while the reference keeps it to demonstrate cancellation.
        "b": 0.1 * jax.random.normal(k2, (cout,), jnp.float32),
        "gamma": 1.0 + 0.1 * jax.random.normal(k3, (cout,), jnp.float32),
        "beta": 0.1 * jax.random.normal(k4, (cout,), jnp.float32),
    }


def init_unet_params(key, d, inp_dim, oup_dim):
    if d == 0:
        return {"main": _conv_block_init(key, inp_dim, inp_dim)}, inp_dim
    k_down, k_sub, k_up = jax.random.split(key, 3)
    down = _conv_block_init(k_down, inp_dim, oup_dim)
    sub, sub_oup = init_unet_params(k_sub, d - 1, oup_dim, oup_dim * 2)
    up = _conv_block_init(k_up, sub_oup, oup_dim, transposed=True)
    return {"down": down, "relight": sub, "up": up}, oup_dim + inp_dim


def unet_forward_nhwc(params, x, d, tile_m_max=TILE_M_MAX, top=True):
    # Intermediate activations are bf16 (every consumer casts to bf16 at its conv
    # anyway); only the layer whose output reaches the final concat stays f32.
    act_dt = jnp.float32 if top else jnp.bfloat16
    if d == 0:
        return conv_bn_relu(x, params["main"], stride=1, out_dtype=act_dt,
                            tile_m_max=tile_m_max)
    down = conv_bn_relu(x, params["down"], stride=2, out_dtype=jnp.bfloat16,
                        tile_m_max=tile_m_max)
    tmp = unet_forward_nhwc(params["relight"], down, d - 1, tile_m_max, top=False)
    up = convT_bn_relu(tmp, params["up"], out_dtype=act_dt, tile_m_max=tile_m_max)
    return jnp.concatenate([x, up], axis=-1)      # torch.cat(..., dim=1) in NHWC


def unet_forward(params, x_nchw, d, tile_m_max=TILE_M_MAX):
    x = jnp.transpose(x_nchw, (0, 2, 3, 1))
    y = unet_forward_nhwc(params, x, d, tile_m_max)
    return jnp.transpose(y, (0, 3, 1, 2))


# --------------------------------------------------------------------------------------
# Pure-JAX reference (XLA conv; bf16 operands like the kernel, f32 accumulate/BN)
# --------------------------------------------------------------------------------------
def _ref_bn_relu(y, gamma, beta):
    mean = y.mean(axis=(0, 1, 2), keepdims=True)
    var = ((y - mean) ** 2).mean(axis=(0, 1, 2), keepdims=True)
    return jnp.maximum((y - mean) / jnp.sqrt(var + EPS) * gamma + beta, 0.0)


def _ref_conv(x, w_oihw, b, stride):
    w_hwio = jnp.transpose(w_oihw, (2, 3, 1, 0)).astype(jnp.bfloat16)
    y = jax.lax.conv_general_dilated(x.astype(jnp.bfloat16), w_hwio, (stride, stride),
                                     ((1, 1), (1, 1)),
                                     dimension_numbers=("NHWC", "HWIO", "NHWC"),
                                     preferred_element_type=jnp.float32)
    return y + b                                   # bias kept here (cancelled by BN)


def _ref_convT(x, w_iohw, b):
    w_eq = jnp.transpose(w_iohw[:, :, ::-1, ::-1], (1, 0, 2, 3))
    w_hwio = jnp.transpose(w_eq, (2, 3, 1, 0)).astype(jnp.bfloat16)
    y = jax.lax.conv_general_dilated(x.astype(jnp.bfloat16), w_hwio, (1, 1),
                                     ((1, 2), (1, 2)), lhs_dilation=(2, 2),
                                     dimension_numbers=("NHWC", "HWIO", "NHWC"),
                                     preferred_element_type=jnp.float32)
    return y + b


def ref_forward_nhwc(params, x, d):
    if d == 0:
        p = params["main"]
        return _ref_bn_relu(_ref_conv(x, p["w"], p["b"], 1), p["gamma"], p["beta"])
    p = params["down"]
    down = _ref_bn_relu(_ref_conv(x, p["w"], p["b"], 2), p["gamma"], p["beta"])
    tmp = ref_forward_nhwc(params["relight"], down, d - 1)
    p = params["up"]
    up = _ref_bn_relu(_ref_convT(tmp, p["w"], p["b"]), p["gamma"], p["beta"])
    return jnp.concatenate([x, up.astype(x.dtype)], axis=-1)


# --------------------------------------------------------------------------------------
if __name__ == "__main__":
    D, INP, OUP = 2, 4, 8            # UNet(d=2, inp_dim=4, oup_dim=8) -> out channels 12
    key = jax.random.PRNGKey(0)
    k_par, k_x = jax.random.split(key)
    params, final_oup = init_unet_params(k_par, D, INP, OUP)

    x = jax.random.normal(k_x, (2, INP, 16, 16), jnp.float32)     # NCHW like PyTorch

    fwd = jax.jit(unet_forward, static_argnums=(2, 3))
    out = jax.block_until_ready(fwd(params, x, D, TILE_M_MAX))    # fully fused path
    assert out.shape == (2, final_oup, 16, 16), out.shape          # (2, 12, 16, 16)

    ref = jnp.transpose(ref_forward_nhwc(params, jnp.transpose(x, (0, 2, 3, 1)), D),
                        (0, 3, 1, 2))
    assert bool(jnp.allclose(out, ref, atol=1e-2, rtol=1e-2)), "mismatch vs reference"

    # Also exercise the tiled two-phase pipeline (grid_m > 1 + cross-tile BN reduction).
    out_tiled = jax.block_until_ready(fwd(params, x, D, 32))
    assert bool(jnp.allclose(out_tiled, ref, atol=1e-2, rtol=1e-2)), "mismatch (tiled)"

    print("KERNEL_OK")
</pallas_src>

<mosaic_0001>
module attributes {stable_mosaic.version = 11 : i64} {
  func.func @_fused_single_tile_kernel(%arg0: i32, %arg1: memref<128x128xbf16, #tpu.memory_space<vmem>>, %arg2: memref<128x128xbf16, #tpu.memory_space<vmem>>, %arg3: memref<8x128xf32, #tpu.memory_space<vmem>>, %arg4: memref<1x128xf32, #tpu.memory_space<vmem>>, %arg5: memref<1x128xf32, #tpu.memory_space<vmem>>, %arg6: memref<128x128xbf16, #tpu.memory_space<vmem>>) attributes {dimension_semantics = [#tpu.dimension_semantics<arbitrary>], iteration_bounds = array<i64: 1>, scalar_prefetch = 0 : i64, scratch_operands = 0 : i64, tpu.core_type = #tpu.core_type<tc>, window_params = [{pipeline_mode = #tpu.pipeline_mode<synchronous>, transform_indices = @transform_0, window_bounds = array<i64: 128, 128>}, {pipeline_mode = #tpu.pipeline_mode<synchronous>, transform_indices = @transform_1, window_bounds = array<i64: 128, 128>}, {pipeline_mode = #tpu.pipeline_mode<synchronous>, transform_indices = @transform_2, window_bounds = array<i64: 8, 128>}, {pipeline_mode = #tpu.pipeline_mode<synchronous>, transform_indices = @transform_3, window_bounds = array<i64: 1, 128>}, {pipeline_mode = #tpu.pipeline_mode<synchronous>, transform_indices = @transform_4, window_bounds = array<i64: 1, 128>}, {pipeline_mode = #tpu.pipeline_mode<synchronous>, transform_indices = @transform_5, window_bounds = array<i64: 128, 128>}]} {
    %c0 = arith.constant 0 : index
    %c0_0 = arith.constant 0 : index
    %0 = vector.load %arg1[%c0, %c0_0] : memref<128x128xbf16, #tpu.memory_space<vmem>>, vector<128x128xbf16>
    %c0_1 = arith.constant 0 : index
    %c0_2 = arith.constant 0 : index
    %1 = vector.load %arg2[%c0_1, %c0_2] : memref<128x128xbf16, #tpu.memory_space<vmem>>, vector<128x128xbf16>
    %cst = arith.constant dense<0.000000e+00> : vector<128x128xf32>
    %2 = tpu.matmul %0, %1, %cst {dimension_numbers = #tpu.dot_dimension_numbers<[1], [0], [0], [1], [0, 0, 1, 1], [], []>} : vector<128x128xbf16>, vector<128x128xbf16>, vector<128x128xf32> -> vector<128x128xf32>
    %3 = arith.mulf %2, %2 : vector<128x128xf32>
    %cst_3 = arith.constant dense<0.000000e+00> : vector<128xf32>
    %4 = vector.multi_reduction <add>, %2, %cst_3 [0] : vector<128x128xf32> to vector<128xf32>
    %5 = vector.shape_cast %4 : vector<128xf32> to vector<1x128xf32>
    %cst_4 = arith.constant 7.812500e-03 : f32
    %6 = vector.broadcast %cst_4 : f32 to vector<1x128xf32>
    %7 = arith.mulf %5, %6 : vector<1x128xf32>
    %cst_5 = arith.constant dense<0.000000e+00> : vector<128xf32>
    %8 = vector.multi_reduction <add>, %3, %cst_5 [0] : vector<128x128xf32> to vector<128xf32>
    %9 = vector.shape_cast %8 : vector<128xf32> to vector<1x128xf32>
    %cst_6 = arith.constant 7.812500e-03 : f32
    %10 = vector.broadcast %cst_6 : f32 to vector<1x128xf32>
    %11 = arith.mulf %9, %10 : vector<1x128xf32>
    %12 = arith.mulf %7, %7 : vector<1x128xf32>
    %13 = arith.subf %11, %12 : vector<1x128xf32>
    %c0_7 = arith.constant 0 : index
    %c0_8 = arith.constant 0 : index
    %14 = vector.load %arg4[%c0_7, %c0_8] : memref<1x128xf32, #tpu.memory_space<vmem>>, vector<1x128xf32>
    %cst_9 = arith.constant 9.99999974E-6 : f32
    %15 = vector.broadcast %cst_9 : f32 to vector<1x128xf32>
    %16 = arith.addf %13, %15 : vector<1x128xf32>
    %17 = math.rsqrt %16 : vector<1x128xf32>
    %18 = arith.mulf %14, %17 : vector<1x128xf32>
    %c0_10 = arith.constant 0 : index
    %c0_11 = arith.constant 0 : index
    %19 = vector.load %arg5[%c0_10, %c0_11] : memref<1x128xf32, #tpu.memory_space<vmem>>, vector<1x128xf32>
    %20 = arith.mulf %7, %18 : vector<1x128xf32>
    %21 = arith.subf %19, %20 : vector<1x128xf32>
    %22 = vector.broadcast %18 : vector<1x128xf32> to vector<128x128xf32>
    %23 = arith.mulf %2, %22 : vector<128x128xf32>
    %24 = vector.broadcast %21 : vector<1x128xf32> to vector<128x128xf32>
    %25 = arith.addf %23, %24 : vector<128x128xf32>
    %cst_12 = arith.constant 0.000000e+00 : f32
    %26 = vector.broadcast %cst_12 : f32 to vector<128x128xf32>
    %27 = arith.maximumf %25, %26 : vector<128x128xf32>
    %28 = arith.truncf %27 : vector<128x128xf32> to vector<128x128xbf16>
    %c0_13 = arith.constant 0 : index
    %c0_14 = arith.constant 0 : index
    %29 = vector.load %arg6[%c0_13, %c0_14] : memref<128x128xbf16, #tpu.memory_space<vmem>>, vector<128x128xbf16>
    tpu.vector_store %arg6[%c0_13, %c0_14], %28 {strides = array<i32>} : memref<128x128xbf16, #tpu.memory_space<vmem>>, vector<128x128xbf16>,
    return
  }
  func.func @transform_0(%arg0: i32) -> (i32, i32) {
    %c0_i32 = arith.constant 0 : i32
    %c0_i32_0 = arith.constant 0 : i32
    %c0_i32_1 = arith.constant 0 : i32
    return %c0_i32, %c0_i32_0 : i32, i32
  }
  func.func @transform_1(%arg0: i32) -> (i32, i32) {
    %c0_i32 = arith.constant 0 : i32
    %c0_i32_0 = arith.constant 0 : i32
    %c0_i32_1 = arith.constant 0 : i32
    return %c0_i32, %c0_i32_0 : i32, i32
  }
  func.func @transform_2(%arg0: i32) -> (i32, i32) {
    %c0_i32 = arith.constant 0 : i32
    %c0_i32_0 = arith.constant 0 : i32
    %c0_i32_1 = arith.constant 0 : i32
    return %c0_i32, %c0_i32_0 : i32, i32
  }
  func.func @transform_3(%arg0: i32) -> (i32, i32) {
    %c0_i32 = arith.constant 0 : i32
    %c0_i32_0 = arith.constant 0 : i32
    %c0_i32_1 = arith.constant 0 : i32
    return %c0_i32, %c0_i32_0 : i32, i32
  }
  func.func @transform_4(%arg0: i32) -> (i32, i32) {
    %c0_i32 = arith.constant 0 : i32
    %c0_i32_0 = arith.constant 0 : i32
    %c0_i32_1 = arith.constant 0 : i32
    return %c0_i32, %c0_i32_0 : i32, i32
  }
  func.func @transform_5(%arg0: i32) -> (i32, i32) {
    %c0_i32 = arith.constant 0 : i32
    %c0_i32_0 = arith.constant 0 : i32
    %c0_i32_1 = arith.constant 0 : i32
    return %c0_i32, %c0_i32_0 : i32, i32
  }
}

module attributes {stable_mosaic.version = 11 : i64} {
  func.func @_fused_single_tile_kernel(%arg0: i32, %arg1: memref<32x128xbf16, #tpu.memory_space<vmem>>, %arg2: memref<128x128xbf16, #tpu.memory_space<vmem>>, %arg3: memref<8x128xf32, #tpu.memory_space<vmem>>, %arg4: memref<1x128xf32, #tpu.memory_space<vmem>>, %arg5: memref<1x128xf32, #tpu.memory_space<vmem>>, %arg6: memref<32x128xbf16, #tpu.memory_space<vmem>>) attributes {dimension_semantics = [#tpu.dimension_semantics<arbitrary>], iteration_bounds = array<i64: 1>, scalar_prefetch = 0 : i64, scratch_operands = 0 : i64, tpu.core_type = #tpu.core_type<tc>, window_params = [{pipeline_mode = #tpu.pipeline_mode<synchronous>, transform_indices = @transform_0, window_bounds = array<i64: 32, 128>}, {pipeline_mode = #tpu.pipeline_mode<synchronous>, transform_indices = @transform_1, window_bounds = array<i64: 128, 128>}, {pipeline_mode = #tpu.pipeline_mode<synchronous>, transform_indices = @transform_2, window_bounds = array<i64: 8, 128>}, {pipeline_mode = #tpu.pipeline_mode<synchronous>, transform_indices = @transform_3, window_bounds = array<i64: 1, 128>}, {pipeline_mode = #tpu.pipeline_mode<synchronous>, transform_indices = @transform_4, window_bounds = array<i64: 1, 128>}, {pipeline_mode = #tpu.pipeline_mode<synchronous>, transform_indices = @transform_5, window_bounds = array<i64: 32, 128>}]} {
    %c0 = arith.constant 0 : index
    %c0_0 = arith.constant 0 : index
    %0 = vector.load %arg1[%c0, %c0_0] : memref<32x128xbf16, #tpu.memory_space<vmem>>, vector<32x128xbf16>
    %c0_1 = arith.constant 0 : index
    %c0_2 = arith.constant 0 : index
    %1 = vector.load %arg2[%c0_1, %c0_2] : memref<128x128xbf16, #tpu.memory_space<vmem>>, vector<128x128xbf16>
    %cst = arith.constant dense<0.000000e+00> : vector<32x128xf32>
    %2 = tpu.matmul %0, %1, %cst {dimension_numbers = #tpu.dot_dimension_numbers<[1], [0], [0], [1], [0, 0, 1, 1], [], []>} : vector<32x128xbf16>, vector<128x128xbf16>, vector<32x128xf32> -> vector<32x128xf32>
    %3 = arith.mulf %2, %2 : vector<32x128xf32>
    %cst_3 = arith.constant dense<0.000000e+00> : vector<128xf32>
    %4 = vector.multi_reduction <add>, %2, %cst_3 [0] : vector<32x128xf32> to vector<128xf32>
    %5 = vector.shape_cast %4 : vector<128xf32> to vector<1x128xf32>
    %cst_4 = arith.constant 3.125000e-02 : f32
    %6 = vector.broadcast %cst_4 : f32 to vector<1x128xf32>
    %7 = arith.mulf %5, %6 : vector<1x128xf32>
    %cst_5 = arith.constant dense<0.000000e+00> : vector<128xf32>
    %8 = vector.multi_reduction <add>, %3, %cst_5 [0] : vector<32x128xf32> to vector<128xf32>
    %9 = vector.shape_cast %8 : vector<128xf32> to vector<1x128xf32>
    %cst_6 = arith.constant 3.125000e-02 : f32
    %10 = vector.broadcast %cst_6 : f32 to vector<1x128xf32>
    %11 = arith.mulf %9, %10 : vector<1x128xf32>
    %12 = arith.mulf %7, %7 : vector<1x128xf32>
    %13 = arith.subf %11, %12 : vector<1x128xf32>
    %c0_7 = arith.constant 0 : index
    %c0_8 = arith.constant 0 : index
    %14 = vector.load %arg4[%c0_7, %c0_8] : memref<1x128xf32, #tpu.memory_space<vmem>>, vector<1x128xf32>
    %cst_9 = arith.constant 9.99999974E-6 : f32
    %15 = vector.broadcast %cst_9 : f32 to vector<1x128xf32>
    %16 = arith.addf %13, %15 : vector<1x128xf32>
    %17 = math.rsqrt %16 : vector<1x128xf32>
    %18 = arith.mulf %14, %17 : vector<1x128xf32>
    %c0_10 = arith.constant 0 : index
    %c0_11 = arith.constant 0 : index
    %19 = vector.load %arg5[%c0_10, %c0_11] : memref<1x128xf32, #tpu.memory_space<vmem>>, vector<1x128xf32>
    %20 = arith.mulf %7, %18 : vector<1x128xf32>
    %21 = arith.subf %19, %20 : vector<1x128xf32>
    %22 = vector.broadcast %18 : vector<1x128xf32> to vector<32x128xf32>
    %23 = arith.mulf %2, %22 : vector<32x128xf32>
    %24 = vector.broadcast %21 : vector<1x128xf32> to vector<32x128xf32>
    %25 = arith.addf %23, %24 : vector<32x128xf32>
    %cst_12 = arith.constant 0.000000e+00 : f32
    %26 = vector.broadcast %cst_12 : f32 to vector<32x128xf32>
    %27 = arith.maximumf %25, %26 : vector<32x128xf32>
    %28 = arith.truncf %27 : vector<32x128xf32> to vector<32x128xbf16>
    %c0_13 = arith.constant 0 : index
    %c0_14 = arith.constant 0 : index
    %29 = vector.load %arg6[%c0_13, %c0_14] : memref<32x128xbf16, #tpu.memory_space<vmem>>, vector<32x128xbf16>
    tpu.vector_store %arg6[%c0_13, %c0_14], %28 {strides = array<i32>} : memref<32x128xbf16, #tpu.memory_space<vmem>>, vector<32x128xbf16>,
    return
  }
  func.func @transform_0(%arg0: i32) -> (i32, i32) {
    %c0_i32 = arith.constant 0 : i32
    %c0_i32_0 = arith.constant 0 : i32
    %c0_i32_1 = arith.constant 0 : i32
    return %c0_i32, %c0_i32_0 : i32, i32
  }
  func.func @transform_1(%arg0: i32) -> (i32, i32) {
    %c0_i32 = arith.constant 0 : i32
    %c0_i32_0 = arith.constant 0 : i32
    %c0_i32_1 = arith.constant 0 : i32
    return %c0_i32, %c0_i32_0 : i32, i32
  }
  func.func @transform_2(%arg0: i32) -> (i32, i32) {
    %c0_i32 = arith.constant 0 : i32
    %c0_i32_0 = arith.constant 0 : i32
    %c0_i32_1 = arith.constant 0 : i32
    return %c0_i32, %c0_i32_0 : i32, i32
  }
  func.func @transform_3(%arg0: i32) -> (i32, i32) {
    %c0_i32 = arith.constant 0 : i32
    %c0_i32_0 = arith.constant 0 : i32
    %c0_i32_1 = arith.constant 0 : i32
    return %c0_i32, %c0_i32_0 : i32, i32
  }
  func.func @transform_4(%arg0: i32) -> (i32, i32) {
    %c0_i32 = arith.constant 0 : i32
    %c0_i32_0 = arith.constant 0 : i32
    %c0_i32_1 = arith.constant 0 : i32
    return %c0_i32, %c0_i32_0 : i32, i32
  }
  func.func @transform_5(%arg0: i32) -> (i32, i32) {
    %c0_i32 = arith.constant 0 : i32
    %c0_i32_0 = arith.constant 0 : i32
    %c0_i32_1 = arith.constant 0 : i32
    return %c0_i32, %c0_i32_0 : i32, i32
  }
}

module attributes {stable_mosaic.version = 11 : i64} {
  func.func @_fused_single_tile_kernel(%arg0: i32, %arg1: memref<32x256xbf16, #tpu.memory_space<vmem>>, %arg2: memref<256x128xbf16, #tpu.memory_space<vmem>>, %arg3: memref<8x128xf32, #tpu.memory_space<vmem>>, %arg4: memref<1x128xf32, #tpu.memory_space<vmem>>, %arg5: memref<1x128xf32, #tpu.memory_space<vmem>>, %arg6: memref<32x128xbf16, #tpu.memory_space<vmem>>) attributes {dimension_semantics = [#tpu.dimension_semantics<arbitrary>], iteration_bounds = array<i64: 1>, scalar_prefetch = 0 : i64, scratch_operands = 0 : i64, tpu.core_type = #tpu.core_type<tc>, window_params = [{pipeline_mode = #tpu.pipeline_mode<synchronous>, transform_indices = @transform_0, window_bounds = array<i64: 32, 256>}, {pipeline_mode = #tpu.pipeline_mode<synchronous>, transform_indices = @transform_1, window_bounds = array<i64: 256, 128>}, {pipeline_mode = #tpu.pipeline_mode<synchronous>, transform_indices = @transform_2, window_bounds = array<i64: 8, 128>}, {pipeline_mode = #tpu.pipeline_mode<synchronous>, transform_indices = @transform_3, window_bounds = array<i64: 1, 128>}, {pipeline_mode = #tpu.pipeline_mode<synchronous>, transform_indices = @transform_4, window_bounds = array<i64: 1, 128>}, {pipeline_mode = #tpu.pipeline_mode<synchronous>, transform_indices = @transform_5, window_bounds = array<i64: 32, 128>}]} {
    %c0 = arith.constant 0 : index
    %c0_0 = arith.constant 0 : index
    %0 = vector.load %arg1[%c0, %c0_0] : memref<32x256xbf16, #tpu.memory_space<vmem>>, vector<32x256xbf16>
    %c0_1 = arith.constant 0 : index
    %c0_2 = arith.constant 0 : index
    %1 = vector.load %arg2[%c0_1, %c0_2] : memref<256x128xbf16, #tpu.memory_space<vmem>>, vector<256x128xbf16>
    %cst = arith.constant dense<0.000000e+00> : vector<32x128xf32>
    %2 = tpu.matmul %0, %1, %cst {dimension_numbers = #tpu.dot_dimension_numbers<[1], [0], [0], [1], [0, 0, 1, 1], [], []>} : vector<32x256xbf16>, vector<256x128xbf16>, vector<32x128xf32> -> vector<32x128xf32>
    %3 = arith.mulf %2, %2 : vector<32x128xf32>
    %cst_3 = arith.constant dense<0.000000e+00> : vector<128xf32>
    %4 = vector.multi_reduction <add>, %2, %cst_3 [0] : vector<32x128xf32> to vector<128xf32>
    %5 = vector.shape_cast %4 : vector<128xf32> to vector<1x128xf32>
    %cst_4 = arith.constant 3.125000e-02 : f32
    %6 = vector.broadcast %cst_4 : f32 to vector<1x128xf32>
    %7 = arith.mulf %5, %6 : vector<1x128xf32>
    %cst_5 = arith.constant dense<0.000000e+00> : vector<128xf32>
    %8 = vector.multi_reduction <add>, %3, %cst_5 [0] : vector<32x128xf32> to vector<128xf32>
    %9 = vector.shape_cast %8 : vector<128xf32> to vector<1x128xf32>
    %cst_6 = arith.constant 3.125000e-02 : f32
    %10 = vector.broadcast %cst_6 : f32 to vector<1x128xf32>
    %11 = arith.mulf %9, %10 : vector<1x128xf32>
    %12 = arith.mulf %7, %7 : vector<1x128xf32>
    %13 = arith.subf %11, %12 : vector<1x128xf32>
    %c0_7 = arith.constant 0 : index
    %c0_8 = arith.constant 0 : index
    %14 = vector.load %arg4[%c0_7, %c0_8] : memref<1x128xf32, #tpu.memory_space<vmem>>, vector<1x128xf32>
    %cst_9 = arith.constant 9.99999974E-6 : f32
    %15 = vector.broadcast %cst_9 : f32 to vector<1x128xf32>
    %16 = arith.addf %13, %15 : vector<1x128xf32>
    %17 = math.rsqrt %16 : vector<1x128xf32>
    %18 = arith.mulf %14, %17 : vector<1x128xf32>
    %c0_10 = arith.constant 0 : index
    %c0_11 = arith.constant 0 : index
    %19 = vector.load %arg5[%c0_10, %c0_11] : memref<1x128xf32, #tpu.memory_space<vmem>>, vector<1x128xf32>
    %20 = arith.mulf %7, %18 : vector<1x128xf32>
    %21 = arith.subf %19, %20 : vector<1x128xf32>
    %22 = vector.broadcast %18 : vector<1x128xf32> to vector<32x128xf32>
    %23 = arith.mulf %2, %22 : vector<32x128xf32>
    %24 = vector.broadcast %21 : vector<1x128xf32> to vector<32x128xf32>
    %25 = arith.addf %23, %24 : vector<32x128xf32>
    %cst_12 = arith.constant 0.000000e+00 : f32
    %26 = vector.broadcast %cst_12 : f32 to vector<32x128xf32>
    %27 = arith.maximumf %25, %26 : vector<32x128xf32>
    %28 = arith.truncf %27 : vector<32x128xf32> to vector<32x128xbf16>
    %c0_13 = arith.constant 0 : index
    %c0_14 = arith.constant 0 : index
    %29 = vector.load %arg6[%c0_13, %c0_14] : memref<32x128xbf16, #tpu.memory_space<vmem>>, vector<32x128xbf16>
    tpu.vector_store %arg6[%c0_13, %c0_14], %28 {strides = array<i32>} : memref<32x128xbf16, #tpu.memory_space<vmem>>, vector<32x128xbf16>,
    return
  }
  func.func @transform_0(%arg0: i32) -> (i32, i32) {
    %c0_i32 = arith.constant 0 : i32
    %c0_i32_0 = arith.constant 0 : i32
    %c0_i32_1 = arith.constant 0 : i32
    return %c0_i32, %c0_i32_0 : i32, i32
  }
  func.func @transform_1(%arg0: i32) -> (i32, i32) {
    %c0_i32 = arith.constant 0 : i32
    %c0_i32_0 = arith.constant 0 : i32
    %c0_i32_1 = arith.constant 0 : i32
    return %c0_i32, %c0_i32_0 : i32, i32
  }
  func.func @transform_2(%arg0: i32) -> (i32, i32) {
    %c0_i32 = arith.constant 0 : i32
    %c0_i32_0 = arith.constant 0 : i32
    %c0_i32_1 = arith.constant 0 : i32
    return %c0_i32, %c0_i32_0 : i32, i32
  }
  func.func @transform_3(%arg0: i32) -> (i32, i32) {
    %c0_i32 = arith.constant 0 : i32
    %c0_i32_0 = arith.constant 0 : i32
    %c0_i32_1 = arith.constant 0 : i32
    return %c0_i32, %c0_i32_0 : i32, i32
  }
  func.func @transform_4(%arg0: i32) -> (i32, i32) {
    %c0_i32 = arith.constant 0 : i32
    %c0_i32_0 = arith.constant 0 : i32
    %c0_i32_1 = arith.constant 0 : i32
    return %c0_i32, %c0_i32_0 : i32, i32
  }
  func.func @transform_5(%arg0: i32) -> (i32, i32) {
    %c0_i32 = arith.constant 0 : i32
    %c0_i32_0 = arith.constant 0 : i32
    %c0_i32_1 = arith.constant 0 : i32
    return %c0_i32, %c0_i32_0 : i32, i32
  }
}

module attributes {stable_mosaic.version = 11 : i64} {
  func.func @_fused_single_tile_kernel(%arg0: i32, %arg1: memref<32x128xbf16, #tpu.memory_space<vmem>>, %arg2: memref<128x128xbf16, #tpu.memory_space<vmem>>, %arg3: memref<128x128xf32, #tpu.memory_space<vmem>>, %arg4: memref<1x128xf32, #tpu.memory_space<vmem>>, %arg5: memref<1x128xf32, #tpu.memory_space<vmem>>, %arg6: memref<32x128xbf16, #tpu.memory_space<vmem>>) attributes {dimension_semantics = [#tpu.dimension_semantics<arbitrary>], iteration_bounds = array<i64: 1>, scalar_prefetch = 0 : i64, scratch_operands = 0 : i64, tpu.core_type = #tpu.core_type<tc>, window_params = [{pipeline_mode = #tpu.pipeline_mode<synchronous>, transform_indices = @transform_0, window_bounds = array<i64: 32, 128>}, {pipeline_mode = #tpu.pipeline_mode<synchronous>, transform_indices = @transform_1, window_bounds = array<i64: 128, 128>}, {pipeline_mode = #tpu.pipeline_mode<synchronous>, transform_indices = @transform_2, window_bounds = array<i64: 128, 128>}, {pipeline_mode = #tpu.pipeline_mode<synchronous>, transform_indices = @transform_3, window_bounds = array<i64: 1, 128>}, {pipeline_mode = #tpu.pipeline_mode<synchronous>, transform_indices = @transform_4, window_bounds = array<i64: 1, 128>}, {pipeline_mode = #tpu.pipeline_mode<synchronous>, transform_indices = @transform_5, window_bounds = array<i64: 32, 128>}]} {
    %c0 = arith.constant 0 : index
    %c0_0 = arith.constant 0 : index
    %0 = vector.load %arg1[%c0, %c0_0] : memref<32x128xbf16, #tpu.memory_space<vmem>>, vector<32x128xbf16>
    %c0_1 = arith.constant 0 : index
    %c0_2 = arith.constant 0 : index
    %1 = vector.load %arg2[%c0_1, %c0_2] : memref<128x128xbf16, #tpu.memory_space<vmem>>, vector<128x128xbf16>
    %cst = arith.constant dense<0.000000e+00> : vector<32x128xf32>
    %2 = tpu.matmul %0, %1, %cst {dimension_numbers = #tpu.dot_dimension_numbers<[1], [0], [0], [1], [0, 0, 1, 1], [], []>} : vector<32x128xbf16>, vector<128x128xbf16>, vector<32x128xf32> -> vector<32x128xf32>
    %c0_3 = arith.constant 0 : index
    %c0_4 = arith.constant 0 : index
    %3 = vector.load %arg3[%c0_3, %c0_4] : memref<128x128xf32, #tpu.memory_space<vmem>>, vector<128x128xf32>
    %cst_5 = arith.constant dense<0.000000e+00> : vector<32x128xf32>
    %4 = tpu.matmul %2, %3, %cst_5 {dimension_numbers = #tpu.dot_dimension_numbers<[1], [0], [0], [1], [0, 0, 1, 1], [], []>} : vector<32x128xf32>, vector<128x128xf32>, vector<32x128xf32> -> vector<32x128xf32>
    %5 = arith.mulf %2, %2 : vector<32x128xf32>
    %c0_6 = arith.constant 0 : index
    %c0_7 = arith.constant 0 : index
    %6 = vector.load %arg3[%c0_6, %c0_7] : memref<128x128xf32, #tpu.memory_space<vmem>>, vector<128x128xf32>
    %cst_8 = arith.constant dense<0.000000e+00> : vector<32x128xf32>
    %7 = tpu.matmul %5, %6, %cst_8 {dimension_numbers = #tpu.dot_dimension_numbers<[1], [0], [0], [1], [0, 0, 1, 1], [], []>} : vector<32x128xf32>, vector<128x128xf32>, vector<32x128xf32> -> vector<32x128xf32>
    %cst_9 = arith.constant dense<0.000000e+00> : vector<128xf32>
    %8 = vector.multi_reduction <add>, %4, %cst_9 [0] : vector<32x128xf32> to vector<128xf32>
    %9 = vector.shape_cast %8 : vector<128xf32> to vector<1x128xf32>
    %cst_10 = arith.constant 7.812500e-03 : f32
    %10 = vector.broadcast %cst_10 : f32 to vector<1x128xf32>
    %11 = arith.mulf %9, %10 : vector<1x128xf32>
    %cst_11 = arith.constant dense<0.000000e+00> : vector<128xf32>
    %12 = vector.multi_reduction <add>, %7, %cst_11 [0] : vector<32x128xf32> to vector<128xf32>
    %13 = vector.shape_cast %12 : vector<128xf32> to vector<1x128xf32>
    %cst_12 = arith.constant 7.812500e-03 : f32
    %14 = vector.broadcast %cst_12 : f32 to vector<1x128xf32>
    %15 = arith.mulf %13, %14 : vector<1x128xf32>
    %16 = arith.mulf %11, %11 : vector<1x128xf32>
    %17 = arith.subf %15, %16 : vector<1x128xf32>
    %c0_13 = arith.constant 0 : index
    %c0_14 = arith.constant 0 : index
    %18 = vector.load %arg4[%c0_13, %c0_14] : memref<1x128xf32, #tpu.memory_space<vmem>>, vector<1x128xf32>
    %cst_15 = arith.constant 9.99999974E-6 : f32
    %19 = vector.broadcast %cst_15 : f32 to vector<1x128xf32>
    %20 = arith.addf %17, %19 : vector<1x128xf32>
    %21 = math.rsqrt %20 : vector<1x128xf32>
    %22 = arith.mulf %18, %21 : vector<1x128xf32>
    %c0_16 = arith.constant 0 : index
    %c0_17 = arith.constant 0 : index
    %23 = vector.load %arg5[%c0_16, %c0_17] : memref<1x128xf32, #tpu.memory_space<vmem>>, vector<1x128xf32>
    %24 = arith.mulf %11, %22 : vector<1x128xf32>
    %25 = arith.subf %23, %24 : vector<1x128xf32>
    %26 = vector.broadcast %22 : vector<1x128xf32> to vector<32x128xf32>
    %27 = arith.mulf %2, %26 : vector<32x128xf32>
    %28 = vector.broadcast %25 : vector<1x128xf32> to vector<32x128xf32>
    %29 = arith.addf %27, %28 : vector<32x128xf32>
    %cst_18 = arith.constant 0.000000e+00 : f32
    %30 = vector.broadcast %cst_18 : f32 to vector<32x128xf32>
    %31 = arith.maximumf %29, %30 : vector<32x128xf32>
    %32 = arith.truncf %31 : vector<32x128xf32> to vector<32x128xbf16>
    %c0_19 = arith.constant 0 : index
    %c0_20 = arith.constant 0 : index
    %33 = vector.load %arg6[%c0_19, %c0_20] : memref<32x128xbf16, #tpu.memory_space<vmem>>, vector<32x128xbf16>
    tpu.vector_store %arg6[%c0_19, %c0_20], %32 {strides = array<i32>} : memref<32x128xbf16, #tpu.memory_space<vmem>>, vector<32x128xbf16>,
    return
  }
  func.func @transform_0(%arg0: i32) -> (i32, i32) {
    %c0_i32 = arith.constant 0 : i32
    %c0_i32_0 = arith.constant 0 : i32
    %c0_i32_1 = arith.constant 0 : i32
    return %c0_i32, %c0_i32_0 : i32, i32
  }
  func.func @transform_1(%arg0: i32) -> (i32, i32) {
    %c0_i32 = arith.constant 0 : i32
    %c0_i32_0 = arith.constant 0 : i32
    %c0_i32_1 = arith.constant 0 : i32
    return %c0_i32, %c0_i32_0 : i32, i32
  }
  func.func @transform_2(%arg0: i32) -> (i32, i32) {
    %c0_i32 = arith.constant 0 : i32
    %c0_i32_0 = arith.constant 0 : i32
    %c0_i32_1 = arith.constant 0 : i32
    return %c0_i32, %c0_i32_0 : i32, i32
  }
  func.func @transform_3(%arg0: i32) -> (i32, i32) {
    %c0_i32 = arith.constant 0 : i32
    %c0_i32_0 = arith.constant 0 : i32
    %c0_i32_1 = arith.constant 0 : i32
    return %c0_i32, %c0_i32_0 : i32, i32
  }
  func.func @transform_4(%arg0: i32) -> (i32, i32) {
    %c0_i32 = arith.constant 0 : i32
    %c0_i32_0 = arith.constant 0 : i32
    %c0_i32_1 = arith.constant 0 : i32
    return %c0_i32, %c0_i32_0 : i32, i32
  }
  func.func @transform_5(%arg0: i32) -> (i32, i32) {
    %c0_i32 = arith.constant 0 : i32
    %c0_i32_0 = arith.constant 0 : i32
    %c0_i32_1 = arith.constant 0 : i32
    return %c0_i32, %c0_i32_0 : i32, i32
  }
}

module attributes {stable_mosaic.version = 11 : i64} {
  func.func @_fused_single_tile_kernel(%arg0: i32, %arg1: memref<128x128xbf16, #tpu.memory_space<vmem>>, %arg2: memref<128x128xbf16, #tpu.memory_space<vmem>>, %arg3: memref<128x128xf32, #tpu.memory_space<vmem>>, %arg4: memref<1x128xf32, #tpu.memory_space<vmem>>, %arg5: memref<1x128xf32, #tpu.memory_space<vmem>>, %arg6: memref<128x128xf32, #tpu.memory_space<vmem>>) attributes {dimension_semantics = [#tpu.dimension_semantics<arbitrary>], iteration_bounds = array<i64: 1>, scalar_prefetch = 0 : i64, scratch_operands = 0 : i64, tpu.core_type = #tpu.core_type<tc>, window_params = [{pipeline_mode = #tpu.pipeline_mode<synchronous>, transform_indices = @transform_0, window_bounds = array<i64: 128, 128>}, {pipeline_mode = #tpu.pipeline_mode<synchronous>, transform_indices = @transform_1, window_bounds = array<i64: 128, 128>}, {pipeline_mode = #tpu.pipeline_mode<synchronous>, transform_indices = @transform_2, window_bounds = array<i64: 128, 128>}, {pipeline_mode = #tpu.pipeline_mode<synchronous>, transform_indices = @transform_3, window_bounds = array<i64: 1, 128>}, {pipeline_mode = #tpu.pipeline_mode<synchronous>, transform_indices = @transform_4, window_bounds = array<i64: 1, 128>}, {pipeline_mode = #tpu.pipeline_mode<synchronous>, transform_indices = @transform_5, window_bounds = array<i64: 128, 128>}]} {
    %c0 = arith.constant 0 : index
    %c0_0 = arith.constant 0 : index
    %0 = vector.load %arg1[%c0, %c0_0] : memref<128x128xbf16, #tpu.memory_space<vmem>>, vector<128x128xbf16>
    %c0_1 = arith.constant 0 : index
    %c0_2 = arith.constant 0 : index
    %1 = vector.load %arg2[%c0_1, %c0_2] : memref<128x128xbf16, #tpu.memory_space<vmem>>, vector<128x128xbf16>
    %cst = arith.constant dense<0.000000e+00> : vector<128x128xf32>
    %2 = tpu.matmul %0, %1, %cst {dimension_numbers = #tpu.dot_dimension_numbers<[1], [0], [0], [1], [0, 0, 1, 1], [], []>} : vector<128x128xbf16>, vector<128x128xbf16>, vector<128x128xf32> -> vector<128x128xf32>
    %c0_3 = arith.constant 0 : index
    %c0_4 = arith.constant 0 : index
    %3 = vector.load %arg3[%c0_3, %c0_4] : memref<128x128xf32, #tpu.memory_space<vmem>>, vector<128x128xf32>
    %cst_5 = arith.constant dense<0.000000e+00> : vector<128x128xf32>
    %4 = tpu.matmul %2, %3, %cst_5 {dimension_numbers = #tpu.dot_dimension_numbers<[1], [0], [0], [1], [0, 0, 1, 1], [], []>} : vector<128x128xf32>, vector<128x128xf32>, vector<128x128xf32> -> vector<128x128xf32>
    %5 = arith.mulf %2, %2 : vector<128x128xf32>
    %c0_6 = arith.constant 0 : index
    %c0_7 = arith.constant 0 : index
    %6 = vector.load %arg3[%c0_6, %c0_7] : memref<128x128xf32, #tpu.memory_space<vmem>>, vector<128x128xf32>
    %cst_8 = arith.constant dense<0.000000e+00> : vector<128x128xf32>
    %7 = tpu.matmul %5, %6, %cst_8 {dimension_numbers = #tpu.dot_dimension_numbers<[1], [0], [0], [1], [0, 0, 1, 1], [], []>} : vector<128x128xf32>, vector<128x128xf32>, vector<128x128xf32> -> vector<128x128xf32>
    %cst_9 = arith.constant dense<0.000000e+00> : vector<128xf32>
    %8 = vector.multi_reduction <add>, %4, %cst_9 [0] : vector<128x128xf32> to vector<128xf32>
    %9 = vector.shape_cast %8 : vector<128xf32> to vector<1x128xf32>
    %cst_10 = arith.constant 0.001953125 : f32
    %10 = vector.broadcast %cst_10 : f32 to vector<1x128xf32>
    %11 = arith.mulf %9, %10 : vector<1x128xf32>
    %cst_11 = arith.constant dense<0.000000e+00> : vector<128xf32>
    %12 = vector.multi_reduction <add>, %7, %cst_11 [0] : vector<128x128xf32> to vector<128xf32>
    %13 = vector.shape_cast %12 : vector<128xf32> to vector<1x128xf32>
    %cst_12 = arith.constant 0.001953125 : f32
    %14 = vector.broadcast %cst_12 : f32 to vector<1x128xf32>
    %15 = arith.mulf %13, %14 : vector<1x128xf32>
    %16 = arith.mulf %11, %11 : vector<1x128xf32>
    %17 = arith.subf %15, %16 : vector<1x128xf32>
    %c0_13 = arith.constant 0 : index
    %c0_14 = arith.constant 0 : index
    %18 = vector.load %arg4[%c0_13, %c0_14] : memref<1x128xf32, #tpu.memory_space<vmem>>, vector<1x128xf32>
    %cst_15 = arith.constant 9.99999974E-6 : f32
    %19 = vector.broadcast %cst_15 : f32 to vector<1x128xf32>
    %20 = arith.addf %17, %19 : vector<1x128xf32>
    %21 = math.rsqrt %20 : vector<1x128xf32>
    %22 = arith.mulf %18, %21 : vector<1x128xf32>
    %c0_16 = arith.constant 0 : index
    %c0_17 = arith.constant 0 : index
    %23 = vector.load %arg5[%c0_16, %c0_17] : memref<1x128xf32, #tpu.memory_space<vmem>>, vector<1x128xf32>
    %24 = arith.mulf %11, %22 : vector<1x128xf32>
    %25 = arith.subf %23, %24 : vector<1x128xf32>
    %26 = vector.broadcast %22 : vector<1x128xf32> to vector<128x128xf32>
    %27 = arith.mulf %2, %26 : vector<128x128xf32>
    %28 = vector.broadcast %25 : vector<1x128xf32> to vector<128x128xf32>
    %29 = arith.addf %27, %28 : vector<128x128xf32>
    %cst_18 = arith.constant 0.000000e+00 : f32
    %30 = vector.broadcast %cst_18 : f32 to vector<128x128xf32>
    %31 = arith.maximumf %29, %30 : vector<128x128xf32>
    %c0_19 = arith.constant 0 : index
    %c0_20 = arith.constant 0 : index
    %32 = vector.load %arg6[%c0_19, %c0_20] : memref<128x128xf32, #tpu.memory_space<vmem>>, vector<128x128xf32>
    tpu.vector_store %arg6[%c0_19, %c0_20], %31 {strides = array<i32>} : memref<128x128xf32, #tpu.memory_space<vmem>>, vector<128x128xf32>,
    return
  }
  func.func @transform_0(%arg0: i32) -> (i32, i32) {
    %c0_i32 = arith.constant 0 : i32
    %c0_i32_0 = arith.constant 0 : i32
    %c0_i32_1 = arith.constant 0 : i32
    return %c0_i32, %c0_i32_0 : i32, i32
  }
  func.func @transform_1(%arg0: i32) -> (i32, i32) {
    %c0_i32 = arith.constant 0 : i32
    %c0_i32_0 = arith.constant 0 : i32
    %c0_i32_1 = arith.constant 0 : i32
    return %c0_i32, %c0_i32_0 : i32, i32
  }
  func.func @transform_2(%arg0: i32) -> (i32, i32) {
    %c0_i32 = arith.constant 0 : i32
    %c0_i32_0 = arith.constant 0 : i32
    %c0_i32_1 = arith.constant 0 : i32
    return %c0_i32, %c0_i32_0 : i32, i32
  }
  func.func @transform_3(%arg0: i32) -> (i32, i32) {
    %c0_i32 = arith.constant 0 : i32
    %c0_i32_0 = arith.constant 0 : i32
    %c0_i32_1 = arith.constant 0 : i32
    return %c0_i32, %c0_i32_0 : i32, i32
  }
  func.func @transform_4(%arg0: i32) -> (i32, i32) {
    %c0_i32 = arith.constant 0 : i32
    %c0_i32_0 = arith.constant 0 : i32
    %c0_i32_1 = arith.constant 0 : i32
    return %c0_i32, %c0_i32_0 : i32, i32
  }
  func.func @transform_5(%arg0: i32) -> (i32, i32) {
    %c0_i32 = arith.constant 0 : i32
    %c0_i32_0 = arith.constant 0 : i32
    %c0_i32_1 = arith.constant 0 : i32
    return %c0_i32, %c0_i32_0 : i32, i32
  }
}

</mosaic_0001>

<llo_original>
// kernel: unet_forward.5
$region0: #{unet_forward.5}
  #allocation0 [shape = 'u32[]', space=smem, size = 0x4, offset = 0x4, fixed_abs, tag = 'smem constant byte address 0x4 - core index']
  #allocation1 [shape = 'u32[144,128]{1,0:T(1,128)}', space=vmem, size = 0x12000, scoped, tag = 'internal scratch']
  %s0 = inlined_call_operand.vmem [shape: bf16[128,128], index: 0, kind: input, shape index: {}]
  %s1 = inlined_call_operand.vmem [shape: bf16[128,128], index: 1, kind: input, shape index: {}]
  %s2 = inlined_call_operand.vmem [shape: f32[8,128], index: 2, kind: input, shape index: {}]
  %s3 = inlined_call_operand.vmem [shape: f32[1,128], index: 3, kind: input, shape index: {}]
  %s4 = inlined_call_operand.vmem [shape: f32[1,128], index: 4, kind: input, shape index: {}]
  %s5 = inlined_call_operand.vmem [shape: bf16[128,128], index: 5, kind: output, shape index: {}]
  %s6 = sld [smem:[#allocation0]]
  $region30: #{unet_forward.5} parent=0
    _
  %s8 = ssub.s32 1, %s6
  %s9 = scalar_select 0, %s8, %s6
  // Predicated region
  $region2: #{unet_forward.5} parent=0 // pred_check
    _
  $region3: #{unet_forward.5} parent=0 // pred_check_branch
    %11 = sbr.rel (0) target = $region5
  $region4: #{unet_forward.5} parent=0 // pred_region
    _
  $region5: #{unet_forward.5} parent=0 // pred_fallthru
    _
  // Predicated region
  $region6: #{unet_forward.5} parent=0 // pred_check
    _
  $region7: #{unet_forward.5} parent=0 // pred_check_branch
    %13 = sbr.rel (0) target = $region9
  $region8: #{unet_forward.5} parent=0 // pred_region
    _
  $region9: #{unet_forward.5} parent=0 // pred_fallthru
    _
  // Predicated region
  $region10: #{unet_forward.5} parent=0 // pred_check
    _
  $region11: #{unet_forward.5} parent=0 // pred_check_branch
    %15 = sbr.rel (0) target = $region13
  $region12: #{unet_forward.5} parent=0 // pred_region
    _
  $region13: #{unet_forward.5} parent=0 // pred_fallthru
    _
  // Predicated region
  $region14: #{unet_forward.5} parent=0 // pred_check
    _
  $region15: #{unet_forward.5} parent=0 // pred_check_branch
    %17 = sbr.rel (0) target = $region17
  $region16: #{unet_forward.5} parent=0 // pred_region
    _
  $region17: #{unet_forward.5} parent=0 // pred_fallthru
    _
  // Predicated region
  $region18: #{unet_forward.5} parent=0 // pred_check
    _
  $region19: #{unet_forward.5} parent=0 // pred_check_branch
    %19 = sbr.rel (0) target = $region21
  $region20: #{unet_forward.5} parent=0 // pred_region
    _
  $region21: #{unet_forward.5} parent=0 // pred_fallthru
    _
  %v21 = vld [vmem:[%s0] sm:$0xf]
  %v22 = vld [vmem:[%s0 + $0x4] sm:$0xf]
  %v23 = vld [vmem:[%s0 + $0x8] sm:$0xf]
  %v24 = vld [vmem:[%s0 + $0xc] sm:$0xf]
  %v25 = vld [vmem:[%s0 + $0x10] sm:$0xf]
  %v26 = vld [vmem:[%s0 + $0x14] sm:$0xf]
  %v27 = vld [vmem:[%s0 + $0x18] sm:$0xf]
  %v28 = vld [vmem:[%s0 + $0x1c] sm:$0xf]
  %v29 = vld [vmem:[%s0 + $0x20] sm:$0xf]
  %v30 = vld [vmem:[%s0 + $0x24] sm:$0xf]
  %v31 = vld [vmem:[%s0 + $0x28] sm:$0xf]
  %v32 = vld [vmem:[%s0 + $0x2c] sm:$0xf]
  %v33 = vld [vmem:[%s0 + $0x30] sm:$0xf]
  %v34 = vld [vmem:[%s0 + $0x34] sm:$0xf]
  %v35 = vld [vmem:[%s0 + $0x38] sm:$0xf]
  %v36 = vld [vmem:[%s0 + $0x3c] sm:$0xf]
  %v37 = vld [vmem:[%s1] sm:$0xf]
  %v38 = vld [vmem:[%s1 + $0x4] sm:$0xf]
  %v39 = vld [vmem:[%s1 + $0x8] sm:$0xf]
  %v40 = vld [vmem:[%s1 + $0xc] sm:$0xf]
  %v41 = vld [vmem:[%s1 + $0x10] sm:$0xf]
  %v42 = vld [vmem:[%s1 + $0x14] sm:$0xf]
  %v43 = vld [vmem:[%s1 + $0x18] sm:$0xf]
  %v44 = vld [vmem:[%s1 + $0x1c] sm:$0xf]
  %v45 = vld [vmem:[%s1 + $0x20] sm:$0xf]
  %v46 = vld [vmem:[%s1 + $0x24] sm:$0xf]
  %v47 = vld [vmem:[%s1 + $0x28] sm:$0xf]
  %v48 = vld [vmem:[%s1 + $0x2c] sm:$0xf]
  %v49 = vld [vmem:[%s1 + $0x30] sm:$0xf]
  %v50 = vld [vmem:[%s1 + $0x34] sm:$0xf]
  %v51 = vld [vmem:[%s1 + $0x38] sm:$0xf]
  %v52 = vld [vmem:[%s1 + $0x3c] sm:$0xf]
  %v69 = vunpack.c.l.b16 %v21
  %v70 = vunpack.c.l.b16 %v22
  %v71 = vunpack.c.l.b16 %v23
  %v72 = vunpack.c.l.b16 %v24
  %v73 = vunpack.c.l.b16 %v25
  %v74 = vunpack.c.l.b16 %v26
  %v75 = vunpack.c.l.b16 %v27
  %v76 = vunpack.c.l.b16 %v28
  %v77 = vunpack.c.l.b16 %v29
  %v78 = vunpack.c.l.b16 %v30
  %v79 = vunpack.c.l.b16 %v31
  %v80 = vunpack.c.l.b16 %v32
  %v81 = vunpack.c.l.b16 %v33
  %v82 = vunpack.c.l.b16 %v34
  %v83 = vunpack.c.l.b16 %v35
  %v84 = vunpack.c.l.b16 %v36
  %v85 = vpack.c.b16 %v70, %v69
  %v86 = vpack.c.b16 %v72, %v71
  %v87 = vpack.c.b16 %v74, %v73
  %v88 = vpack.c.b16 %v76, %v75
  %v89 = vpack.c.b16 %v78, %v77
  %v90 = vpack.c.b16 %v80, %v79
  %v91 = vpack.c.b16 %v82, %v81
  %v92 = vpack.c.b16 %v84, %v83
  %v117 = vunpack.c.l.b16 %v37
  %v118 = vunpack.c.l.b16 %v38
  %v119 = vunpack.c.l.b16 %v39
  %v120 = vunpack.c.l.b16 %v40
  %v121 = vunpack.c.l.b16 %v41
  %v122 = vunpack.c.l.b16 %v42
  %v123 = vunpack.c.l.b16 %v43
  %v124 = vunpack.c.l.b16 %v44
  %v125 = vunpack.c.l.b16 %v45
  %v126 = vunpack.c.l.b16 %v46
  %v127 = vunpack.c.l.b16 %v47
  %v128 = vunpack.c.l.b16 %v48
  %v129 = vunpack.c.l.b16 %v49
  %v130 = vunpack.c.l.b16 %v50
  %v131 = vunpack.c.l.b16 %v51
  %v132 = vunpack.c.l.b16 %v52
  %v133 = vpack.c.b16 %v118, %v117
  %v134 = vpack.c.b16 %v120, %v119
  %v135 = vpack.c.b16 %v122, %v121
  %v136 = vpack.c.b16 %v124, %v123
  %v137 = vpack.c.b16 %v126, %v125
  %v138 = vpack.c.b16 %v128, %v127
  %v139 = vpack.c.b16 %v130, %v129
  %v140 = vpack.c.b16 %v132, %v131
  %149 = vmatprep.subr.bf16.mxu0 0
  %150 = vmatpush1.bf16.msra.mxu0 %v140
  %151 = vmatprep.subr.bf16.mxu0 0
  %152 = vmatpush1.bf16.msra.mxu0 %v139
  %153 = vmatprep.subr.bf16.mxu0 0
  %154 = vmatpush1.bf16.msra.mxu0 %v138
  %155 = vmatprep.subr.bf16.mxu0 0
  %156 = vmatpush1.bf16.msra.mxu0 %v137
  %157 = vmatprep.subr.bf16.mxu0 0
  %158 = vmatpush1.bf16.msra.mxu0 %v136
  %159 = vmatprep.subr.bf16.mxu0 0
  %160 = vmatpush1.bf16.msra.mxu0 %v135
  %161 = vmatprep.subr.bf16.mxu0 0
  %162 = vmatpush1.bf16.msra.mxu0 %v134
  %163 = vmatprep.subr.bf16.mxu0 0
  %164 = vmatpush1.bf16.msra.mxu0 %v133
  %165 = vmatprep.subr.bf16.mxu0 0
  %166 = vmatpush2.bf16.msra.mxu0 0
  %167 = vmatprep.subr.bf16.mxu0 0
  %168 = vmatpush2.bf16.msra.mxu0 0
  %169 = vmatprep.subr.bf16.mxu0 0
  %170 = vmatpush2.bf16.msra.mxu0 0
  %171 = vmatprep.subr.bf16.mxu0 0
  %172 = vmatpush2.bf16.msra.mxu0 0
  %173 = vmatprep.subr.bf16.mxu0 0
  %174 = vmatpush2.bf16.msra.mxu0 0
  %175 = vmatprep.subr.bf16.mxu0 0
  %176 = vmatpush2.bf16.msra.mxu0 0
  %177 = vmatprep.subr.bf16.mxu0 0
  %178 = vmatpush2.bf16.msra.mxu0 0
  %179 = vmatprep.subr.bf16.mxu0 0
  %180 = vmatpush2.bf16.msra.mxu0 0
  %181 = vmatprep.mubr.bf16.mxu0 0
  %182 = vmatmul.mubr.bf16.gmra.mxu0 %v85
  %v183 = vpop.f32.mrf.mxu0
  %v184 = vadd.f32 0.0, %v183
  %v185 = vpop.f32.mrf.mxu0
  %v186 = vpop.f32.mrf.mxu0
  %v187 = vadd.f32 0.0, %v186
  %v188 = vpop.f32.mrf.mxu0
  %189 = vmatprep.mubr.bf16.mxu0 0
  %190 = vmatmul.mubr.bf16.gmra.mxu0 %v86
  %v191 = vpop.f32.mrf.mxu0
  %v192 = vadd.f32 0.0, %v191
  %v193 = vpop.f32.mrf.mxu0
  %v194 = vpop.f32.mrf.mxu0
  %v195 = vadd.f32 0.0, %v194
  %v196 = vpop.f32.mrf.mxu0
  %197 = vmatprep.mubr.bf16.mxu0 0
  %198 = vmatmul.mubr.bf16.gmra.mxu0 %v87
  %v199 = vpop.f32.mrf.mxu0
  %v200 = vadd.f32 0.0, %v199
  %v201 = vpop.f32.mrf.mxu0
  %v202 = vpop.f32.mrf.mxu0
  %v203 = vadd.f32 0.0, %v202
  %v204 = vpop.f32.mrf.mxu0
  %205 = vmatprep.mubr.bf16.mxu0 0
  %206 = vmatmul.mubr.bf16.gmra.mxu0 %v88
  %v207 = vpop.f32.mrf.mxu0
  %v208 = vadd.f32 0.0, %v207
  %v209 = vpop.f32.mrf.mxu0
  %v210 = vpop.f32.mrf.mxu0
  %v211 = vadd.f32 0.0, %v210
  %v212 = vpop.f32.mrf.mxu0
  %213 = vmatprep.mubr.bf16.mxu0 0
  %214 = vmatmul.mubr.bf16.gmra.mxu0 %v89
  %v215 = vpop.f32.mrf.mxu0
  %v216 = vadd.f32 0.0, %v215
  %v217 = vpop.f32.mrf.mxu0
  %v218 = vpop.f32.mrf.mxu0
  %v219 = vadd.f32 0.0, %v218
  %v220 = vpop.f32.mrf.mxu0
  %221 = vmatprep.mubr.bf16.mxu0 0
  %222 = vmatmul.mubr.bf16.gmra.mxu0 %v90
  %v223 = vpop.f32.mrf.mxu0
  %v224 = vadd.f32 0.0, %v223
  %v225 = vpop.f32.mrf.mxu0
  %v226 = vpop.f32.mrf.mxu0
  %v227 = vadd.f32 0.0, %v226
  %v228 = vpop.f32.mrf.mxu0
  %229 = vmatprep.mubr.bf16.mxu0 0
  %230 = vmatmul.mubr.bf16.gmra.mxu0 %v91
  %v231 = vpop.f32.mrf.mxu0
  %v232 = vadd.f32 0.0, %v231
  %v233 = vpop.f32.mrf.mxu0
  %v234 = vpop.f32.mrf.mxu0
  %v235 = vadd.f32 0.0, %v234
  %v236 = vpop.f32.mrf.mxu0
  %237 = vmatprep.mubr.bf16.mxu0 0
  %238 = vmatmul.mubr.bf16.gmra.mxu0 %v92
  %v239 = vpop.f32.mrf.mxu0
  %v240 = vadd.f32 0.0, %v239
  %v241 = vpop.f32.mrf.mxu0
  %v242 = vpop.f32.mrf.mxu0
  %v243 = vadd.f32 0.0, %v242
  %v244 = vpop.f32.mrf.mxu0
  %245 = vdwg.mxu0
  %v246 = vmul.f32 %v184, %v184
  %v247 = vmul.f32 %v187, %v187
  %v248 = vmul.f32 %v192, %v192
  %v249 = vmul.f32 %v195, %v195
  %v250 = vmul.f32 %v200, %v200
  %v251 = vmul.f32 %v203, %v203
  %v252 = vmul.f32 %v208, %v208
  %v253 = vmul.f32 %v211, %v211
  %v254 = vmul.f32 %v216, %v216
  %v255 = vmul.f32 %v219, %v219
  %v256 = vmul.f32 %v224, %v224
  %v257 = vmul.f32 %v227, %v227
  %v258 = vmul.f32 %v232, %v232
  %v259 = vmul.f32 %v235, %v235
  %v260 = vmul.f32 %v240, %v240
  %v261 = vmul.f32 %v243, %v243
  %v262 = vadd.f32 %v184, %v187
  %v263 = vadd.f32 %v262, %v192
  %v264 = vadd.f32 %v263, %v195
  %v265 = vadd.f32 %v264, %v200
  %v266 = vadd.f32 %v265, %v203
  %v267 = vadd.f32 %v266, %v208
  %v268 = vadd.f32 %v267, %v211
  %v269 = vadd.f32 %v268, %v216
  %v270 = vadd.f32 %v269, %v219
  %v271 = vadd.f32 %v270, %v224
  %v272 = vadd.f32 %v271, %v227
  %v273 = vadd.f32 %v272, %v232
  %v274 = vadd.f32 %v273, %v235
  %v275 = vadd.f32 %v274, %v240
  %v276 = vadd.f32 %v275, %v243
  %v277 = vrot.slane %v276, 4
  %v278 = vadd.f32 %v276, %v277
  %v279 = vrot.slane %v278, 2
  %v280 = vadd.f32 %v278, %v279
  %v281 = vrot.slane %v280, 1
  %v282 = vadd.f32 %v280, %v281
  %v283 = vmul.f32 %v282, 0.0078125
  %v284 = vadd.f32 %v246, %v247
  %v285 = vadd.f32 %v284, %v248
  %v286 = vadd.f32 %v285, %v249
  %v287 = vadd.f32 %v286, %v250
  %v288 = vadd.f32 %v287, %v251
  %v289 = vadd.f32 %v288, %v252
  %v290 = vadd.f32 %v289, %v253
  %v291 = vadd.f32 %v290, %v254
  %v292 = vadd.f32 %v291, %v255
  %v293 = vadd.f32 %v292, %v256
  %v294 = vadd.f32 %v293, %v257
  %v295 = vadd.f32 %v294, %v258
  %v296 = vadd.f32 %v295, %v259
  %v297 = vadd.f32 %v296, %v260
  %v298 = vadd.f32 %v297, %v261
  %v299 = vrot.slane %v298, 4
  %v300 = vadd.f32 %v298, %v299
  %v301 = vrot.slane %v300, 2
  %v302 = vadd.f32 %v300, %v301
  %v303 = vrot.slane %v302, 1
  %v304 = vadd.f32 %v302, %v303
  %v305 = vmul.f32 %v304, 0.0078125
  %v306 = vmul.f32 %v283, %v283
  %v307 = vsub.f32 %v305, %v306
  %v308 = vld [vmem:[%s3] sm:$0x1]
  %v309 = vadd.f32 %v307, 1e-05
  %v310 = vrsqrt.pop %v309
  %v311 = vmul.f32 %v308, %v310
  %v312 = vld [vmem:[%s4] sm:$0x1]
  %v313 = vmul.f32 %v283, %v311
  %v314 = vsub.f32 %v312, %v313
  %v316 = vlaneseq
  %v317 = vshrl.u32 %v316, 7
  %v318 = vsub.s32 0, %v317
  %v319 = vrot.slane %v311, %v318
  %v321 = vmul.f32 %v184, %v319
  %v322 = vmul.f32 %v187, %v319
  %v323 = vmul.f32 %v192, %v319
  %v324 = vmul.f32 %v195, %v319
  %v325 = vmul.f32 %v200, %v319
  %v326 = vmul.f32 %v203, %v319
  %v327 = vmul.f32 %v208, %v319
  %v328 = vmul.f32 %v211, %v319
  %v329 = vmul.f32 %v216, %v319
  %v330 = vmul.f32 %v219, %v319
  %v331 = vmul.f32 %v224, %v319
  %v332 = vmul.f32 %v227, %v319
  %v333 = vmul.f32 %v232, %v319
  %v334 = vmul.f32 %v235, %v319
  %v335 = vmul.f32 %v240, %v319
  %v336 = vmul.f32 %v243, %v319
  %v338 = vlaneseq
  %v339 = vshrl.u32 %v338, 7
  %v340 = vsub.s32 0, %v339
  %v341 = vrot.slane %v314, %v340
  %v343 = vadd.f32 %v321, %v341
  %v344 = vadd.f32 %v322, %v341
  %v345 = vadd.f32 %v323, %v341
  %v346 = vadd.f32 %v324, %v341
  %v347 = vadd.f32 %v325, %v341
  %v348 = vadd.f32 %v326, %v341
  %v349 = vadd.f32 %v327, %v341
  %v350 = vadd.f32 %v328, %v341
  %v351 = vadd.f32 %v329, %v341
  %v352 = vadd.f32 %v330, %v341
  %v353 = vadd.f32 %v331, %v341
  %v354 = vadd.f32 %v332, %v341
  %v355 = vadd.f32 %v333, %v341
  %v356 = vadd.f32 %v334, %v341
  %v357 = vadd.f32 %v335, %v341
  %v358 = vadd.f32 %v336, %v341
  %v359 = vmax.f32 %v343, 0.0
  %v360 = vmax.f32 %v344, 0.0
  %v361 = vmax.f32 %v345, 0.0
  %v362 = vmax.f32 %v346, 0.0
  %v363 = vmax.f32 %v347, 0.0
  %v364 = vmax.f32 %v348, 0.0
  %v365 = vmax.f32 %v349, 0.0
  %v366 = vmax.f32 %v350, 0.0
  %v367 = vmax.f32 %v351, 0.0
  %v368 = vmax.f32 %v352, 0.0
  %v369 = vmax.f32 %v353, 0.0
  %v370 = vmax.f32 %v354, 0.0
  %v371 = vmax.f32 %v355, 0.0
  %v372 = vmax.f32 %v356, 0.0
  %v373 = vmax.f32 %v357, 0.0
  %v374 = vmax.f32 %v358, 0.0
  %v375 = vpack.c.bf16 %v360, %v359
  %v376 = vpack.c.bf16 %v362, %v361
  %v377 = vpack.c.bf16 %v364, %v363
  %v378 = vpack.c.bf16 %v366, %v365
  %v379 = vpack.c.bf16 %v368, %v367
  %v380 = vpack.c.bf16 %v370, %v369
  %v381 = vpack.c.bf16 %v372, %v371
  %v382 = vpack.c.bf16 %v374, %v373
  %v391 = vunpack.c.l.b16 %v375
  %v392 = vunpack.c.h.b16 %v375
  %v393 = vunpack.c.l.b16 %v376
  %v394 = vunpack.c.h.b16 %v376
  %v395 = vunpack.c.l.b16 %v377
  %v396 = vunpack.c.h.b16 %v377
  %v397 = vunpack.c.l.b16 %v378
  %v398 = vunpack.c.h.b16 %v378
  %v399 = vunpack.c.l.b16 %v379
  %v400 = vunpack.c.h.b16 %v379
  %v401 = vunpack.c.l.b16 %v380
  %v402 = vunpack.c.h.b16 %v380
  %v403 = vunpack.c.l.b16 %v381
  %v404 = vunpack.c.h.b16 %v381
  %v405 = vunpack.c.l.b16 %v382
  %v406 = vunpack.c.h.b16 %v382
  %v407 = vpack.c.b16 %v391, %v391
  %v408 = vpack.c.b16 %v392, %v392
  %v409 = vpack.c.b16 %v393, %v393
  %v410 = vpack.c.b16 %v394, %v394
  %v411 = vpack.c.b16 %v395, %v395
  %v412 = vpack.c.b16 %v396, %v396
  %v413 = vpack.c.b16 %v397, %v397
  %v414 = vpack.c.b16 %v398, %v398
  %v415 = vpack.c.b16 %v399, %v399
  %v416 = vpack.c.b16 %v400, %v400
  %v417 = vpack.c.b16 %v401, %v401
  %v418 = vpack.c.b16 %v402, %v402
  %v419 = vpack.c.b16 %v403, %v403
  %v420 = vpack.c.b16 %v404, %v404
  %v421 = vpack.c.b16 %v405, %v405
  %v422 = vpack.c.b16 %v406, %v406
  %439 = vst [vmem:[%s5] sm:$0xf] %v407
  %440 = vst [vmem:[%s5 + $0x4] sm:$0xf] %v408
  %441 = vst [vmem:[%s5 + $0x8] sm:$0xf] %v409
  %442 = vst [vmem:[%s5 + $0xc] sm:$0xf] %v410
  %443 = vst [vmem:[%s5 + $0x10] sm:$0xf] %v411
  %444 = vst [vmem:[%s5 + $0x14] sm:$0xf] %v412
  %445 = vst [vmem:[%s5 + $0x18] sm:$0xf] %v413
  %446 = vst [vmem:[%s5 + $0x1c] sm:$0xf] %v414
  %447 = vst [vmem:[%s5 + $0x20] sm:$0xf] %v415
  %448 = vst [vmem:[%s5 + $0x24] sm:$0xf] %v416
  %449 = vst [vmem:[%s5 + $0x28] sm:$0xf] %v417
  %450 = vst [vmem:[%s5 + $0x2c] sm:$0xf] %v418
  %451 = vst [vmem:[%s5 + $0x30] sm:$0xf] %v419
  %452 = vst [vmem:[%s5 + $0x34] sm:$0xf] %v420
  %453 = vst [vmem:[%s5 + $0x38] sm:$0xf] %v421
  %454 = vst [vmem:[%s5 + $0x3c] sm:$0xf] %v422
  // Predicated region
  $region22: #{unet_forward.5} parent=0 // pred_check
    _
  $region23: #{unet_forward.5} parent=0 // pred_check_branch
    %456 = sbr.rel (0) target = $region25
  $region24: #{unet_forward.5} parent=0 // pred_region
    _
  $region25: #{unet_forward.5} parent=0 // pred_fallthru
    _
  // Predicated region
  $region26: #{unet_forward.5} parent=0 // pred_check
    _
  $region27: #{unet_forward.5} parent=0 // pred_check_branch
    %458 = sbr.rel (0) target = $region29
  $region28: #{unet_forward.5} parent=0 // pred_region
    _
  $region29: #{unet_forward.5} parent=0 // pred_fallthru
    _

// kernel: unet_forward.6
$region0: #{unet_forward.6}
  #allocation0 [shape = 'u32[]', space=smem, size = 0x4, offset = 0x4, fixed_abs, tag = 'smem constant byte address 0x4 - core index']
  #allocation1 [shape = 'u32[144,128]{1,0:T(1,128)}', space=vmem, size = 0x12000, scoped, tag = 'internal scratch']
  %s0 = inlined_call_operand.vmem [shape: bf16[32,128], index: 0, kind: input, shape index: {}]
  %s1 = inlined_call_operand.vmem [shape: bf16[128,128], index: 1, kind: input, shape index: {}]
  %s2 = inlined_call_operand.vmem [shape: f32[8,128], index: 2, kind: input, shape index: {}]
  %s3 = inlined_call_operand.vmem [shape: f32[1,128], index: 3, kind: input, shape index: {}]
  %s4 = inlined_call_operand.vmem [shape: f32[1,128], index: 4, kind: input, shape index: {}]
  %s5 = inlined_call_operand.vmem [shape: bf16[32,128], index: 5, kind: output, shape index: {}]
  %s6 = sld [smem:[#allocation0]]
  $region30: #{unet_forward.6} parent=0
    _
  %s8 = ssub.s32 1, %s6
  %s9 = scalar_select 0, %s8, %s6
  // Predicated region
  $region2: #{unet_forward.6} parent=0 // pred_check
    _
  $region3: #{unet_forward.6} parent=0 // pred_check_branch
    %11 = sbr.rel (0) target = $region5
  $region4: #{unet_forward.6} parent=0 // pred_region
    _
  $region5: #{unet_forward.6} parent=0 // pred_fallthru
    _
  // Predicated region
  $region6: #{unet_forward.6} parent=0 // pred_check
    _
  $region7: #{unet_forward.6} parent=0 // pred_check_branch
    %13 = sbr.rel (0) target = $region9
  $region8: #{unet_forward.6} parent=0 // pred_region
    _
  $region9: #{unet_forward.6} parent=0 // pred_fallthru
    _
  // Predicated region
  $region10: #{unet_forward.6} parent=0 // pred_check
    _
  $region11: #{unet_forward.6} parent=0 // pred_check_branch
    %15 = sbr.rel (0) target = $region13
  $region12: #{unet_forward.6} parent=0 // pred_region
    _
  $region13: #{unet_forward.6} parent=0 // pred_fallthru
    _
  // Predicated region
  $region14: #{unet_forward.6} parent=0 // pred_check
    _
  $region15: #{unet_forward.6} parent=0 // pred_check_branch
    %17 = sbr.rel (0) target = $region17
  $region16: #{unet_forward.6} parent=0 // pred_region
    _
  $region17: #{unet_forward.6} parent=0 // pred_fallthru
    _
  // Predicated region
  $region18: #{unet_forward.6} parent=0 // pred_check
    _
  $region19: #{unet_forward.6} parent=0 // pred_check_branch
    %19 = sbr.rel (0) target = $region21
  $region20: #{unet_forward.6} parent=0 // pred_region
    _
  $region21: #{unet_forward.6} parent=0 // pred_fallthru
    _
  %v21 = vld [vmem:[%s0] sm:$0xf]
  %v22 = vld [vmem:[%s0 + $0x4] sm:$0xf]
  %v23 = vld [vmem:[%s0 + $0x8] sm:$0xf]
  %v24 = vld [vmem:[%s0 + $0xc] sm:$0xf]
  %v25 = vld [vmem:[%s1] sm:$0xf]
  %v26 = vld [vmem:[%s1 + $0x4] sm:$0xf]
  %v27 = vld [vmem:[%s1 + $0x8] sm:$0xf]
  %v28 = vld [vmem:[%s1 + $0xc] sm:$0xf]
  %v29 = vld [vmem:[%s1 + $0x10] sm:$0xf]
  %v30 = vld [vmem:[%s1 + $0x14] sm:$0xf]
  %v31 = vld [vmem:[%s1 + $0x18] sm:$0xf]
  %v32 = vld [vmem:[%s1 + $0x1c] sm:$0xf]
  %v33 = vld [vmem:[%s1 + $0x20] sm:$0xf]
  %v34 = vld [vmem:[%s1 + $0x24] sm:$0xf]
  %v35 = vld [vmem:[%s1 + $0x28] sm:$0xf]
  %v36 = vld [vmem:[%s1 + $0x2c] sm:$0xf]
  %v37 = vld [vmem:[%s1 + $0x30] sm:$0xf]
  %v38 = vld [vmem:[%s1 + $0x34] sm:$0xf]
  %v39 = vld [vmem:[%s1 + $0x38] sm:$0xf]
  %v40 = vld [vmem:[%s1 + $0x3c] sm:$0xf]
  %v45 = vunpack.c.l.b16 %v21
  %v46 = vunpack.c.l.b16 %v22
  %v47 = vunpack.c.l.b16 %v23
  %v48 = vunpack.c.l.b16 %v24
  %v49 = vpack.c.b16 %v46, %v45
  %v50 = vpack.c.b16 %v48, %v47
  %v69 = vunpack.c.l.b16 %v25
  %v70 = vunpack.c.l.b16 %v26
  %v71 = vunpack.c.l.b16 %v27
  %v72 = vunpack.c.l.b16 %v28
  %v73 = vunpack.c.l.b16 %v29
  %v74 = vunpack.c.l.b16 %v30
  %v75 = vunpack.c.l.b16 %v31
  %v76 = vunpack.c.l.b16 %v32
  %v77 = vunpack.c.l.b16 %v33
  %v78 = vunpack.c.l.b16 %v34
  %v79 = vunpack.c.l.b16 %v35
  %v80 = vunpack.c.l.b16 %v36
  %v81 = vunpack.c.l.b16 %v37
  %v82 = vunpack.c.l.b16 %v38
  %v83 = vunpack.c.l.b16 %v39
  %v84 = vunpack.c.l.b16 %v40
  %v85 = vpack.c.b16 %v70, %v69
  %v86 = vpack.c.b16 %v72, %v71
  %v87 = vpack.c.b16 %v74, %v73
  %v88 = vpack.c.b16 %v76, %v75
  %v89 = vpack.c.b16 %v78, %v77
  %v90 = vpack.c.b16 %v80, %v79
  %v91 = vpack.c.b16 %v82, %v81
  %v92 = vpack.c.b16 %v84, %v83
  %101 = vmatprep.subr.bf16.mxu0 0
  %102 = vmatpush1.bf16.msra.mxu0 %v92
  %103 = vmatprep.subr.bf16.mxu0 0
  %104 = vmatpush1.bf16.msra.mxu0 %v91
  %105 = vmatprep.subr.bf16.mxu0 0
  %106 = vmatpush1.bf16.msra.mxu0 %v90
  %107 = vmatprep.subr.bf16.mxu0 0
  %108 = vmatpush1.bf16.msra.mxu0 %v89
  %109 = vmatprep.subr.bf16.mxu0 0
  %110 = vmatpush1.bf16.msra.mxu0 %v88
  %111 = vmatprep.subr.bf16.mxu0 0
  %112 = vmatpush1.bf16.msra.mxu0 %v87
  %113 = vmatprep.subr.bf16.mxu0 0
  %114 = vmatpush1.bf16.msra.mxu0 %v86
  %115 = vmatprep.subr.bf16.mxu0 0
  %116 = vmatpush1.bf16.msra.mxu0 %v85
  %117 = vmatprep.subr.bf16.mxu0 0
  %118 = vmatpush2.bf16.msra.mxu0 0
  %119 = vmatprep.subr.bf16.mxu0 0
  %120 = vmatpush2.bf16.msra.mxu0 0
  %121 = vmatprep.subr.bf16.mxu0 0
  %122 = vmatpush2.bf16.msra.mxu0 0
  %123 = vmatprep.subr.bf16.mxu0 0
  %124 = vmatpush2.bf16.msra.mxu0 0
  %125 = vmatprep.subr.bf16.mxu0 0
  %126 = vmatpush2.bf16.msra.mxu0 0
  %127 = vmatprep.subr.bf16.mxu0 0
  %128 = vmatpush2.bf16.msra.mxu0 0
  %129 = vmatprep.subr.bf16.mxu0 0
  %130 = vmatpush2.bf16.msra.mxu0 0
  %131 = vmatprep.subr.bf16.mxu0 0
  %132 = vmatpush2.bf16.msra.mxu0 0
  %133 = vmatprep.mubr.bf16.mxu0 0
  %134 = vmatmul.mubr.bf16.gmra.mxu0 %v49
  %v135 = vpop.f32.mrf.mxu0
  %v136 = vadd.f32 0.0, %v135
  %v137 = vpop.f32.mrf.mxu0
  %v138 = vpop.f32.mrf.mxu0
  %v139 = vadd.f32 0.0, %v138
  %v140 = vpop.f32.mrf.mxu0
  %141 = vmatprep.mubr.bf16.mxu0 0
  %142 = vmatmul.mubr.bf16.gmra.mxu0 %v50
  %v143 = vpop.f32.mrf.mxu0
  %v144 = vadd.f32 0.0, %v143
  %v145 = vpop.f32.mrf.mxu0
  %v146 = vpop.f32.mrf.mxu0
  %v147 = vadd.f32 0.0, %v146
  %v148 = vpop.f32.mrf.mxu0
  %149 = vdwg.mxu0
  %v150 = vmul.f32 %v136, %v136
  %v151 = vmul.f32 %v139, %v139
  %v152 = vmul.f32 %v144, %v144
  %v153 = vmul.f32 %v147, %v147
  %v154 = vadd.f32 %v136, %v139
  %v155 = vadd.f32 %v154, %v144
  %v156 = vadd.f32 %v155, %v147
  %v157 = vrot.slane %v156, 4
  %v158 = vadd.f32 %v156, %v157
  %v159 = vrot.slane %v158, 2
  %v160 = vadd.f32 %v158, %v159
  %v161 = vrot.slane %v160, 1
  %v162 = vadd.f32 %v160, %v161
  %v163 = vmul.f32 %v162, 0.03125
  %v164 = vadd.f32 %v150, %v151
  %v165 = vadd.f32 %v164, %v152
  %v166 = vadd.f32 %v165, %v153
  %v167 = vrot.slane %v166, 4
  %v168 = vadd.f32 %v166, %v167
  %v169 = vrot.slane %v168, 2
  %v170 = vadd.f32 %v168, %v169
  %v171 = vrot.slane %v170, 1
  %v172 = vadd.f32 %v170, %v171
  %v173 = vmul.f32 %v172, 0.03125
  %v174 = vmul.f32 %v163, %v163
  %v175 = vsub.f32 %v173, %v174
  %v176 = vld [vmem:[%s3] sm:$0x1]
  %v177 = vadd.f32 %v175, 1e-05
  %v178 = vrsqrt.pop %v177
  %v179 = vmul.f32 %v176, %v178
  %v180 = vld [vmem:[%s4] sm:$0x1]
  %v181 = vmul.f32 %v163, %v179
  %v182 = vsub.f32 %v180, %v181
  %v184 = vlaneseq
  %v185 = vshrl.u32 %v184, 7
  %v186 = vsub.s32 0, %v185
  %v187 = vrot.slane %v179, %v186
  %v189 = vmul.f32 %v136, %v187
  %v190 = vmul.f32 %v139, %v187
  %v191 = vmul.f32 %v144, %v187
  %v192 = vmul.f32 %v147, %v187
  %v194 = vlaneseq
  %v195 = vshrl.u32 %v194, 7
  %v196 = vsub.s32 0, %v195
  %v197 = vrot.slane %v182, %v196
  %v199 = vadd.f32 %v189, %v197
  %v200 = vadd.f32 %v190, %v197
  %v201 = vadd.f32 %v191, %v197
  %v202 = vadd.f32 %v192, %v197
  %v203 = vmax.f32 %v199, 0.0
  %v204 = vmax.f32 %v200, 0.0
  %v205 = vmax.f32 %v201, 0.0
  %v206 = vmax.f32 %v202, 0.0
  %v207 = vpack.c.bf16 %v204, %v203
  %v208 = vpack.c.bf16 %v206, %v205
  %v211 = vunpack.c.l.b16 %v207
  %v212 = vunpack.c.h.b16 %v207
  %v213 = vunpack.c.l.b16 %v208
  %v214 = vunpack.c.h.b16 %v208
  %v215 = vpack.c.b16 %v211, %v211
  %v216 = vpack.c.b16 %v212, %v212
  %v217 = vpack.c.b16 %v213, %v213
  %v218 = vpack.c.b16 %v214, %v214
  %223 = vst [vmem:[%s5] sm:$0xf] %v215
  %224 = vst [vmem:[%s5 + $0x4] sm:$0xf] %v216
  %225 = vst [vmem:[%s5 + $0x8] sm:$0xf] %v217
  %226 = vst [vmem:[%s5 + $0xc] sm:$0xf] %v218
  // Predicated region
  $region22: #{unet_forward.6} parent=0 // pred_check
    _
  $region23: #{unet_forward.6} parent=0 // pred_check_branch
    %228 = sbr.rel (0) target = $region25
  $region24: #{unet_forward.6} parent=0 // pred_region
    _
  $region25: #{unet_forward.6} parent=0 // pred_fallthru
    _
  // Predicated region
  $region26: #{unet_forward.6} parent=0 // pred_check
    _
  $region27: #{unet_forward.6} parent=0 // pred_check_branch
    %230 = sbr.rel (0) target = $region29
  $region28: #{unet_forward.6} parent=0 // pred_region
    _
  $region29: #{unet_forward.6} parent=0 // pred_fallthru
    _

// kernel: tile.38
$region0: #{tile.38}
  #allocation0 [shape = 's32[1]{0}', space=sflag, size = 0x4, scoped, tag = 'scoped memory for tile.38']
  %s0 = inlined_call_operand.vmem [shape: f32[16], index: 0, kind: input, shape index: {}]
  %s1 = inlined_call_operand.vmem [shape: f32[4,16], index: 1, kind: output, shape index: {}]
  // Predicated region
  $region2: #{tile.38} parent=0 // pred_check
    _
  $region3: #{tile.38} parent=0 // pred_check_branch
    %3 = sbr.rel (0) target = $region5
  $region4: #{tile.38} parent=0 // pred_region
    _
  $region5: #{tile.38} parent=0 // pred_fallthru
    _
  %v4 = vld [vmem:[%s0] ss:$0 sm:$0xff]
  %5 = vst [vmem:[%s1] sm:$0xf] %v4

// kernel: tile.39
$region0: #{tile.39}
  %s0 = inlined_call_operand.vmem [shape: f32[4,16], index: 0, kind: input, shape index: {}]
  %s1 = inlined_call_operand.vmem [shape: f32[64], index: 1, kind: output, shape index: {}]
  $region1: #{tile.39} parent=0
    #allocation0 [shape = 'u8[4096]{0}', space=vmem, size = 0x1000, scoped, tag = 'scoped mem for output reshape']
    #allocation1 [shape = 'u8[4096]{0}', space=vmem, size = 0x1000, scoped, tag = 'scoped mem for input reshape']
    %s3 = sshll.u32 1, 4
    %s4 = ssub.s32 %s3, 1
    %v5 = vld [vmem:[%s0] sm:%s4]
    %6 = vst [vmem:[#allocation1] sm:%s4] %v5
    %v7 = vld [vmem:[#allocation1] sm:$0x1]
    %vm8 = vcmask 130048
    %9 = vst.msk [vmem:[#allocation0] sm:$0x1] %vm8, %v7
    %s10 = scalar_lea.vmem [#allocation1], 3
    %v11 = vld [vmem:[%s10] sm:$0x1]
    %12 = vrot.lane.b32.xlu0 %v11, 48
    %v13 = vpop.permute.xlu0 %12
    %vm14 = vcmask 523648
    %15 = vst.msk [vmem:[#allocation0] sm:$0x1] %vm14, %v13
    %s16 = scalar_lea.vmem [#allocation1], 2
    %v17 = vld [vmem:[%s16] sm:$0x1]
    %18 = vrot.lane.b32.xlu0 %v17, 32
    %v19 = vpop.permute.xlu0 %18
    %vm20 = vcmask 392448
    %21 = vst.msk [vmem:[#allocation0] sm:$0x1] %vm20, %v19
    %s22 = scalar_lea.vmem [#allocation1], 1
    %v23 = vld [vmem:[%s22] sm:$0x1]
    %24 = vrot.lane.b32.xlu0 %v23, 16
    %v25 = vpop.permute.xlu0 %24
    %vm26 = vcmask 261248
    %27 = vst.msk [vmem:[#allocation0] sm:$0x1] %vm26, %v25
    %s29 = sshll.u32 1, 1
    %s30 = ssub.s32 %s29, 1
    %v32 = vld [vmem:[#allocation0] sm:%s30]
    %s33 = sshll.u32 1, 1
    %s34 = ssub.s32 %s33, 1
    %35 = vst [vmem:[%s1] sm:%s34] %v32

// kernel: tile.33
$region0: #{tile.33}
  #allocation0 [shape = 's32[1]{0}', space=sflag, size = 0x4, scoped, tag = 'scoped memory for tile.33']
  %s0 = inlined_call_operand.vmem [shape: f32[16,16], index: 0, kind: input, shape index: {}]
  %s1 = inlined_call_operand.vmem [shape: f32[4,16,4,16], index: 1, kind: output, shape index: {}]
  // Predicated region
  $region2: #{tile.33} parent=0 // pred_check
    _
  $region3: #{tile.33} parent=0 // pred_check_branch
    %3 = sbr.rel (0) target = $region5
  $region4: #{tile.33} parent=0 // pred_region
    _
  $region5: #{tile.33} parent=0 // pred_fallthru
    _
  %v4 = vld [vmem:[%s0] ss:$0 sm:$0xff]
  %5 = vst [vmem:[%s1] sm:$0xf] %v4
  %s6 = scalar_lea.vmem %s1, 64
  %7 = vst [vmem:[%s6] sm:$0xf] %v4
  %s8 = scalar_lea.vmem %s1, 128
  %9 = vst [vmem:[%s8] sm:$0xf] %v4
  %s10 = scalar_lea.vmem %s1, 192
  %11 = vst [vmem:[%s10] sm:$0xf] %v4
  %s12 = scalar_lea.vmem %s0, 1
  %v13 = vld [vmem:[%s12] ss:$0 sm:$0xff]
  %s14 = scalar_lea.vmem %s1, 4
  %15 = vst [vmem:[%s14] sm:$0xf] %v13
  %s16 = scalar_lea.vmem %s1, 68
  %17 = vst [vmem:[%s16] sm:$0xf] %v13
  %s18 = scalar_lea.vmem %s1, 132
  %19 = vst [vmem:[%s18] sm:$0xf] %v13
  %s20 = scalar_lea.vmem %s1, 196
  %21 = vst [vmem:[%s20] sm:$0xf] %v13
  %s22 = scalar_lea.vmem %s0, 2
  %v23 = vld [vmem:[%s22] ss:$0 sm:$0xff]
  %s24 = scalar_lea.vmem %s1, 8
  %25 = vst [vmem:[%s24] sm:$0xf] %v23
  %s26 = scalar_lea.vmem %s1, 72
  %27 = vst [vmem:[%s26] sm:$0xf] %v23
  %s28 = scalar_lea.vmem %s1, 136
  %29 = vst [vmem:[%s28] sm:$0xf] %v23
  %s30 = scalar_lea.vmem %s1, 200
  %31 = vst [vmem:[%s30] sm:$0xf] %v23
  %s32 = scalar_lea.vmem %s0, 3
  %v33 = vld [vmem:[%s32] ss:$0 sm:$0xff]
  %s34 = scalar_lea.vmem %s1, 12
  %35 = vst [vmem:[%s34] sm:$0xf] %v33
  %s36 = scalar_lea.vmem %s1, 76
  %37 = vst [vmem:[%s36] sm:$0xf] %v33
  %s38 = scalar_lea.vmem %s1, 140
  %39 = vst [vmem:[%s38] sm:$0xf] %v33
  %s40 = scalar_lea.vmem %s1, 204
  %41 = vst [vmem:[%s40] sm:$0xf] %v33
  %s42 = scalar_lea.vmem %s0, 4
  %v43 = vld [vmem:[%s42] ss:$0 sm:$0xff]
  %s44 = scalar_lea.vmem %s1, 16
  %45 = vst [vmem:[%s44] sm:$0xf] %v43
  %s46 = scalar_lea.vmem %s1, 80
  %47 = vst [vmem:[%s46] sm:$0xf] %v43
  %s48 = scalar_lea.vmem %s1, 144
  %49 = vst [vmem:[%s48] sm:$0xf] %v43
  %s50 = scalar_lea.vmem %s1, 208
  %51 = vst [vmem:[%s50] sm:$0xf] %v43
  %s52 = scalar_lea.vmem %s0, 5
  %v53 = vld [vmem:[%s52] ss:$0 sm:$0xff]
  %s54 = scalar_lea.vmem %s1, 20
  %55 = vst [vmem:[%s54] sm:$0xf] %v53
  %s56 = scalar_lea.vmem %s1, 84
  %57 = vst [vmem:[%s56] sm:$0xf] %v53
  %s58 = scalar_lea.vmem %s1, 148
  %59 = vst [vmem:[%s58] sm:$0xf] %v53
  %s60 = scalar_lea.vmem %s1, 212
  %61 = vst [vmem:[%s60] sm:$0xf] %v53
  %s62 = scalar_lea.vmem %s0, 6
  %v63 = vld [vmem:[%s62] ss:$0 sm:$0xff]
  %s64 = scalar_lea.vmem %s1, 24
  %65 = vst [vmem:[%s64] sm:$0xf] %v63
  %s66 = scalar_lea.vmem %s1, 88
  %67 = vst [vmem:[%s66] sm:$0xf] %v63
  %s68 = scalar_lea.vmem %s1, 152
  %69 = vst [vmem:[%s68] sm:$0xf] %v63
  %s70 = scalar_lea.vmem %s1, 216
  %71 = vst [vmem:[%s70] sm:$0xf] %v63
  %s72 = scalar_lea.vmem %s0, 7
  %v73 = vld [vmem:[%s72] ss:$0 sm:$0xff]
  %s74 = scalar_lea.vmem %s1, 28
  %75 = vst [vmem:[%s74] sm:$0xf] %v73
  %s76 = scalar_lea.vmem %s1, 92
  %77 = vst [vmem:[%s76] sm:$0xf] %v73
  %s78 = scalar_lea.vmem %s1, 156
  %79 = vst [vmem:[%s78] sm:$0xf] %v73
  %s80 = scalar_lea.vmem %s1, 220
  %81 = vst [vmem:[%s80] sm:$0xf] %v73
  %s82 = scalar_lea.vmem %s0, 8
  %v83 = vld [vmem:[%s82] ss:$0 sm:$0xff]
  %s84 = scalar_lea.vmem %s1, 32
  %85 = vst [vmem:[%s84] sm:$0xf] %v83
  %s86 = scalar_lea.vmem %s1, 96
  %87 = vst [vmem:[%s86] sm:$0xf] %v83
  %s88 = scalar_lea.vmem %s1, 160
  %89 = vst [vmem:[%s88] sm:$0xf] %v83
  %s90 = scalar_lea.vmem %s1, 224
  %91 = vst [vmem:[%s90] sm:$0xf] %v83
  %s92 = scalar_lea.vmem %s0, 8
  %s93 = scalar_lea.vmem %s92, 1
  %v94 = vld [vmem:[%s93] ss:$0 sm:$0xff]
  %s95 = scalar_lea.vmem %s1, 36
  %96 = vst [vmem:[%s95] sm:$0xf] %v94
  %s97 = scalar_lea.vmem %s1, 100
  %98 = vst [vmem:[%s97] sm:$0xf] %v94
  %s99 = scalar_lea.vmem %s1, 164
  %100 = vst [vmem:[%s99] sm:$0xf] %v94
  %s101 = scalar_lea.vmem %s1, 228
  %102 = vst [vmem:[%s101] sm:$0xf] %v94
  %s103 = scalar_lea.vmem %s0, 8
  %s104 = scalar_lea.vmem %s103, 2
  %v105 = vld [vmem:[%s104] ss:$0 sm:$0xff]
  %s106 = scalar_lea.vmem %s1, 40
  %107 = vst [vmem:[%s106] sm:$0xf] %v105
  %s108 = scalar_lea.vmem %s1, 104
  %109 = vst [vmem:[%s108] sm:$0xf] %v105
  %s110 = scalar_lea.vmem %s1, 168
  %111 = vst [vmem:[%s110] sm:$0xf] %v105
  %s112 = scalar_lea.vmem %s1, 232
  %113 = vst [vmem:[%s112] sm:$0xf] %v105
  %s114 = scalar_lea.vmem %s0, 8
  %s115 = scalar_lea.vmem %s114, 3
  %v116 = vld [vmem:[%s115] ss:$0 sm:$0xff]
  %s117 = scalar_lea.vmem %s1, 44
  %118 = vst [vmem:[%s117] sm:$0xf] %v116
  %s119 = scalar_lea.vmem %s1, 108
  %120 = vst [vmem:[%s119] sm:$0xf] %v116
  %s121 = scalar_lea.vmem %s1, 172
  %122 = vst [vmem:[%s121] sm:$0xf] %v116
  %s123 = scalar_lea.vmem %s1, 236
  %124 = vst [vmem:[%s123] sm:$0xf] %v116
  %s125 = scalar_lea.vmem %s0, 8
  %s126 = scalar_lea.vmem %s125, 4
  %v127 = vld [vmem:[%s126] ss:$0 sm:$0xff]
  %s128 = scalar_lea.vmem %s1, 48
  %129 = vst [vmem:[%s128] sm:$0xf] %v127
  %s130 = scalar_lea.vmem %s1, 112
  %131 = vst [vmem:[%s130] sm:$0xf] %v127
  %s132 = scalar_lea.vmem %s1, 176
  %133 = vst [vmem:[%s132] sm:$0xf] %v127
  %s134 = scalar_lea.vmem %s1, 240
  %135 = vst [vmem:[%s134] sm:$0xf] %v127
  %s136 = scalar_lea.vmem %s0, 8
  %s137 = scalar_lea.vmem %s136, 5
  %v138 = vld [vmem:[%s137] ss:$0 sm:$0xff]
  %s139 = scalar_lea.vmem %s1, 52
  %140 = vst [vmem:[%s139] sm:$0xf] %v138
  %s141 = scalar_lea.vmem %s1, 116
  %142 = vst [vmem:[%s141] sm:$0xf] %v138
  %s143 = scalar_lea.vmem %s1, 180
  %144 = vst [vmem:[%s143] sm:$0xf] %v138
  %s145 = scalar_lea.vmem %s1, 244
  %146 = vst [vmem:[%s145] sm:$0xf] %v138
  %s147 = scalar_lea.vmem %s0, 8
  %s148 = scalar_lea.vmem %s147, 6
  %v149 = vld [vmem:[%s148] ss:$0 sm:$0xff]
  %s150 = scalar_lea.vmem %s1, 56
  %151 = vst [vmem:[%s150] sm:$0xf] %v149
  %s152 = scalar_lea.vmem %s1, 120
  %153 = vst [vmem:[%s152] sm:$0xf] %v149
  %s154 = scalar_lea.vmem %s1, 184
  %155 = vst [vmem:[%s154] sm:$0xf] %v149
  %s156 = scalar_lea.vmem %s1, 248
  %157 = vst [vmem:[%s156] sm:$0xf] %v149
  %s158 = scalar_lea.vmem %s0, 8
  %s159 = scalar_lea.vmem %s158, 7
  %v160 = vld [vmem:[%s159] ss:$0 sm:$0xff]
  %s161 = scalar_lea.vmem %s1, 60
  %162 = vst [vmem:[%s161] sm:$0xf] %v160
  %s163 = scalar_lea.vmem %s1, 124
  %164 = vst [vmem:[%s163] sm:$0xf] %v160
  %s165 = scalar_lea.vmem %s1, 188
  %166 = vst [vmem:[%s165] sm:$0xf] %v160
  %s167 = scalar_lea.vmem %s1, 252
  %168 = vst [vmem:[%s167] sm:$0xf] %v160

// kernel: tile.34
$region0: #{tile.34}
  %s0 = inlined_call_operand.vmem [shape: f32[4,16,4,16], index: 0, kind: input, shape index: {}]
  %s1 = inlined_call_operand.vmem [shape: f32[64,64], index: 1, kind: output, shape index: {}]
  $region1: #{tile.34} parent=0
    #allocation0 [shape = 'u8[262144]{0}', space=vmem, size = 0x40000, scoped, tag = 'scoped mem for input reshape']
    %s3 = sshll.u32 1, 4
    %s4 = ssub.s32 %s3, 1
    %s5 = smul.addr 4, 63
    %s6 = scalar_lea.vmem %s0, %s5
    %v7 = vld [vmem:[%s6] sm:%s4]
    %s8 = scalar_lea.vmem [#allocation0], 504
    %9 = vst [vmem:[%s8] sm:%s4] %v7
    %s10 = smul.addr 4, 62
    %s11 = scalar_lea.vmem %s0, %s10
    %v12 = vld [vmem:[%s11] sm:%s4]
    %s13 = scalar_lea.vmem [#allocation0], 496
    %14 = vst [vmem:[%s13] sm:%s4] %v12
    %s15 = smul.addr 4, 61
    %s16 = scalar_lea.vmem %s0, %s15
    %v17 = vld [vmem:[%s16] sm:%s4]
    %s18 = scalar_lea.vmem [#allocation0], 488
    %19 = vst [vmem:[%s18] sm:%s4] %v17
    %s20 = smul.addr 4, 60
    %s21 = scalar_lea.vmem %s0, %s20
    %v22 = vld [vmem:[%s21] sm:%s4]
    %s23 = scalar_lea.vmem [#allocation0], 480
    %24 = vst [vmem:[%s23] sm:%s4] %v22
    %s25 = smul.addr 4, 59
    %s26 = scalar_lea.vmem %s0, %s25
    %v27 = vld [vmem:[%s26] sm:%s4]
    %s28 = scalar_lea.vmem [#allocation0], 472
    %29 = vst [vmem:[%s28] sm:%s4] %v27
    %s30 = smul.addr 4, 58
    %s31 = scalar_lea.vmem %s0, %s30
    %v32 = vld [vmem:[%s31] sm:%s4]
    %s33 = scalar_lea.vmem [#allocation0], 464
    %34 = vst [vmem:[%s33] sm:%s4] %v32
    %s35 = smul.addr 4, 57
    %s36 = scalar_lea.vmem %s0, %s35
    %v37 = vld [vmem:[%s36] sm:%s4]
    %s38 = scalar_lea.vmem [#allocation0], 456
    %39 = vst [vmem:[%s38] sm:%s4] %v37
    %s40 = smul.addr 4, 56
    %s41 = scalar_lea.vmem %s0, %s40
    %v42 = vld [vmem:[%s41] sm:%s4]
    %s43 = scalar_lea.vmem [#allocation0], 448
    %44 = vst [vmem:[%s43] sm:%s4] %v42
    %s45 = smul.addr 4, 55
    %s46 = scalar_lea.vmem %s0, %s45
    %v47 = vld [vmem:[%s46] sm:%s4]
    %s48 = scalar_lea.vmem [#allocation0], 440
    %49 = vst [vmem:[%s48] sm:%s4] %v47
    %s50 = smul.addr 4, 54
    %s51 = scalar_lea.vmem %s0, %s50
    %v52 = vld [vmem:[%s51] sm:%s4]
    %s53 = scalar_lea.vmem [#allocation0], 432
    %54 = vst [vmem:[%s53] sm:%s4] %v52
    %s55 = smul.addr 4, 53
    %s56 = scalar_lea.vmem %s0, %s55
    %v57 = vld [vmem:[%s56] sm:%s4]
    %s58 = scalar_lea.vmem [#allocation0], 424
    %59 = vst [vmem:[%s58] sm:%s4] %v57
    %s60 = smul.addr 4, 52
    %s61 = scalar_lea.vmem %s0, %s60
    %v62 = vld [vmem:[%s61] sm:%s4]
    %s63 = scalar_lea.vmem [#allocation0], 416
    %64 = vst [vmem:[%s63] sm:%s4] %v62
    %s65 = smul.addr 4, 51
    %s66 = scalar_lea.vmem %s0, %s65
    %v67 = vld [vmem:[%s66] sm:%s4]
    %s68 = scalar_lea.vmem [#allocation0], 408
    %69 = vst [vmem:[%s68] sm:%s4] %v67
    %s70 = smul.addr 4, 50
    %s71 = scalar_lea.vmem %s0, %s70
    %v72 = vld [vmem:[%s71] sm:%s4]
    %s73 = scalar_lea.vmem [#allocation0], 400
    %74 = vst [vmem:[%s73] sm:%s4] %v72
    %s75 = smul.addr 4, 49
    %s76 = scalar_lea.vmem %s0, %s75
    %v77 = vld [vmem:[%s76] sm:%s4]
    %s78 = scalar_lea.vmem [#allocation0], 392
    %79 = vst [vmem:[%s78] sm:%s4] %v77
    %s80 = smul.addr 4, 48
    %s81 = scalar_lea.vmem %s0, %s80
    %v82 = vld [vmem:[%s81] sm:%s4]
    %s83 = scalar_lea.vmem [#allocation0], 384
    %84 = vst [vmem:[%s83] sm:%s4] %v82
    %s85 = smul.addr 4, 47
    %s86 = scalar_lea.vmem %s0, %s85
    %v87 = vld [vmem:[%s86] sm:%s4]
    %s88 = scalar_lea.vmem [#allocation0], 376
    %89 = vst [vmem:[%s88] sm:%s4] %v87
    %s90 = smul.addr 4, 46
    %s91 = scalar_lea.vmem %s0, %s90
    %v92 = vld [vmem:[%s91] sm:%s4]
    %s93 = scalar_lea.vmem [#allocation0], 368
    %94 = vst [vmem:[%s93] sm:%s4] %v92
    %s95 = smul.addr 4, 45
    %s96 = scalar_lea.vmem %s0, %s95
    %v97 = vld [vmem:[%s96] sm:%s4]
    %s98 = scalar_lea.vmem [#allocation0], 360
    %99 = vst [vmem:[%s98] sm:%s4] %v97
    %s100 = smul.addr 4, 44
    %s101 = scalar_lea.vmem %s0, %s100
    %v102 = vld [vmem:[%s101] sm:%s4]
    %s103 = scalar_lea.vmem [#allocation0], 352
    %104 = vst [vmem:[%s103] sm:%s4] %v102
    %s105 = smul.addr 4, 43
    %s106 = scalar_lea.vmem %s0, %s105
    %v107 = vld [vmem:[%s106] sm:%s4]
    %s108 = scalar_lea.vmem [#allocation0], 344
    %109 = vst [vmem:[%s108] sm:%s4] %v107
    %s110 = smul.addr 4, 42
    %s111 = scalar_lea.vmem %s0, %s110
    %v112 = vld [vmem:[%s111] sm:%s4]
    %s113 = scalar_lea.vmem [#allocation0], 336
    %114 = vst [vmem:[%s113] sm:%s4] %v112
    %s115 = smul.addr 4, 41
    %s116 = scalar_lea.vmem %s0, %s115
    %v117 = vld [vmem:[%s116] sm:%s4]
    %s118 = scalar_lea.vmem [#allocation0], 328
    %119 = vst [vmem:[%s118] sm:%s4] %v117
    %s120 = smul.addr 4, 40
    %s121 = scalar_lea.vmem %s0, %s120
    %v122 = vld [vmem:[%s121] sm:%s4]
    %s123 = scalar_lea.vmem [#allocation0], 320
    %124 = vst [vmem:[%s123] sm:%s4] %v122
    %s125 = smul.addr 4, 39
    %s126 = scalar_lea.vmem %s0, %s125
    %v127 = vld [vmem:[%s126] sm:%s4]
    %s128 = scalar_lea.vmem [#allocation0], 312
    %129 = vst [vmem:[%s128] sm:%s4] %v127
    %s130 = smul.addr 4, 38
    %s131 = scalar_lea.vmem %s0, %s130
    %v132 = vld [vmem:[%s131] sm:%s4]
    %s133 = scalar_lea.vmem [#allocation0], 304
    %134 = vst [vmem:[%s133] sm:%s4] %v132
    %s135 = smul.addr 4, 37
    %s136 = scalar_lea.vmem %s0, %s135
    %v137 = vld [vmem:[%s136] sm:%s4]
    %s138 = scalar_lea.vmem [#allocation0], 296
    %139 = vst [vmem:[%s138] sm:%s4] %v137
    %s140 = smul.addr 4, 36
    %s141 = scalar_lea.vmem %s0, %s140
    %v142 = vld [vmem:[%s141] sm:%s4]
    %s143 = scalar_lea.vmem [#allocation0], 288
    %144 = vst [vmem:[%s143] sm:%s4] %v142
    %s145 = smul.addr 4, 35
    %s146 = scalar_lea.vmem %s0, %s145
    %v147 = vld [vmem:[%s146] sm:%s4]
    %s148 = scalar_lea.vmem [#allocation0], 280
    %149 = vst [vmem:[%s148] sm:%s4] %v147
    %s150 = smul.addr 4, 34
    %s151 = scalar_lea.vmem %s0, %s150
    %v152 = vld [vmem:[%s151] sm:%s4]
    %s153 = scalar_lea.vmem [#allocation0], 272
    %154 = vst [vmem:[%s153] sm:%s4] %v152
    %s155 = smul.addr 4, 33
    %s156 = scalar_lea.vmem %s0, %s155
    %v157 = vld [vmem:[%s156] sm:%s4]
    %s158 = scalar_lea.vmem [#allocation0], 264
    %159 = vst [vmem:[%s158] sm:%s4] %v157
    %s160 = smul.addr 4, 32
    %s161 = scalar_lea.vmem %s0, %s160
    %v162 = vld [vmem:[%s161] sm:%s4]
    %s163 = scalar_lea.vmem [#allocation0], 256
    %164 = vst [vmem:[%s163] sm:%s4] %v162
    %s165 = smul.addr 4, 31
    %s166 = scalar_lea.vmem %s0, %s165
    %v167 = vld [vmem:[%s166] sm:%s4]
    %s168 = scalar_lea.vmem [#allocation0], 248
    %169 = vst [vmem:[%s168] sm:%s4] %v167
    %s170 = smul.addr 4, 30
    %s171 = scalar_lea.vmem %s0, %s170
    %v172 = vld [vmem:[%s171] sm:%s4]
    %s173 = scalar_lea.vmem [#allocation0], 240
    %174 = vst [vmem:[%s173] sm:%s4] %v172
    %s175 = smul.addr 4, 29
    %s176 = scalar_lea.vmem %s0, %s175
    %v177 = vld [vmem:[%s176] sm:%s4]
    %s178 = scalar_lea.vmem [#allocation0], 232
    %179 = vst [vmem:[%s178] sm:%s4] %v177
    %s180 = smul.addr 4, 28
    %s181 = scalar_lea.vmem %s0, %s180
    %v182 = vld [vmem:[%s181] sm:%s4]
    %s183 = scalar_lea.vmem [#allocation0], 224
    %184 = vst [vmem:[%s183] sm:%s4] %v182
    %s185 = smul.addr 4, 27
    %s186 = scalar_lea.vmem %s0, %s185
    %v187 = vld [vmem:[%s186] sm:%s4]
    %s188 = scalar_lea.vmem [#allocation0], 216
    %189 = vst [vmem:[%s188] sm:%s4] %v187
    %s190 = smul.addr 4, 26
    %s191 = scalar_lea.vmem %s0, %s190
    %v192 = vld [vmem:[%s191] sm:%s4]
    %s193 = scalar_lea.vmem [#allocation0], 208
    %194 = vst [vmem:[%s193] sm:%s4] %v192
    %s195 = smul.addr 4, 25
    %s196 = scalar_lea.vmem %s0, %s195
    %v197 = vld [vmem:[%s196] sm:%s4]
    %s198 = scalar_lea.vmem [#allocation0], 200
    %199 = vst [vmem:[%s198] sm:%s4] %v197
    %s200 = smul.addr 4, 24
    %s201 = scalar_lea.vmem %s0, %s200
    %v202 = vld [vmem:[%s201] sm:%s4]
    %s203 = scalar_lea.vmem [#allocation0], 192
    %204 = vst [vmem:[%s203] sm:%s4] %v202
    %s205 = smul.addr 4, 23
    %s206 = scalar_lea.vmem %s0, %s205
    %v207 = vld [vmem:[%s206] sm:%s4]
    %s208 = scalar_lea.vmem [#allocation0], 184
    %209 = vst [vmem:[%s208] sm:%s4] %v207
    %s210 = smul.addr 4, 22
    %s211 = scalar_lea.vmem %s0, %s210
    %v212 = vld [vmem:[%s211] sm:%s4]
    %s213 = scalar_lea.vmem [#allocation0], 176
    %214 = vst [vmem:[%s213] sm:%s4] %v212
    %s215 = smul.addr 4, 21
    %s216 = scalar_lea.vmem %s0, %s215
    %v217 = vld [vmem:[%s216] sm:%s4]
    %s218 = scalar_lea.vmem [#allocation0], 168
    %219 = vst [vmem:[%s218] sm:%s4] %v217
    %s220 = smul.addr 4, 20
    %s221 = scalar_lea.vmem %s0, %s220
    %v222 = vld [vmem:[%s221] sm:%s4]
    %s223 = scalar_lea.vmem [#allocation0], 160
    %224 = vst [vmem:[%s223] sm:%s4] %v222
    %s225 = smul.addr 4, 19
    %s226 = scalar_lea.vmem %s0, %s225
    %v227 = vld [vmem:[%s226] sm:%s4]
    %s228 = scalar_lea.vmem [#allocation0], 152
    %229 = vst [vmem:[%s228] sm:%s4] %v227
    %s230 = smul.addr 4, 18
    %s231 = scalar_lea.vmem %s0, %s230
    %v232 = vld [vmem:[%s231] sm:%s4]
    %s233 = scalar_lea.vmem [#allocation0], 144
    %234 = vst [vmem:[%s233] sm:%s4] %v232
    %s235 = smul.addr 4, 17
    %s236 = scalar_lea.vmem %s0, %s235
    %v237 = vld [vmem:[%s236] sm:%s4]
    %s238 = scalar_lea.vmem [#allocation0], 136
    %239 = vst [vmem:[%s238] sm:%s4] %v237
    %s240 = smul.addr 4, 16
    %s241 = scalar_lea.vmem %s0, %s240
    %v242 = vld [vmem:[%s241] sm:%s4]
    %s243 = scalar_lea.vmem [#allocation0], 128
    %244 = vst [vmem:[%s243] sm:%s4] %v242
    %s245 = smul.addr 4, 15
    %s246 = scalar_lea.vmem %s0, %s245
    %v247 = vld [vmem:[%s246] sm:%s4]
    %s248 = scalar_lea.vmem [#allocation0], 120
    %249 = vst [vmem:[%s248] sm:%s4] %v247
    %s250 = smul.addr 4, 14
    %s251 = scalar_lea.vmem %s0, %s250
    %v252 = vld [vmem:[%s251] sm:%s4]
    %s253 = scalar_lea.vmem [#allocation0], 112
    %254 = vst [vmem:[%s253] sm:%s4] %v252
    %s255 = smul.addr 4, 13
    %s256 = scalar_lea.vmem %s0, %s255
    %v257 = vld [vmem:[%s256] sm:%s4]
    %s258 = scalar_lea.vmem [#allocation0], 104
    %259 = vst [vmem:[%s258] sm:%s4] %v257
    %s260 = smul.addr 4, 12
    %s261 = scalar_lea.vmem %s0, %s260
    %v262 = vld [vmem:[%s261] sm:%s4]
    %s263 = scalar_lea.vmem [#allocation0], 96
    %264 = vst [vmem:[%s263] sm:%s4] %v262
    %s265 = smul.addr 4, 11
    %s266 = scalar_lea.vmem %s0, %s265
    %v267 = vld [vmem:[%s266] sm:%s4]
    %s268 = scalar_lea.vmem [#allocation0], 88
    %269 = vst [vmem:[%s268] sm:%s4] %v267
    %s270 = smul.addr 4, 10
    %s271 = scalar_lea.vmem %s0, %s270
    %v272 = vld [vmem:[%s271] sm:%s4]
    %s273 = scalar_lea.vmem [#allocation0], 80
    %274 = vst [vmem:[%s273] sm:%s4] %v272
    %s275 = smul.addr 4, 9
    %s276 = scalar_lea.vmem %s0, %s275
    %v277 = vld [vmem:[%s276] sm:%s4]
    %s278 = scalar_lea.vmem [#allocation0], 72
    %279 = vst [vmem:[%s278] sm:%s4] %v277
    %s280 = smul.addr 4, 8
    %s281 = scalar_lea.vmem %s0, %s280
    %v282 = vld [vmem:[%s281] sm:%s4]
    %s283 = scalar_lea.vmem [#allocation0], 64
    %284 = vst [vmem:[%s283] sm:%s4] %v282
    %s285 = smul.addr 4, 7
    %s286 = scalar_lea.vmem %s0, %s285
    %v287 = vld [vmem:[%s286] sm:%s4]
    %s288 = scalar_lea.vmem [#allocation0], 56
    %289 = vst [vmem:[%s288] sm:%s4] %v287
    %s290 = smul.addr 4, 6
    %s291 = scalar_lea.vmem %s0, %s290
    %v292 = vld [vmem:[%s291] sm:%s4]
    %s293 = scalar_lea.vmem [#allocation0], 48
    %294 = vst [vmem:[%s293] sm:%s4] %v292
    %s295 = smul.addr 4, 5
    %s296 = scalar_lea.vmem %s0, %s295
    %v297 = vld [vmem:[%s296] sm:%s4]
    %s298 = scalar_lea.vmem [#allocation0], 40
    %299 = vst [vmem:[%s298] sm:%s4] %v297
    %s300 = smul.addr 4, 4
    %s301 = scalar_lea.vmem %s0, %s300
    %v302 = vld [vmem:[%s301] sm:%s4]
    %s303 = scalar_lea.vmem [#allocation0], 32
    %304 = vst [vmem:[%s303] sm:%s4] %v302
    %s305 = smul.addr 4, 3
    %s306 = scalar_lea.vmem %s0, %s305
    %v307 = vld [vmem:[%s306] sm:%s4]
    %s308 = scalar_lea.vmem [#allocation0], 24
    %309 = vst [vmem:[%s308] sm:%s4] %v307
    %s310 = smul.addr 4, 2
    %s311 = scalar_lea.vmem %s0, %s310
    %v312 = vld [vmem:[%s311] sm:%s4]
    %s313 = scalar_lea.vmem [#allocation0], 16
    %314 = vst [vmem:[%s313] sm:%s4] %v312
    %s315 = scalar_lea.vmem %s0, 4
    %v316 = vld [vmem:[%s315] sm:%s4]
    %s317 = scalar_lea.vmem [#allocation0], 8
    %318 = vst [vmem:[%s317] sm:%s4] %v316
    %v319 = vld [vmem:[%s0] sm:%s4]
    %320 = vst [vmem:[#allocation0] sm:%s4] %v319
    %v321 = vld [vmem:[#allocation0] ss:$8 sm:$0xf]
    %v322 = vld [vmem:[#allocation0] ss:$8 sm:$0xf0]
    %vm323 = vcmask 1047556
    %v324 = vsel %vm323, %v322, %v321
    %vm325 = vcmask 130048
    %326 = vst.msk [vmem:[%s1] sm:$0xff] %vm325, %v324
    %s327 = scalar_lea.vmem [#allocation0], 64
    %v328 = vld [vmem:[%s327] ss:$8 sm:$0xf]
    %s329 = scalar_lea.vmem [#allocation0], 64
    %v330 = vld [vmem:[%s329] ss:$8 sm:$0xf0]
    %vm331 = vcmask 1047556
    %v332 = vsel %vm331, %v330, %v328
    %vm333 = vcmask 130048
    %s334 = scalar_lea.vmem %s1, 8
    %335 = vst.msk [vmem:[%s334] sm:$0xff] %vm333, %v332
    %s336 = scalar_lea.vmem [#allocation0], 128
    %v337 = vld [vmem:[%s336] ss:$8 sm:$0xf]
    %s338 = scalar_lea.vmem [#allocation0], 128
    %v339 = vld [vmem:[%s338] ss:$8 sm:$0xf0]
    %vm340 = vcmask 1047556
    %v341 = vsel %vm340, %v339, %v337
    %vm342 = vcmask 130048
    %s343 = scalar_lea.vmem %s1, 16
    %344 = vst.msk [vmem:[%s343] sm:$0xff] %vm342, %v341
    %s345 = scalar_lea.vmem [#allocation0], 192
    %v346 = vld [vmem:[%s345] ss:$8 sm:$0xf]
    %s347 = scalar_lea.vmem [#allocation0], 192
    %v348 = vld [vmem:[%s347] ss:$8 sm:$0xf0]
    %vm349 = vcmask 1047556
    %v350 = vsel %vm349, %v348, %v346
    %vm351 = vcmask 130048
    %s352 = scalar_lea.vmem %s1, 24
    %353 = vst.msk [vmem:[%s352] sm:$0xff] %vm351, %v350
    %s354 = scalar_lea.vmem [#allocation0], 256
    %v355 = vld [vmem:[%s354] ss:$8 sm:$0xf]
    %s356 = scalar_lea.vmem [#allocation0], 256
    %v357 = vld [vmem:[%s356] ss:$8 sm:$0xf0]
    %vm358 = vcmask 1047556
    %v359 = vsel %vm358, %v357, %v355
    %vm360 = vcmask 130048
    %s361 = scalar_lea.vmem %s1, 32
    %362 = vst.msk [vmem:[%s361] sm:$0xff] %vm360, %v359
    %s363 = scalar_lea.vmem [#allocation0], 320
    %v364 = vld [vmem:[%s363] ss:$8 sm:$0xf]
    %s365 = scalar_lea.vmem [#allocation0], 320
    %v366 = vld [vmem:[%s365] ss:$8 sm:$0xf0]
    %vm367 = vcmask 1047556
    %v368 = vsel %vm367, %v366, %v364
    %vm369 = vcmask 130048
    %s370 = scalar_lea.vmem %s1, 40
    %371 = vst.msk [vmem:[%s370] sm:$0xff] %vm369, %v368
    %s372 = scalar_lea.vmem [#allocation0], 384
    %v373 = vld [vmem:[%s372] ss:$8 sm:$0xf]
    %s374 = scalar_lea.vmem [#allocation0], 384
    %v375 = vld [vmem:[%s374] ss:$8 sm:$0xf0]
    %vm376 = vcmask 1047556
    %v377 = vsel %vm376, %v375, %v373
    %vm378 = vcmask 130048
    %s379 = scalar_lea.vmem %s1, 48
    %380 = vst.msk [vmem:[%s379] sm:$0xff] %vm378, %v377
    %s381 = scalar_lea.vmem [#allocation0], 448
    %v382 = vld [vmem:[%s381] ss:$8 sm:$0xf]
    %s383 = scalar_lea.vmem [#allocation0], 448
    %v384 = vld [vmem:[%s383] ss:$8 sm:$0xf0]
    %vm385 = vcmask 1047556
    %v386 = vsel %vm385, %v384, %v382
    %vm387 = vcmask 130048
    %s388 = scalar_lea.vmem %s1, 56
    %389 = vst.msk [vmem:[%s388] sm:$0xff] %vm387, %v386
    %s390 = scalar_lea.vmem [#allocation0], 3
    %v391 = vld [vmem:[%s390] ss:$8 sm:$0xf]
    %s392 = scalar_lea.vmem [#allocation0], 3
    %v393 = vld [vmem:[%s392] ss:$8 sm:$0xf0]
    %vm394 = vcmask 1047556
    %v395 = vsel %vm394, %v393, %v391
    %396 = vrot.lane.b32.xlu0 %v395, 48
    %v397 = vpop.permute.xlu0 %396
    %vm398 = vcmask 523648
    %399 = vst.msk [vmem:[%s1] sm:$0xff] %vm398, %v397
    %s400 = scalar_lea.vmem [#allocation0], 259
    %v401 = vld [vmem:[%s400] ss:$8 sm:$0xf]
    %s402 = scalar_lea.vmem [#allocation0], 259
    %v403 = vld [vmem:[%s402] ss:$8 sm:$0xf0]
    %vm404 = vcmask 1047556
    %v405 = vsel %vm404, %v403, %v401
    %406 = vrot.lane.b32.xlu0 %v405, 48
    %v407 = vpop.permute.xlu0 %406
    %vm408 = vcmask 523648
    %s409 = scalar_lea.vmem %s1, 32
    %410 = vst.msk [vmem:[%s409] sm:$0xff] %vm408, %v407
    %s411 = scalar_lea.vmem [#allocation0], 67
    %v412 = vld [vmem:[%s411] ss:$8 sm:$0xf]
    %s413 = scalar_lea.vmem [#allocation0], 67
    %v414 = vld [vmem:[%s413] ss:$8 sm:$0xf0]
    %vm415 = vcmask 1047556
    %v416 = vsel %vm415, %v414, %v412
    %417 = vrot.lane.b32.xlu0 %v416, 48
    %v418 = vpop.permute.xlu0 %417
    %vm419 = vcmask 523648
    %s420 = scalar_lea.vmem %s1, 8
    %421 = vst.msk [vmem:[%s420] sm:$0xff] %vm419, %v418
    %s422 = scalar_lea.vmem [#allocation0], 323
    %v423 = vld [vmem:[%s422] ss:$8 sm:$0xf]
    %s424 = scalar_lea.vmem [#allocation0], 323
    %v425 = vld [vmem:[%s424] ss:$8 sm:$0xf0]
    %vm426 = vcmask 1047556
    %v427 = vsel %vm426, %v425, %v423
    %428 = vrot.lane.b32.xlu0 %v427, 48
    %v429 = vpop.permute.xlu0 %428
    %vm430 = vcmask 523648
    %s431 = scalar_lea.vmem %s1, 40
    %432 = vst.msk [vmem:[%s431] sm:$0xff] %vm430, %v429
    %s433 = scalar_lea.vmem [#allocation0], 131
    %v434 = vld [vmem:[%s433] ss:$8 sm:$0xf]
    %s435 = scalar_lea.vmem [#allocation0], 131
    %v436 = vld [vmem:[%s435] ss:$8 sm:$0xf0]
    %vm437 = vcmask 1047556
    %v438 = vsel %vm437, %v436, %v434
    %439 = vrot.lane.b32.xlu0 %v438, 48
    %v440 = vpop.permute.xlu0 %439
    %vm441 = vcmask 523648
    %s442 = scalar_lea.vmem %s1, 16
    %443 = vst.msk [vmem:[%s442] sm:$0xff] %vm441, %v440
    %s444 = scalar_lea.vmem [#allocation0], 387
    %v445 = vld [vmem:[%s444] ss:$8 sm:$0xf]
    %s446 = scalar_lea.vmem [#allocation0], 387
    %v447 = vld [vmem:[%s446] ss:$8 sm:$0xf0]
    %vm448 = vcmask 1047556
    %v449 = vsel %vm448, %v447, %v445
    %450 = vrot.lane.b32.xlu0 %v449, 48
    %v451 = vpop.permute.xlu0 %450
    %vm452 = vcmask 523648
    %s453 = scalar_lea.vmem %s1, 48
    %454 = vst.msk [vmem:[%s453] sm:$0xff] %vm452, %v451
    %s455 = scalar_lea.vmem [#allocation0], 195
    %v456 = vld [vmem:[%s455] ss:$8 sm:$0xf]
    %s457 = scalar_lea.vmem [#allocation0], 195
    %v458 = vld [vmem:[%s457] ss:$8 sm:$0xf0]
    %vm459 = vcmask 1047556
    %v460 = vsel %vm459, %v458, %v456
    %461 = vrot.lane.b32.xlu0 %v460, 48
    %v462 = vpop.permute.xlu0 %461
    %vm463 = vcmask 523648
    %s464 = scalar_lea.vmem %s1, 24
    %465 = vst.msk [vmem:[%s464] sm:$0xff] %vm463, %v462
    %s466 = scalar_lea.vmem [#allocation0], 451
    %v467 = vld [vmem:[%s466] ss:$8 sm:$0xf]
    %s468 = scalar_lea.vmem [#allocation0], 451
    %v469 = vld [vmem:[%s468] ss:$8 sm:$0xf0]
    %vm470 = vcmask 1047556
    %v471 = vsel %vm470, %v469, %v467
    %472 = vrot.lane.b32.xlu0 %v471, 48
    %v473 = vpop.permute.xlu0 %472
    %vm474 = vcmask 523648
    %s475 = scalar_lea.vmem %s1, 56
    %476 = vst.msk [vmem:[%s475] sm:$0xff] %vm474, %v473
    %s477 = scalar_lea.vmem [#allocation0], 2
    %v478 = vld [vmem:[%s477] ss:$8 sm:$0xf]
    %s479 = scalar_lea.vmem [#allocation0], 2
    %v480 = vld [vmem:[%s479] ss:$8 sm:$0xf0]
    %vm481 = vcmask 1047556
    %v482 = vsel %vm481, %v480, %v478
    %483 = vrot.lane.b32.xlu0 %v482, 32
    %v484 = vpop.permute.xlu0 %483
    %vm485 = vcmask 392448
    %486 = vst.msk [vmem:[%s1] sm:$0xff] %vm485, %v484
    %s487 = scalar_lea.vmem [#allocation0], 258
    %v488 = vld [vmem:[%s487] ss:$8 sm:$0xf]
    %s489 = scalar_lea.vmem [#allocation0], 258
    %v490 = vld [vmem:[%s489] ss:$8 sm:$0xf0]
    %vm491 = vcmask 1047556
    %v492 = vsel %vm491, %v490, %v488
    %493 = vrot.lane.b32.xlu0 %v492, 32
    %v494 = vpop.permute.xlu0 %493
    %vm495 = vcmask 392448
    %s496 = scalar_lea.vmem %s1, 32
    %497 = vst.msk [vmem:[%s496] sm:$0xff] %vm495, %v494
    %s498 = scalar_lea.vmem [#allocation0], 66
    %v499 = vld [vmem:[%s498] ss:$8 sm:$0xf]
    %s500 = scalar_lea.vmem [#allocation0], 66
    %v501 = vld [vmem:[%s500] ss:$8 sm:$0xf0]
    %vm502 = vcmask 1047556
    %v503 = vsel %vm502, %v501, %v499
    %504 = vrot.lane.b32.xlu0 %v503, 32
    %v505 = vpop.permute.xlu0 %504
    %vm506 = vcmask 392448
    %s507 = scalar_lea.vmem %s1, 8
    %508 = vst.msk [vmem:[%s507] sm:$0xff] %vm506, %v505
    %s509 = scalar_lea.vmem [#allocation0], 322
    %v510 = vld [vmem:[%s509] ss:$8 sm:$0xf]
    %s511 = scalar_lea.vmem [#allocation0], 322
    %v512 = vld [vmem:[%s511] ss:$8 sm:$0xf0]
    %vm513 = vcmask 1047556
    %v514 = vsel %vm513, %v512, %v510
    %515 = vrot.lane.b32.xlu0 %v514, 32
    %v516 = vpop.permute.xlu0 %515
    %vm517 = vcmask 392448
    %s518 = scalar_lea.vmem %s1, 40
    %519 = vst.msk [vmem:[%s518] sm:$0xff] %vm517, %v516
    %s520 = scalar_lea.vmem [#allocation0], 130
    %v521 = vld [vmem:[%s520] ss:$8 sm:$0xf]
    %s522 = scalar_lea.vmem [#allocation0], 130
    %v523 = vld [vmem:[%s522] ss:$8 sm:$0xf0]
    %vm524 = vcmask 1047556
    %v525 = vsel %vm524, %v523, %v521
    %526 = vrot.lane.b32.xlu0 %v525, 32
    %v527 = vpop.permute.xlu0 %526
    %vm528 = vcmask 392448
    %s529 = scalar_lea.vmem %s1, 16
    %530 = vst.msk [vmem:[%s529] sm:$0xff] %vm528, %v527
    %s531 = scalar_lea.vmem [#allocation0], 386
    %v532 = vld [vmem:[%s531] ss:$8 sm:$0xf]
    %s533 = scalar_lea.vmem [#allocation0], 386
    %v534 = vld [vmem:[%s533] ss:$8 sm:$0xf0]
    %vm535 = vcmask 1047556
    %v536 = vsel %vm535, %v534, %v532
    %537 = vrot.lane.b32.xlu0 %v536, 32
    %v538 = vpop.permute.xlu0 %537
    %vm539 = vcmask 392448
    %s540 = scalar_lea.vmem %s1, 48
    %541 = vst.msk [vmem:[%s540] sm:$0xff] %vm539, %v538
    %s542 = scalar_lea.vmem [#allocation0], 194
    %v543 = vld [vmem:[%s542] ss:$8 sm:$0xf]
    %s544 = scalar_lea.vmem [#allocation0], 194
    %v545 = vld [vmem:[%s544] ss:$8 sm:$0xf0]
    %vm546 = vcmask 1047556
    %v547 = vsel %vm546, %v545, %v543
    %548 = vrot.lane.b32.xlu0 %v547, 32
    %v549 = vpop.permute.xlu0 %548
    %vm550 = vcmask 392448
    %s551 = scalar_lea.vmem %s1, 24
    %552 = vst.msk [vmem:[%s551] sm:$0xff] %vm550, %v549
    %s553 = scalar_lea.vmem [#allocation0], 450
    %v554 = vld [vmem:[%s553] ss:$8 sm:$0xf]
    %s555 = scalar_lea.vmem [#allocation0], 450
    %v556 = vld [vmem:[%s555] ss:$8 sm:$0xf0]
    %vm557 = vcmask 1047556
    %v558 = vsel %vm557, %v556, %v554
    %559 = vrot.lane.b32.xlu0 %v558, 32
    %v560 = vpop.permute.xlu0 %559
    %vm561 = vcmask 392448
    %s562 = scalar_lea.vmem %s1, 56
    %563 = vst.msk [vmem:[%s562] sm:$0xff] %vm561, %v560
    %s564 = scalar_lea.vmem [#allocation0], 1
    %v565 = vld [vmem:[%s564] ss:$8 sm:$0xf]
    %s566 = scalar_lea.vmem [#allocation0], 1
    %v567 = vld [vmem:[%s566] ss:$8 sm:$0xf0]
    %vm568 = vcmask 1047556
    %v569 = vsel %vm568, %v567, %v565
    %570 = vrot.lane.b32.xlu0 %v569, 16
    %v571 = vpop.permute.xlu0 %570
    %vm572 = vcmask 261248
    %573 = vst.msk [vmem:[%s1] sm:$0xff] %vm572, %v571
    %s574 = scalar_lea.vmem [#allocation0], 257
    %v575 = vld [vmem:[%s574] ss:$8 sm:$0xf]
    %s576 = scalar_lea.vmem [#allocation0], 257
    %v577 = vld [vmem:[%s576] ss:$8 sm:$0xf0]
    %vm578 = vcmask 1047556
    %v579 = vsel %vm578, %v577, %v575
    %580 = vrot.lane.b32.xlu0 %v579, 16
    %v581 = vpop.permute.xlu0 %580
    %vm582 = vcmask 261248
    %s583 = scalar_lea.vmem %s1, 32
    %584 = vst.msk [vmem:[%s583] sm:$0xff] %vm582, %v581
    %s585 = scalar_lea.vmem [#allocation0], 65
    %v586 = vld [vmem:[%s585] ss:$8 sm:$0xf]
    %s587 = scalar_lea.vmem [#allocation0], 65
    %v588 = vld [vmem:[%s587] ss:$8 sm:$0xf0]
    %vm589 = vcmask 1047556
    %v590 = vsel %vm589, %v588, %v586
    %591 = vrot.lane.b32.xlu0 %v590, 16
    %v592 = vpop.permute.xlu0 %591
    %vm593 = vcmask 261248
    %s594 = scalar_lea.vmem %s1, 8
    %595 = vst.msk [vmem:[%s594] sm:$0xff] %vm593, %v592
    %s596 = scalar_lea.vmem [#allocation0], 321
    %v597 = vld [vmem:[%s596] ss:$8 sm:$0xf]
    %s598 = scalar_lea.vmem [#allocation0], 321
    %v599 = vld [vmem:[%s598] ss:$8 sm:$0xf0]
    %vm600 = vcmask 1047556
    %v601 = vsel %vm600, %v599, %v597
    %602 = vrot.lane.b32.xlu0 %v601, 16
    %v603 = vpop.permute.xlu0 %602
    %vm604 = vcmask 261248
    %s605 = scalar_lea.vmem %s1, 40
    %606 = vst.msk [vmem:[%s605] sm:$0xff] %vm604, %v603
    %s607 = scalar_lea.vmem [#allocation0], 129
    %v608 = vld [vmem:[%s607] ss:$8 sm:$0xf]
    %s609 = scalar_lea.vmem [#allocation0], 129
    %v610 = vld [vmem:[%s609] ss:$8 sm:$0xf0]
    %vm611 = vcmask 1047556
    %v612 = vsel %vm611, %v610, %v608
    %613 = vrot.lane.b32.xlu0 %v612, 16
    %v614 = vpop.permute.xlu0 %613
    %vm615 = vcmask 261248
    %s616 = scalar_lea.vmem %s1, 16
    %617 = vst.msk [vmem:[%s616] sm:$0xff] %vm615, %v614
    %s618 = scalar_lea.vmem [#allocation0], 385
    %v619 = vld [vmem:[%s618] ss:$8 sm:$0xf]
    %s620 = scalar_lea.vmem [#allocation0], 385
    %v621 = vld [vmem:[%s620] ss:$8 sm:$0xf0]
    %vm622 = vcmask 1047556
    %v623 = vsel %vm622, %v621, %v619
    %624 = vrot.lane.b32.xlu0 %v623, 16
    %v625 = vpop.permute.xlu0 %624
    %vm626 = vcmask 261248
    %s627 = scalar_lea.vmem %s1, 48
    %628 = vst.msk [vmem:[%s627] sm:$0xff] %vm626, %v625
    %s629 = scalar_lea.vmem [#allocation0], 193
    %v630 = vld [vmem:[%s629] ss:$8 sm:$0xf]
    %s631 = scalar_lea.vmem [#allocation0], 193
    %v632 = vld [vmem:[%s631] ss:$8 sm:$0xf0]
    %vm633 = vcmask 1047556
    %v634 = vsel %vm633, %v632, %v630
    %635 = vrot.lane.b32.xlu0 %v634, 16
    %v636 = vpop.permute.xlu0 %635
    %vm637 = vcmask 261248
    %s638 = scalar_lea.vmem %s1, 24
    %639 = vst.msk [vmem:[%s638] sm:$0xff] %vm637, %v636
    %s640 = scalar_lea.vmem [#allocation0], 449
    %v641 = vld [vmem:[%s640] ss:$8 sm:$0xf]
    %s642 = scalar_lea.vmem [#allocation0], 449
    %v643 = vld [vmem:[%s642] ss:$8 sm:$0xf0]
    %vm644 = vcmask 1047556
    %v645 = vsel %vm644, %v643, %v641
    %646 = vrot.lane.b32.xlu0 %v645, 16
    %v647 = vpop.permute.xlu0 %646
    %vm648 = vcmask 261248
    %s649 = scalar_lea.vmem %s1, 56
    %650 = vst.msk [vmem:[%s649] sm:$0xff] %vm648, %v647

// kernel: unet_forward.7
$region0: #{unet_forward.7}
  #allocation0 [shape = 'u32[]', space=smem, size = 0x4, offset = 0x4, fixed_abs, tag = 'smem constant byte address 0x4 - core index']
  #allocation1 [shape = 'u32[144,128]{1,0:T(1,128)}', space=vmem, size = 0x12000, scoped, tag = 'internal scratch']
  %s0 = inlined_call_operand.vmem [shape: bf16[32,256], index: 0, kind: input, shape index: {}]
  %s1 = inlined_call_operand.vmem [shape: bf16[256,128], index: 1, kind: input, shape index: {}]
  %s2 = inlined_call_operand.vmem [shape: f32[8,128], index: 2, kind: input, shape index: {}]
  %s3 = inlined_call_operand.vmem [shape: f32[1,128], index: 3, kind: input, shape index: {}]
  %s4 = inlined_call_operand.vmem [shape: f32[1,128], index: 4, kind: input, shape index: {}]
  %s5 = inlined_call_operand.vmem [shape: bf16[32,128], index: 5, kind: output, shape index: {}]
  %s6 = sld [smem:[#allocation0]]
  $region30: #{unet_forward.7} parent=0
    _
  %s8 = ssub.s32 1, %s6
  %s9 = scalar_select 0, %s8, %s6
  // Predicated region
  $region2: #{unet_forward.7} parent=0 // pred_check
    _
  $region3: #{unet_forward.7} parent=0 // pred_check_branch
    %11 = sbr.rel (0) target = $region5
  $region4: #{unet_forward.7} parent=0 // pred_region
    _
  $region5: #{unet_forward.7} parent=0 // pred_fallthru
    _
  // Predicated region
  $region6: #{unet_forward.7} parent=0 // pred_check
    _
  $region7: #{unet_forward.7} parent=0 // pred_check_branch
    %13 = sbr.rel (0) target = $region9
  $region8: #{unet_forward.7} parent=0 // pred_region
    _
  $region9: #{unet_forward.7} parent=0 // pred_fallthru
    _
  // Predicated region
  $region10: #{unet_forward.7} parent=0 // pred_check
    _
  $region11: #{unet_forward.7} parent=0 // pred_check_branch
    %15 = sbr.rel (0) target = $region13
  $region12: #{unet_forward.7} parent=0 // pred_region
    _
  $region13: #{unet_forward.7} parent=0 // pred_fallthru
    _
  // Predicated region
  $region14: #{unet_forward.7} parent=0 // pred_check
    _
  $region15: #{unet_forward.7} parent=0 // pred_check_branch
    %17 = sbr.rel (0) target = $region17
  $region16: #{unet_forward.7} parent=0 // pred_region
    _
  $region17: #{unet_forward.7} parent=0 // pred_fallthru
    _
  // Predicated region
  $region18: #{unet_forward.7} parent=0 // pred_check
    _
  $region19: #{unet_forward.7} parent=0 // pred_check_branch
    %19 = sbr.rel (0) target = $region21
  $region20: #{unet_forward.7} parent=0 // pred_region
    _
  $region21: #{unet_forward.7} parent=0 // pred_fallthru
    _
  %v21 = vld [vmem:[%s0] sm:$0xff]
  %v22 = vld [vmem:[%s0 + $0x8] sm:$0xff]
  %v23 = vld [vmem:[%s0 + $0x10] sm:$0xff]
  %v24 = vld [vmem:[%s0 + $0x18] sm:$0xff]
  %v25 = vld [vmem:[%s1] sm:$0xf]
  %v26 = vld [vmem:[%s1 + $0x4] sm:$0xf]
  %v27 = vld [vmem:[%s1 + $0x8] sm:$0xf]
  %v28 = vld [vmem:[%s1 + $0xc] sm:$0xf]
  %v29 = vld [vmem:[%s1 + $0x10] sm:$0xf]
  %v30 = vld [vmem:[%s1 + $0x14] sm:$0xf]
  %v31 = vld [vmem:[%s1 + $0x18] sm:$0xf]
  %v32 = vld [vmem:[%s1 + $0x1c] sm:$0xf]
  %v33 = vld [vmem:[%s1 + $0x20] sm:$0xf]
  %v34 = vld [vmem:[%s1 + $0x24] sm:$0xf]
  %v35 = vld [vmem:[%s1 + $0x28] sm:$0xf]
  %v36 = vld [vmem:[%s1 + $0x2c] sm:$0xf]
  %v37 = vld [vmem:[%s1 + $0x30] sm:$0xf]
  %v38 = vld [vmem:[%s1 + $0x34] sm:$0xf]
  %v39 = vld [vmem:[%s1 + $0x38] sm:$0xf]
  %v40 = vld [vmem:[%s1 + $0x3c] sm:$0xf]
  %v41 = vld [vmem:[%s1 + $0x40] sm:$0xf]
  %v42 = vld [vmem:[%s1 + $0x44] sm:$0xf]
  %v43 = vld [vmem:[%s1 + $0x48] sm:$0xf]
  %v44 = vld [vmem:[%s1 + $0x4c] sm:$0xf]
  %v45 = vld [vmem:[%s1 + $0x50] sm:$0xf]
  %v46 = vld [vmem:[%s1 + $0x54] sm:$0xf]
  %v47 = vld [vmem:[%s1 + $0x58] sm:$0xf]
  %v48 = vld [vmem:[%s1 + $0x5c] sm:$0xf]
  %v49 = vld [vmem:[%s1 + $0x60] sm:$0xf]
  %v50 = vld [vmem:[%s1 + $0x64] sm:$0xf]
  %v51 = vld [vmem:[%s1 + $0x68] sm:$0xf]
  %v52 = vld [vmem:[%s1 + $0x6c] sm:$0xf]
  %v53 = vld [vmem:[%s1 + $0x70] sm:$0xf]
  %v54 = vld [vmem:[%s1 + $0x74] sm:$0xf]
  %v55 = vld [vmem:[%s1 + $0x78] sm:$0xf]
  %v56 = vld [vmem:[%s1 + $0x7c] sm:$0xf]
  %v61 = vunpack.c.l.b16 %v21
  %v62 = vunpack.c.h.b16 %v21
  %v63 = vunpack.c.l.b16 %v22
  %v64 = vunpack.c.h.b16 %v22
  %v65 = vunpack.c.l.b16 %v23
  %v66 = vunpack.c.h.b16 %v23
  %v67 = vunpack.c.l.b16 %v24
  %v68 = vunpack.c.h.b16 %v24
  %v69 = vpack.c.b16 %v63, %v61
  %v70 = vpack.c.b16 %v64, %v62
  %v71 = vpack.c.b16 %v67, %v65
  %v72 = vpack.c.b16 %v68, %v66
  %v109 = vunpack.c.l.b16 %v25
  %v110 = vunpack.c.l.b16 %v26
  %v111 = vunpack.c.l.b16 %v27
  %v112 = vunpack.c.l.b16 %v28
  %v113 = vunpack.c.l.b16 %v29
  %v114 = vunpack.c.l.b16 %v30
  %v115 = vunpack.c.l.b16 %v31
  %v116 = vunpack.c.l.b16 %v32
  %v117 = vunpack.c.l.b16 %v33
  %v118 = vunpack.c.l.b16 %v34
  %v119 = vunpack.c.l.b16 %v35
  %v120 = vunpack.c.l.b16 %v36
  %v121 = vunpack.c.l.b16 %v37
  %v122 = vunpack.c.l.b16 %v38
  %v123 = vunpack.c.l.b16 %v39
  %v124 = vunpack.c.l.b16 %v40
  %v125 = vunpack.c.l.b16 %v41
  %v126 = vunpack.c.l.b16 %v42
  %v127 = vunpack.c.l.b16 %v43
  %v128 = vunpack.c.l.b16 %v44
  %v129 = vunpack.c.l.b16 %v45
  %v130 = vunpack.c.l.b16 %v46
  %v131 = vunpack.c.l.b16 %v47
  %v132 = vunpack.c.l.b16 %v48
  %v133 = vunpack.c.l.b16 %v49
  %v134 = vunpack.c.l.b16 %v50
  %v135 = vunpack.c.l.b16 %v51
  %v136 = vunpack.c.l.b16 %v52
  %v137 = vunpack.c.l.b16 %v53
  %v138 = vunpack.c.l.b16 %v54
  %v139 = vunpack.c.l.b16 %v55
  %v140 = vunpack.c.l.b16 %v56
  %v141 = vpack.c.b16 %v110, %v109
  %v142 = vpack.c.b16 %v112, %v111
  %v143 = vpack.c.b16 %v114, %v113
  %v144 = vpack.c.b16 %v116, %v115
  %v145 = vpack.c.b16 %v118, %v117
  %v146 = vpack.c.b16 %v120, %v119
  %v147 = vpack.c.b16 %v122, %v121
  %v148 = vpack.c.b16 %v124, %v123
  %v149 = vpack.c.b16 %v126, %v125
  %v150 = vpack.c.b16 %v128, %v127
  %v151 = vpack.c.b16 %v130, %v129
  %v152 = vpack.c.b16 %v132, %v131
  %v153 = vpack.c.b16 %v134, %v133
  %v154 = vpack.c.b16 %v136, %v135
  %v155 = vpack.c.b16 %v138, %v137
  %v156 = vpack.c.b16 %v140, %v139
  %173 = vmatprep.subr.bf16.mxu0 0
  %174 = vmatpush1.bf16.msra.mxu0 %v148
  %175 = vmatprep.subr.bf16.mxu0 0
  %176 = vmatpush1.bf16.msra.mxu0 %v147
  %177 = vmatprep.subr.bf16.mxu0 0
  %178 = vmatpush1.bf16.msra.mxu0 %v146
  %179 = vmatprep.subr.bf16.mxu0 0
  %180 = vmatpush1.bf16.msra.mxu0 %v145
  %181 = vmatprep.subr.bf16.mxu0 0
  %182 = vmatpush1.bf16.msra.mxu0 %v144
  %183 = vmatprep.subr.bf16.mxu0 0
  %184 = vmatpush1.bf16.msra.mxu0 %v143
  %185 = vmatprep.subr.bf16.mxu0 0
  %186 = vmatpush1.bf16.msra.mxu0 %v142
  %187 = vmatprep.subr.bf16.mxu0 0
  %188 = vmatpush1.bf16.msra.mxu0 %v141
  %189 = vmatprep.subr.bf16.mxu0 0
  %190 = vmatpush2.bf16.msra.mxu0 %v156
  %191 = vmatprep.subr.bf16.mxu0 0
  %192 = vmatpush2.bf16.msra.mxu0 %v155
  %193 = vmatprep.subr.bf16.mxu0 0
  %194 = vmatpush2.bf16.msra.mxu0 %v154
  %195 = vmatprep.subr.bf16.mxu0 0
  %196 = vmatpush2.bf16.msra.mxu0 %v153
  %197 = vmatprep.subr.bf16.mxu0 0
  %198 = vmatpush2.bf16.msra.mxu0 %v152
  %199 = vmatprep.subr.bf16.mxu0 0
  %200 = vmatpush2.bf16.msra.mxu0 %v151
  %201 = vmatprep.subr.bf16.mxu0 0
  %202 = vmatpush2.bf16.msra.mxu0 %v150
  %203 = vmatprep.subr.bf16.mxu0 0
  %204 = vmatpush2.bf16.msra.mxu0 %v149
  %205 = vmatprep.mubr.bf16.mxu0 %v70
  %206 = vmatmul.mubr.bf16.gmra.mxu0 %v69
  %v207 = vpop.f32.mrf.mxu0
  %v208 = vadd.f32 0.0, %v207
  %v209 = vpop.f32.mrf.mxu0
  %v210 = vpop.f32.mrf.mxu0
  %v211 = vadd.f32 0.0, %v210
  %v212 = vpop.f32.mrf.mxu0
  %213 = vmatprep.mubr.bf16.mxu0 %v72
  %214 = vmatmul.mubr.bf16.gmra.mxu0 %v71
  %v215 = vpop.f32.mrf.mxu0
  %v216 = vadd.f32 0.0, %v215
  %v217 = vpop.f32.mrf.mxu0
  %v218 = vpop.f32.mrf.mxu0
  %v219 = vadd.f32 0.0, %v218
  %v220 = vpop.f32.mrf.mxu0
  %221 = vdwg.mxu0
  %v222 = vmul.f32 %v208, %v208
  %v223 = vmul.f32 %v211, %v211
  %v224 = vmul.f32 %v216, %v216
  %v225 = vmul.f32 %v219, %v219
  %v226 = vadd.f32 %v208, %v211
  %v227 = vadd.f32 %v226, %v216
  %v228 = vadd.f32 %v227, %v219
  %v229 = vrot.slane %v228, 4
  %v230 = vadd.f32 %v228, %v229
  %v231 = vrot.slane %v230, 2
  %v232 = vadd.f32 %v230, %v231
  %v233 = vrot.slane %v232, 1
  %v234 = vadd.f32 %v232, %v233
  %v235 = vmul.f32 %v234, 0.03125
  %v236 = vadd.f32 %v222, %v223
  %v237 = vadd.f32 %v236, %v224
  %v238 = vadd.f32 %v237, %v225
  %v239 = vrot.slane %v238, 4
  %v240 = vadd.f32 %v238, %v239
  %v241 = vrot.slane %v240, 2
  %v242 = vadd.f32 %v240, %v241
  %v243 = vrot.slane %v242, 1
  %v244 = vadd.f32 %v242, %v243
  %v245 = vmul.f32 %v244, 0.03125
  %v246 = vmul.f32 %v235, %v235
  %v247 = vsub.f32 %v245, %v246
  %v248 = vld [vmem:[%s3] sm:$0x1]
  %v249 = vadd.f32 %v247, 1e-05
  %v250 = vrsqrt.pop %v249
  %v251 = vmul.f32 %v248, %v250
  %v252 = vld [vmem:[%s4] sm:$0x1]
  %v253 = vmul.f32 %v235, %v251
  %v254 = vsub.f32 %v252, %v253
  %v256 = vlaneseq
  %v257 = vshrl.u32 %v256, 7
  %v258 = vsub.s32 0, %v257
  %v259 = vrot.slane %v251, %v258
  %v261 = vmul.f32 %v208, %v259
  %v262 = vmul.f32 %v211, %v259
  %v263 = vmul.f32 %v216, %v259
  %v264 = vmul.f32 %v219, %v259
  %v266 = vlaneseq
  %v267 = vshrl.u32 %v266, 7
  %v268 = vsub.s32 0, %v267
  %v269 = vrot.slane %v254, %v268
  %v271 = vadd.f32 %v261, %v269
  %v272 = vadd.f32 %v262, %v269
  %v273 = vadd.f32 %v263, %v269
  %v274 = vadd.f32 %v264, %v269
  %v275 = vmax.f32 %v271, 0.0
  %v276 = vmax.f32 %v272, 0.0
  %v277 = vmax.f32 %v273, 0.0
  %v278 = vmax.f32 %v274, 0.0
  %v279 = vpack.c.bf16 %v276, %v275
  %v280 = vpack.c.bf16 %v278, %v277
  %v283 = vunpack.c.l.b16 %v279
  %v284 = vunpack.c.h.b16 %v279
  %v285 = vunpack.c.l.b16 %v280
  %v286 = vunpack.c.h.b16 %v280
  %v287 = vpack.c.b16 %v283, %v283
  %v288 = vpack.c.b16 %v284, %v284
  %v289 = vpack.c.b16 %v285, %v285
  %v290 = vpack.c.b16 %v286, %v286
  %295 = vst [vmem:[%s5] sm:$0xf] %v287
  %296 = vst [vmem:[%s5 + $0x4] sm:$0xf] %v288
  %297 = vst [vmem:[%s5 + $0x8] sm:$0xf] %v289
  %298 = vst [vmem:[%s5 + $0xc] sm:$0xf] %v290
  // Predicated region
  $region22: #{unet_forward.7} parent=0 // pred_check
    _
  $region23: #{unet_forward.7} parent=0 // pred_check_branch
    %300 = sbr.rel (0) target = $region25
  $region24: #{unet_forward.7} parent=0 // pred_region
    _
  $region25: #{unet_forward.7} parent=0 // pred_fallthru
    _
  // Predicated region
  $region26: #{unet_forward.7} parent=0 // pred_check
    _
  $region27: #{unet_forward.7} parent=0 // pred_check_branch
    %302 = sbr.rel (0) target = $region29
  $region28: #{unet_forward.7} parent=0 // pred_region
    _
  $region29: #{unet_forward.7} parent=0 // pred_fallthru
    _

// kernel: tile.53
$region0: #{tile.53}
  #allocation0 [shape = 's32[1]{0}', space=sflag, size = 0x4, scoped, tag = 'scoped memory for tile.53']
  %s0 = inlined_call_operand.vmem [shape: f32[8], index: 0, kind: input, shape index: {}]
  %s1 = inlined_call_operand.vmem [shape: f32[4,8], index: 1, kind: output, shape index: {}]
  // Predicated region
  $region2: #{tile.53} parent=0 // pred_check
    _
  $region3: #{tile.53} parent=0 // pred_check_branch
    %3 = sbr.rel (0) target = $region5
  $region4: #{tile.53} parent=0 // pred_region
    _
  $region5: #{tile.53} parent=0 // pred_fallthru
    _
  %v4 = vld [vmem:[%s0] ss:$0 sm:$0xff]
  %5 = vst [vmem:[%s1] sm:$0xf] %v4

// kernel: tile.54
$region0: #{tile.54}
  %s0 = inlined_call_operand.vmem [shape: f32[4,8], index: 0, kind: input, shape index: {}]
  %s1 = inlined_call_operand.vmem [shape: f32[32], index: 1, kind: output, shape index: {}]
  $region1: #{tile.54} parent=0
    #allocation0 [shape = 'u8[4096]{0}', space=vmem, size = 0x1000, scoped, tag = 'scoped mem for output reshape']
    #allocation1 [shape = 'u8[4096]{0}', space=vmem, size = 0x1000, scoped, tag = 'scoped mem for input reshape']
    %s3 = sshll.u32 1, 4
    %s4 = ssub.s32 %s3, 1
    %v5 = vld [vmem:[%s0] sm:%s4]
    %6 = vst [vmem:[#allocation1] sm:%s4] %v5
    %v7 = vld [vmem:[#allocation1] sm:$0x1]
    %vm8 = vcmask 64512
    %9 = vst.msk [vmem:[#allocation0] sm:$0x1] %vm8, %v7
    %s10 = scalar_lea.vmem [#allocation1], 3
    %v11 = vld [vmem:[%s10] sm:$0x1]
    %12 = vrot.lane.b32.xlu0 %v11, 24
    %v13 = vpop.permute.xlu0 %12
    %vm14 = vcmask 261312
    %15 = vst.msk [vmem:[#allocation0] sm:$0x1] %vm14, %v13
    %s16 = scalar_lea.vmem [#allocation1], 2
    %v17 = vld [vmem:[%s16] sm:$0x1]
    %18 = vrot.lane.b32.xlu0 %v17, 16
    %v19 = vpop.permute.xlu0 %18
    %vm20 = vcmask 195712
    %21 = vst.msk [vmem:[#allocation0] sm:$0x1] %vm20, %v19
    %s22 = scalar_lea.vmem [#allocation1], 1
    %v23 = vld [vmem:[%s22] sm:$0x1]
    %24 = vrot.lane.b32.xlu0 %v23, 8
    %v25 = vpop.permute.xlu0 %24
    %vm26 = vcmask 130112
    %27 = vst.msk [vmem:[#allocation0] sm:$0x1] %vm26, %v25
    %s29 = sshll.u32 1, 1
    %s30 = ssub.s32 %s29, 1
    %v32 = vld [vmem:[#allocation0] sm:%s30]
    %s33 = sshll.u32 1, 1
    %s34 = ssub.s32 %s33, 1
    %35 = vst [vmem:[%s1] sm:%s34] %v32

// kernel: unet_forward.8
$region0: #{unet_forward.8}
  #allocation0 [shape = 'u32[]', space=smem, size = 0x4, offset = 0x4, fixed_abs, tag = 'smem constant byte address 0x4 - core index']
  #allocation1 [shape = 'u32[144,128]{1,0:T(1,128)}', space=vmem, size = 0x12000, scoped, tag = 'internal scratch']
  %s0 = inlined_call_operand.vmem [shape: bf16[32,128], index: 0, kind: input, shape index: {}]
  %s1 = inlined_call_operand.vmem [shape: bf16[128,128], index: 1, kind: input, shape index: {}]
  %s2 = inlined_call_operand.vmem [shape: f32[128,128], index: 2, kind: input, shape index: {}]
  %s3 = inlined_call_operand.vmem [shape: f32[1,128], index: 3, kind: input, shape index: {}]
  %s4 = inlined_call_operand.vmem [shape: f32[1,128], index: 4, kind: input, shape index: {}]
  %s5 = inlined_call_operand.vmem [shape: bf16[32,128], index: 5, kind: output, shape index: {}]
  %s6 = sld [smem:[#allocation0]]
  $region30: #{unet_forward.8} parent=0
    _
  %s8 = ssub.s32 1, %s6
  %s9 = scalar_select 0, %s8, %s6
  // Predicated region
  $region2: #{unet_forward.8} parent=0 // pred_check
    _
  $region3: #{unet_forward.8} parent=0 // pred_check_branch
    %11 = sbr.rel (0) target = $region5
  $region4: #{unet_forward.8} parent=0 // pred_region
    _
  $region5: #{unet_forward.8} parent=0 // pred_fallthru
    _
  // Predicated region
  $region6: #{unet_forward.8} parent=0 // pred_check
    _
  $region7: #{unet_forward.8} parent=0 // pred_check_branch
    %13 = sbr.rel (0) target = $region9
  $region8: #{unet_forward.8} parent=0 // pred_region
    _
  $region9: #{unet_forward.8} parent=0 // pred_fallthru
    _
  // Predicated region
  $region10: #{unet_forward.8} parent=0 // pred_check
    _
  $region11: #{unet_forward.8} parent=0 // pred_check_branch
    %15 = sbr.rel (0) target = $region13
  $region12: #{unet_forward.8} parent=0 // pred_region
    _
  $region13: #{unet_forward.8} parent=0 // pred_fallthru
    _
  // Predicated region
  $region14: #{unet_forward.8} parent=0 // pred_check
    _
  $region15: #{unet_forward.8} parent=0 // pred_check_branch
    %17 = sbr.rel (0) target = $region17
  $region16: #{unet_forward.8} parent=0 // pred_region
    _
  $region17: #{unet_forward.8} parent=0 // pred_fallthru
    _
  // Predicated region
  $region18: #{unet_forward.8} parent=0 // pred_check
    _
  $region19: #{unet_forward.8} parent=0 // pred_check_branch
    %19 = sbr.rel (0) target = $region21
  $region20: #{unet_forward.8} parent=0 // pred_region
    _
  $region21: #{unet_forward.8} parent=0 // pred_fallthru
    _
  %v21 = vld [vmem:[%s0] sm:$0xf]
  %v22 = vld [vmem:[%s0 + $0x4] sm:$0xf]
  %v23 = vld [vmem:[%s0 + $0x8] sm:$0xf]
  %v24 = vld [vmem:[%s0 + $0xc] sm:$0xf]
  %v25 = vld [vmem:[%s1] sm:$0xf]
  %v26 = vld [vmem:[%s1 + $0x4] sm:$0xf]
  %v27 = vld [vmem:[%s1 + $0x8] sm:$0xf]
  %v28 = vld [vmem:[%s1 + $0xc] sm:$0xf]
  %v29 = vld [vmem:[%s1 + $0x10] sm:$0xf]
  %v30 = vld [vmem:[%s1 + $0x14] sm:$0xf]
  %v31 = vld [vmem:[%s1 + $0x18] sm:$0xf]
  %v32 = vld [vmem:[%s1 + $0x1c] sm:$0xf]
  %v33 = vld [vmem:[%s1 + $0x20] sm:$0xf]
  %v34 = vld [vmem:[%s1 + $0x24] sm:$0xf]
  %v35 = vld [vmem:[%s1 + $0x28] sm:$0xf]
  %v36 = vld [vmem:[%s1 + $0x2c] sm:$0xf]
  %v37 = vld [vmem:[%s1 + $0x30] sm:$0xf]
  %v38 = vld [vmem:[%s1 + $0x34] sm:$0xf]
  %v39 = vld [vmem:[%s1 + $0x38] sm:$0xf]
  %v40 = vld [vmem:[%s1 + $0x3c] sm:$0xf]
  %v45 = vunpack.c.l.b16 %v21
  %v46 = vunpack.c.l.b16 %v22
  %v47 = vunpack.c.l.b16 %v23
  %v48 = vunpack.c.l.b16 %v24
  %v49 = vpack.c.b16 %v46, %v45
  %v50 = vpack.c.b16 %v48, %v47
  %v69 = vunpack.c.l.b16 %v25
  %v70 = vunpack.c.l.b16 %v26
  %v71 = vunpack.c.l.b16 %v27
  %v72 = vunpack.c.l.b16 %v28
  %v73 = vunpack.c.l.b16 %v29
  %v74 = vunpack.c.l.b16 %v30
  %v75 = vunpack.c.l.b16 %v31
  %v76 = vunpack.c.l.b16 %v32
  %v77 = vunpack.c.l.b16 %v33
  %v78 = vunpack.c.l.b16 %v34
  %v79 = vunpack.c.l.b16 %v35
  %v80 = vunpack.c.l.b16 %v36
  %v81 = vunpack.c.l.b16 %v37
  %v82 = vunpack.c.l.b16 %v38
  %v83 = vunpack.c.l.b16 %v39
  %v84 = vunpack.c.l.b16 %v40
  %v85 = vpack.c.b16 %v70, %v69
  %v86 = vpack.c.b16 %v72, %v71
  %v87 = vpack.c.b16 %v74, %v73
  %v88 = vpack.c.b16 %v76, %v75
  %v89 = vpack.c.b16 %v78, %v77
  %v90 = vpack.c.b16 %v80, %v79
  %v91 = vpack.c.b16 %v82, %v81
  %v92 = vpack.c.b16 %v84, %v83
  %101 = vmatprep.subr.bf16.mxu0 0
  %102 = vmatpush1.bf16.msra.mxu0 %v92
  %103 = vmatprep.subr.bf16.mxu0 0
  %104 = vmatpush1.bf16.msra.mxu0 %v91
  %105 = vmatprep.subr.bf16.mxu0 0
  %106 = vmatpush1.bf16.msra.mxu0 %v90
  %107 = vmatprep.subr.bf16.mxu0 0
  %108 = vmatpush1.bf16.msra.mxu0 %v89
  %109 = vmatprep.subr.bf16.mxu0 0
  %110 = vmatpush1.bf16.msra.mxu0 %v88
  %111 = vmatprep.subr.bf16.mxu0 0
  %112 = vmatpush1.bf16.msra.mxu0 %v87
  %113 = vmatprep.subr.bf16.mxu0 0
  %114 = vmatpush1.bf16.msra.mxu0 %v86
  %115 = vmatprep.subr.bf16.mxu0 0
  %116 = vmatpush1.bf16.msra.mxu0 %v85
  %117 = vmatprep.subr.bf16.mxu0 0
  %118 = vmatpush2.bf16.msra.mxu0 0
  %119 = vmatprep.subr.bf16.mxu0 0
  %120 = vmatpush2.bf16.msra.mxu0 0
  %121 = vmatprep.subr.bf16.mxu0 0
  %122 = vmatpush2.bf16.msra.mxu0 0
  %123 = vmatprep.subr.bf16.mxu0 0
  %124 = vmatpush2.bf16.msra.mxu0 0
  %125 = vmatprep.subr.bf16.mxu0 0
  %126 = vmatpush2.bf16.msra.mxu0 0
  %127 = vmatprep.subr.bf16.mxu0 0
  %128 = vmatpush2.bf16.msra.mxu0 0
  %129 = vmatprep.subr.bf16.mxu0 0
  %130 = vmatpush2.bf16.msra.mxu0 0
  %131 = vmatprep.subr.bf16.mxu0 0
  %132 = vmatpush2.bf16.msra.mxu0 0
  %133 = vmatprep.mubr.bf16.mxu0 0
  %134 = vmatmul.mubr.bf16.gmra.mxu0 %v49
  %v135 = vpop.f32.mrf.mxu0
  %v136 = vadd.f32 0.0, %v135
  %v137 = vpop.f32.mrf.mxu0
  %v138 = vpop.f32.mrf.mxu0
  %v139 = vadd.f32 0.0, %v138
  %v140 = vpop.f32.mrf.mxu0
  %141 = vmatprep.mubr.bf16.mxu0 0
  %142 = vmatmul.mubr.bf16.gmra.mxu0 %v50
  %v143 = vpop.f32.mrf.mxu0
  %v144 = vadd.f32 0.0, %v143
  %v145 = vpop.f32.mrf.mxu0
  %v146 = vpop.f32.mrf.mxu0
  %v147 = vadd.f32 0.0, %v146
  %v148 = vpop.f32.mrf.mxu0
  %149 = vdwg.mxu0
  %v150 = vld [vmem:[%s2] sm:$0xff]
  %v151 = vld [vmem:[%s2 + $0x8] sm:$0xff]
  %v152 = vld [vmem:[%s2 + $0x10] sm:$0xff]
  %v153 = vld [vmem:[%s2 + $0x18] sm:$0xff]
  %v154 = vld [vmem:[%s2 + $0x20] sm:$0xff]
  %v155 = vld [vmem:[%s2 + $0x28] sm:$0xff]
  %v156 = vld [vmem:[%s2 + $0x30] sm:$0xff]
  %v157 = vld [vmem:[%s2 + $0x38] sm:$0xff]
  %v158 = vld [vmem:[%s2 + $0x40] sm:$0xff]
  %v159 = vld [vmem:[%s2 + $0x48] sm:$0xff]
  %v160 = vld [vmem:[%s2 + $0x50] sm:$0xff]
  %v161 = vld [vmem:[%s2 + $0x58] sm:$0xff]
  %v162 = vld [vmem:[%s2 + $0x60] sm:$0xff]
  %v163 = vld [vmem:[%s2 + $0x68] sm:$0xff]
  %v164 = vld [vmem:[%s2 + $0x70] sm:$0xff]
  %v165 = vld [vmem:[%s2 + $0x78] sm:$0xff]
  %166 = vmatprep.subr.mxu0 0.0
  %167 = vmatpush1.msra.mxu0 %v165
  %168 = vmatprep.subr.mxu0 0.0
  %169 = vmatpush1.msra.mxu0 %v164
  %170 = vmatprep.subr.mxu0 0.0
  %171 = vmatpush1.msra.mxu0 %v163
  %172 = vmatprep.subr.mxu0 0.0
  %173 = vmatpush1.msra.mxu0 %v162
  %174 = vmatprep.subr.mxu0 0.0
  %175 = vmatpush1.msra.mxu0 %v161
  %176 = vmatprep.subr.mxu0 0.0
  %177 = vmatpush1.msra.mxu0 %v160
  %178 = vmatprep.subr.mxu0 0.0
  %179 = vmatpush1.msra.mxu0 %v159
  %180 = vmatprep.subr.mxu0 0.0
  %181 = vmatpush1.msra.mxu0 %v158
  %182 = vmatprep.subr.mxu0 0.0
  %183 = vmatpush1.msra.mxu0 %v157
  %184 = vmatprep.subr.mxu0 0.0
  %185 = vmatpush1.msra.mxu0 %v156
  %186 = vmatprep.subr.mxu0 0.0
  %187 = vmatpush1.msra.mxu0 %v155
  %188 = vmatprep.subr.mxu0 0.0
  %189 = vmatpush1.msra.mxu0 %v154
  %190 = vmatprep.subr.mxu0 0.0
  %191 = vmatpush1.msra.mxu0 %v153
  %192 = vmatprep.subr.mxu0 0.0
  %193 = vmatpush1.msra.mxu0 %v152
  %194 = vmatprep.subr.mxu0 0.0
  %195 = vmatpush1.msra.mxu0 %v151
  %196 = vmatprep.subr.mxu0 0.0
  %197 = vmatpush1.msra.mxu0 %v150
  %198 = vmatprep.subr.mxu0 0.0
  %199 = vmatpush2.msra.mxu0 0.0
  %200 = vmatprep.subr.mxu0 0.0
  %201 = vmatpush2.msra.mxu0 0.0
  %202 = vmatprep.subr.mxu0 0.0
  %203 = vmatpush2.msra.mxu0 0.0
  %204 = vmatprep.subr.mxu0 0.0
  %205 = vmatpush2.msra.mxu0 0.0
  %206 = vmatprep.subr.mxu0 0.0
  %207 = vmatpush2.msra.mxu0 0.0
  %208 = vmatprep.subr.mxu0 0.0
  %209 = vmatpush2.msra.mxu0 0.0
  %210 = vmatprep.subr.mxu0 0.0
  %211 = vmatpush2.msra.mxu0 0.0
  %212 = vmatprep.subr.mxu0 0.0
  %213 = vmatpush2.msra.mxu0 0.0
  %214 = vmatprep.subr.mxu0 0.0
  %215 = vmatpush2.msra.mxu0 0.0
  %216 = vmatprep.subr.mxu0 0.0
  %217 = vmatpush2.msra.mxu0 0.0
  %218 = vmatprep.subr.mxu0 0.0
  %219 = vmatpush2.msra.mxu0 0.0
  %220 = vmatprep.subr.mxu0 0.0
  %221 = vmatpush2.msra.mxu0 0.0
  %222 = vmatprep.subr.mxu0 0.0
  %223 = vmatpush2.msra.mxu0 0.0
  %224 = vmatprep.subr.mxu0 0.0
  %225 = vmatpush2.msra.mxu0 0.0
  %226 = vmatprep.subr.mxu0 0.0
  %227 = vmatpush2.msra.mxu0 0.0
  %228 = vmatprep.subr.mxu0 0.0
  %229 = vmatpush2.msra.mxu0 0.0
  %230 = vmatprep.mubr.f32.mxu0 0.0
  %231 = vmatmul.mubr.f32.gmra.mxu0 %v136
  %v232 = vpop.f32.mrf.mxu0
  %v233 = vadd.f32 0.0, %v232
  %v234 = vpop.f32.mrf.mxu0
  %235 = vmatprep.mubr.f32.mxu0 0.0
  %236 = vmatmul.mubr.f32.gmra.mxu0 %v139
  %v237 = vpop.f32.mrf.mxu0
  %v238 = vadd.f32 0.0, %v237
  %v239 = vpop.f32.mrf.mxu0
  %240 = vmatprep.mubr.f32.mxu0 0.0
  %241 = vmatmul.mubr.f32.gmra.mxu0 %v144
  %v242 = vpop.f32.mrf.mxu0
  %v243 = vadd.f32 0.0, %v242
  %v244 = vpop.f32.mrf.mxu0
  %245 = vmatprep.mubr.f32.mxu0 0.0
  %246 = vmatmul.mubr.f32.gmra.mxu0 %v147
  %v247 = vpop.f32.mrf.mxu0
  %v248 = vadd.f32 0.0, %v247
  %v249 = vpop.f32.mrf.mxu0
  %250 = vdwg.mxu0
  %v251 = vmul.f32 %v136, %v136
  %v252 = vmul.f32 %v139, %v139
  %v253 = vmul.f32 %v144, %v144
  %v254 = vmul.f32 %v147, %v147
  %255 = vmatprep.subr.mxu0 0.0
  %256 = vmatpush1.msra.mxu0 %v165
  %257 = vmatprep.subr.mxu0 0.0
  %258 = vmatpush1.msra.mxu0 %v164
  %259 = vmatprep.subr.mxu0 0.0
  %260 = vmatpush1.msra.mxu0 %v163
  %261 = vmatprep.subr.mxu0 0.0
  %262 = vmatpush1.msra.mxu0 %v162
  %263 = vmatprep.subr.mxu0 0.0
  %264 = vmatpush1.msra.mxu0 %v161
  %265 = vmatprep.subr.mxu0 0.0
  %266 = vmatpush1.msra.mxu0 %v160
  %267 = vmatprep.subr.mxu0 0.0
  %268 = vmatpush1.msra.mxu0 %v159
  %269 = vmatprep.subr.mxu0 0.0
  %270 = vmatpush1.msra.mxu0 %v158
  %271 = vmatprep.subr.mxu0 0.0
  %272 = vmatpush1.msra.mxu0 %v157
  %273 = vmatprep.subr.mxu0 0.0
  %274 = vmatpush1.msra.mxu0 %v156
  %275 = vmatprep.subr.mxu0 0.0
  %276 = vmatpush1.msra.mxu0 %v155
  %277 = vmatprep.subr.mxu0 0.0
  %278 = vmatpush1.msra.mxu0 %v154
  %279 = vmatprep.subr.mxu0 0.0
  %280 = vmatpush1.msra.mxu0 %v153
  %281 = vmatprep.subr.mxu0 0.0
  %282 = vmatpush1.msra.mxu0 %v152
  %283 = vmatprep.subr.mxu0 0.0
  %284 = vmatpush1.msra.mxu0 %v151
  %285 = vmatprep.subr.mxu0 0.0
  %286 = vmatpush1.msra.mxu0 %v150
  %287 = vmatprep.subr.mxu0 0.0
  %288 = vmatpush2.msra.mxu0 0.0
  %289 = vmatprep.subr.mxu0 0.0
  %290 = vmatpush2.msra.mxu0 0.0
  %291 = vmatprep.subr.mxu0 0.0
  %292 = vmatpush2.msra.mxu0 0.0
  %293 = vmatprep.subr.mxu0 0.0
  %294 = vmatpush2.msra.mxu0 0.0
  %295 = vmatprep.subr.mxu0 0.0
  %296 = vmatpush2.msra.mxu0 0.0
  %297 = vmatprep.subr.mxu0 0.0
  %298 = vmatpush2.msra.mxu0 0.0
  %299 = vmatprep.subr.mxu0 0.0
  %300 = vmatpush2.msra.mxu0 0.0
  %301 = vmatprep.subr.mxu0 0.0
  %302 = vmatpush2.msra.mxu0 0.0
  %303 = vmatprep.subr.mxu0 0.0
  %304 = vmatpush2.msra.mxu0 0.0
  %305 = vmatprep.subr.mxu0 0.0
  %306 = vmatpush2.msra.mxu0 0.0
  %307 = vmatprep.subr.mxu0 0.0
  %308 = vmatpush2.msra.mxu0 0.0
  %309 = vmatprep.subr.mxu0 0.0
  %310 = vmatpush2.msra.mxu0 0.0
  %311 = vmatprep.subr.mxu0 0.0
  %312 = vmatpush2.msra.mxu0 0.0
  %313 = vmatprep.subr.mxu0 0.0
  %314 = vmatpush2.msra.mxu0 0.0
  %315 = vmatprep.subr.mxu0 0.0
  %316 = vmatpush2.msra.mxu0 0.0
  %317 = vmatprep.subr.mxu0 0.0
  %318 = vmatpush2.msra.mxu0 0.0
  %319 = vmatprep.mubr.f32.mxu0 0.0
  %320 = vmatmul.mubr.f32.gmra.mxu0 %v251
  %v321 = vpop.f32.mrf.mxu0
  %v322 = vadd.f32 0.0, %v321
  %v323 = vpop.f32.mrf.mxu0
  %324 = vmatprep.mubr.f32.mxu0 0.0
  %325 = vmatmul.mubr.f32.gmra.mxu0 %v252
  %v326 = vpop.f32.mrf.mxu0
  %v327 = vadd.f32 0.0, %v326
  %v328 = vpop.f32.mrf.mxu0
  %329 = vmatprep.mubr.f32.mxu0 0.0
  %330 = vmatmul.mubr.f32.gmra.mxu0 %v253
  %v331 = vpop.f32.mrf.mxu0
  %v332 = vadd.f32 0.0, %v331
  %v333 = vpop.f32.mrf.mxu0
  %334 = vmatprep.mubr.f32.mxu0 0.0
  %335 = vmatmul.mubr.f32.gmra.mxu0 %v254
  %v336 = vpop.f32.mrf.mxu0
  %v337 = vadd.f32 0.0, %v336
  %v338 = vpop.f32.mrf.mxu0
  %339 = vdwg.mxu0
  %v340 = vadd.f32 %v233, %v238
  %v341 = vadd.f32 %v340, %v243
  %v342 = vadd.f32 %v341, %v248
  %v343 = vrot.slane %v342, 4
  %v344 = vadd.f32 %v342, %v343
  %v345 = vrot.slane %v344, 2
  %v346 = vadd.f32 %v344, %v345
  %v347 = vrot.slane %v346, 1
  %v348 = vadd.f32 %v346, %v347
  %v349 = vmul.f32 %v348, 0.0078125
  %v350 = vadd.f32 %v322, %v327
  %v351 = vadd.f32 %v350, %v332
  %v352 = vadd.f32 %v351, %v337
  %v353 = vrot.slane %v352, 4
  %v354 = vadd.f32 %v352, %v353
  %v355 = vrot.slane %v354, 2
  %v356 = vadd.f32 %v354, %v355
  %v357 = vrot.slane %v356, 1
  %v358 = vadd.f32 %v356, %v357
  %v359 = vmul.f32 %v358, 0.0078125
  %v360 = vmul.f32 %v349, %v349
  %v361 = vsub.f32 %v359, %v360
  %v362 = vld [vmem:[%s3] sm:$0x1]
  %v363 = vadd.f32 %v361, 1e-05
  %v364 = vrsqrt.pop %v363
  %v365 = vmul.f32 %v362, %v364
  %v366 = vld [vmem:[%s4] sm:$0x1]
  %v367 = vmul.f32 %v349, %v365
  %v368 = vsub.f32 %v366, %v367
  %v370 = vlaneseq
  %v371 = vshrl.u32 %v370, 7
  %v372 = vsub.s32 0, %v371
  %v373 = vrot.slane %v365, %v372
  %v375 = vmul.f32 %v136, %v373
  %v376 = vmul.f32 %v139, %v373
  %v377 = vmul.f32 %v144, %v373
  %v378 = vmul.f32 %v147, %v373
  %v380 = vlaneseq
  %v381 = vshrl.u32 %v380, 7
  %v382 = vsub.s32 0, %v381
  %v383 = vrot.slane %v368, %v382
  %v385 = vadd.f32 %v375, %v383
  %v386 = vadd.f32 %v376, %v383
  %v387 = vadd.f32 %v377, %v383
  %v388 = vadd.f32 %v378, %v383
  %v389 = vmax.f32 %v385, 0.0
  %v390 = vmax.f32 %v386, 0.0
  %v391 = vmax.f32 %v387, 0.0
  %v392 = vmax.f32 %v388, 0.0
  %v393 = vpack.c.bf16 %v390, %v389
  %v394 = vpack.c.bf16 %v392, %v391
  %v397 = vunpack.c.l.b16 %v393
  %v398 = vunpack.c.h.b16 %v393
  %v399 = vunpack.c.l.b16 %v394
  %v400 = vunpack.c.h.b16 %v394
  %v401 = vpack.c.b16 %v397, %v397
  %v402 = vpack.c.b16 %v398, %v398
  %v403 = vpack.c.b16 %v399, %v399
  %v404 = vpack.c.b16 %v400, %v400
  %409 = vst [vmem:[%s5] sm:$0xf] %v401
  %410 = vst [vmem:[%s5 + $0x4] sm:$0xf] %v402
  %411 = vst [vmem:[%s5 + $0x8] sm:$0xf] %v403
  %412 = vst [vmem:[%s5 + $0xc] sm:$0xf] %v404
  // Predicated region
  $region22: #{unet_forward.8} parent=0 // pred_check
    _
  $region23: #{unet_forward.8} parent=0 // pred_check_branch
    %414 = sbr.rel (0) target = $region25
  $region24: #{unet_forward.8} parent=0 // pred_region
    _
  $region25: #{unet_forward.8} parent=0 // pred_fallthru
    _
  // Predicated region
  $region26: #{unet_forward.8} parent=0 // pred_check
    _
  $region27: #{unet_forward.8} parent=0 // pred_check_branch
    %416 = sbr.rel (0) target = $region29
  $region28: #{unet_forward.8} parent=0 // pred_region
    _
  $region29: #{unet_forward.8} parent=0 // pred_fallthru
    _

// kernel: tile.48
$region0: #{tile.48}
  #allocation0 [shape = 's32[1]{0}', space=sflag, size = 0x4, scoped, tag = 'scoped memory for tile.48']
  %s0 = inlined_call_operand.vmem [shape: f32[8,8], index: 0, kind: input, shape index: {}]
  %s1 = inlined_call_operand.vmem [shape: f32[4,8,4,8], index: 1, kind: output, shape index: {}]
  // Predicated region
  $region2: #{tile.48} parent=0 // pred_check
    _
  $region3: #{tile.48} parent=0 // pred_check_branch
    %3 = sbr.rel (0) target = $region5
  $region4: #{tile.48} parent=0 // pred_region
    _
  $region5: #{tile.48} parent=0 // pred_fallthru
    _
  %v4 = vld [vmem:[%s0] ss:$0 sm:$0xff]
  %5 = vst [vmem:[%s1] sm:$0xf] %v4
  %s6 = scalar_lea.vmem %s1, 32
  %7 = vst [vmem:[%s6] sm:$0xf] %v4
  %s8 = scalar_lea.vmem %s1, 64
  %9 = vst [vmem:[%s8] sm:$0xf] %v4
  %s10 = scalar_lea.vmem %s1, 96
  %11 = vst [vmem:[%s10] sm:$0xf] %v4
  %s12 = scalar_lea.vmem %s0, 1
  %v13 = vld [vmem:[%s12] ss:$0 sm:$0xff]
  %s14 = scalar_lea.vmem %s1, 4
  %15 = vst [vmem:[%s14] sm:$0xf] %v13
  %s16 = scalar_lea.vmem %s1, 36
  %17 = vst [vmem:[%s16] sm:$0xf] %v13
  %s18 = scalar_lea.vmem %s1, 68
  %19 = vst [vmem:[%s18] sm:$0xf] %v13
  %s20 = scalar_lea.vmem %s1, 100
  %21 = vst [vmem:[%s20] sm:$0xf] %v13
  %s22 = scalar_lea.vmem %s0, 2
  %v23 = vld [vmem:[%s22] ss:$0 sm:$0xff]
  %s24 = scalar_lea.vmem %s1, 8
  %25 = vst [vmem:[%s24] sm:$0xf] %v23
  %s26 = scalar_lea.vmem %s1, 40
  %27 = vst [vmem:[%s26] sm:$0xf] %v23
  %s28 = scalar_lea.vmem %s1, 72
  %29 = vst [vmem:[%s28] sm:$0xf] %v23
  %s30 = scalar_lea.vmem %s1, 104
  %31 = vst [vmem:[%s30] sm:$0xf] %v23
  %s32 = scalar_lea.vmem %s0, 3
  %v33 = vld [vmem:[%s32] ss:$0 sm:$0xff]
  %s34 = scalar_lea.vmem %s1, 12
  %35 = vst [vmem:[%s34] sm:$0xf] %v33
  %s36 = scalar_lea.vmem %s1, 44
  %37 = vst [vmem:[%s36] sm:$0xf] %v33
  %s38 = scalar_lea.vmem %s1, 76
  %39 = vst [vmem:[%s38] sm:$0xf] %v33
  %s40 = scalar_lea.vmem %s1, 108
  %41 = vst [vmem:[%s40] sm:$0xf] %v33
  %s42 = scalar_lea.vmem %s0, 4
  %v43 = vld [vmem:[%s42] ss:$0 sm:$0xff]
  %s44 = scalar_lea.vmem %s1, 16
  %45 = vst [vmem:[%s44] sm:$0xf] %v43
  %s46 = scalar_lea.vmem %s1, 48
  %47 = vst [vmem:[%s46] sm:$0xf] %v43
  %s48 = scalar_lea.vmem %s1, 80
  %49 = vst [vmem:[%s48] sm:$0xf] %v43
  %s50 = scalar_lea.vmem %s1, 112
  %51 = vst [vmem:[%s50] sm:$0xf] %v43
  %s52 = scalar_lea.vmem %s0, 5
  %v53 = vld [vmem:[%s52] ss:$0 sm:$0xff]
  %s54 = scalar_lea.vmem %s1, 20
  %55 = vst [vmem:[%s54] sm:$0xf] %v53
  %s56 = scalar_lea.vmem %s1, 52
  %57 = vst [vmem:[%s56] sm:$0xf] %v53
  %s58 = scalar_lea.vmem %s1, 84
  %59 = vst [vmem:[%s58] sm:$0xf] %v53
  %s60 = scalar_lea.vmem %s1, 116
  %61 = vst [vmem:[%s60] sm:$0xf] %v53
  %s62 = scalar_lea.vmem %s0, 6
  %v63 = vld [vmem:[%s62] ss:$0 sm:$0xff]
  %s64 = scalar_lea.vmem %s1, 24
  %65 = vst [vmem:[%s64] sm:$0xf] %v63
  %s66 = scalar_lea.vmem %s1, 56
  %67 = vst [vmem:[%s66] sm:$0xf] %v63
  %s68 = scalar_lea.vmem %s1, 88
  %69 = vst [vmem:[%s68] sm:$0xf] %v63
  %s70 = scalar_lea.vmem %s1, 120
  %71 = vst [vmem:[%s70] sm:$0xf] %v63
  %s72 = scalar_lea.vmem %s0, 7
  %v73 = vld [vmem:[%s72] ss:$0 sm:$0xff]
  %s74 = scalar_lea.vmem %s1, 28
  %75 = vst [vmem:[%s74] sm:$0xf] %v73
  %s76 = scalar_lea.vmem %s1, 60
  %77 = vst [vmem:[%s76] sm:$0xf] %v73
  %s78 = scalar_lea.vmem %s1, 92
  %79 = vst [vmem:[%s78] sm:$0xf] %v73
  %s80 = scalar_lea.vmem %s1, 124
  %81 = vst [vmem:[%s80] sm:$0xf] %v73

// kernel: tile.49
$region0: #{tile.49}
  %s0 = inlined_call_operand.vmem [shape: f32[4,8,4,8], index: 0, kind: input, shape index: {}]
  %s1 = inlined_call_operand.vmem [shape: f32[32,32], index: 1, kind: output, shape index: {}]
  $region1: #{tile.49} parent=0
    #allocation0 [shape = 'u8[131072]{0}', space=vmem, size = 0x20000, scoped, tag = 'scoped mem for input reshape']
    %s3 = sshll.u32 1, 4
    %s4 = ssub.s32 %s3, 1
    %s5 = smul.addr 4, 31
    %s6 = scalar_lea.vmem %s0, %s5
    %v7 = vld [vmem:[%s6] sm:%s4]
    %s8 = scalar_lea.vmem [#allocation0], 248
    %9 = vst [vmem:[%s8] sm:%s4] %v7
    %s10 = smul.addr 4, 30
    %s11 = scalar_lea.vmem %s0, %s10
    %v12 = vld [vmem:[%s11] sm:%s4]
    %s13 = scalar_lea.vmem [#allocation0], 240
    %14 = vst [vmem:[%s13] sm:%s4] %v12
    %s15 = smul.addr 4, 29
    %s16 = scalar_lea.vmem %s0, %s15
    %v17 = vld [vmem:[%s16] sm:%s4]
    %s18 = scalar_lea.vmem [#allocation0], 232
    %19 = vst [vmem:[%s18] sm:%s4] %v17
    %s20 = smul.addr 4, 28
    %s21 = scalar_lea.vmem %s0, %s20
    %v22 = vld [vmem:[%s21] sm:%s4]
    %s23 = scalar_lea.vmem [#allocation0], 224
    %24 = vst [vmem:[%s23] sm:%s4] %v22
    %s25 = smul.addr 4, 27
    %s26 = scalar_lea.vmem %s0, %s25
    %v27 = vld [vmem:[%s26] sm:%s4]
    %s28 = scalar_lea.vmem [#allocation0], 216
    %29 = vst [vmem:[%s28] sm:%s4] %v27
    %s30 = smul.addr 4, 26
    %s31 = scalar_lea.vmem %s0, %s30
    %v32 = vld [vmem:[%s31] sm:%s4]
    %s33 = scalar_lea.vmem [#allocation0], 208
    %34 = vst [vmem:[%s33] sm:%s4] %v32
    %s35 = smul.addr 4, 25
    %s36 = scalar_lea.vmem %s0, %s35
    %v37 = vld [vmem:[%s36] sm:%s4]
    %s38 = scalar_lea.vmem [#allocation0], 200
    %39 = vst [vmem:[%s38] sm:%s4] %v37
    %s40 = smul.addr 4, 24
    %s41 = scalar_lea.vmem %s0, %s40
    %v42 = vld [vmem:[%s41] sm:%s4]
    %s43 = scalar_lea.vmem [#allocation0], 192
    %44 = vst [vmem:[%s43] sm:%s4] %v42
    %s45 = smul.addr 4, 23
    %s46 = scalar_lea.vmem %s0, %s45
    %v47 = vld [vmem:[%s46] sm:%s4]
    %s48 = scalar_lea.vmem [#allocation0], 184
    %49 = vst [vmem:[%s48] sm:%s4] %v47
    %s50 = smul.addr 4, 22
    %s51 = scalar_lea.vmem %s0, %s50
    %v52 = vld [vmem:[%s51] sm:%s4]
    %s53 = scalar_lea.vmem [#allocation0], 176
    %54 = vst [vmem:[%s53] sm:%s4] %v52
    %s55 = smul.addr 4, 21
    %s56 = scalar_lea.vmem %s0, %s55
    %v57 = vld [vmem:[%s56] sm:%s4]
    %s58 = scalar_lea.vmem [#allocation0], 168
    %59 = vst [vmem:[%s58] sm:%s4] %v57
    %s60 = smul.addr 4, 20
    %s61 = scalar_lea.vmem %s0, %s60
    %v62 = vld [vmem:[%s61] sm:%s4]
    %s63 = scalar_lea.vmem [#allocation0], 160
    %64 = vst [vmem:[%s63] sm:%s4] %v62
    %s65 = smul.addr 4, 19
    %s66 = scalar_lea.vmem %s0, %s65
    %v67 = vld [vmem:[%s66] sm:%s4]
    %s68 = scalar_lea.vmem [#allocation0], 152
    %69 = vst [vmem:[%s68] sm:%s4] %v67
    %s70 = smul.addr 4, 18
    %s71 = scalar_lea.vmem %s0, %s70
    %v72 = vld [vmem:[%s71] sm:%s4]
    %s73 = scalar_lea.vmem [#allocation0], 144
    %74 = vst [vmem:[%s73] sm:%s4] %v72
    %s75 = smul.addr 4, 17
    %s76 = scalar_lea.vmem %s0, %s75
    %v77 = vld [vmem:[%s76] sm:%s4]
    %s78 = scalar_lea.vmem [#allocation0], 136
    %79 = vst [vmem:[%s78] sm:%s4] %v77
    %s80 = smul.addr 4, 16
    %s81 = scalar_lea.vmem %s0, %s80
    %v82 = vld [vmem:[%s81] sm:%s4]
    %s83 = scalar_lea.vmem [#allocation0], 128
    %84 = vst [vmem:[%s83] sm:%s4] %v82
    %s85 = smul.addr 4, 15
    %s86 = scalar_lea.vmem %s0, %s85
    %v87 = vld [vmem:[%s86] sm:%s4]
    %s88 = scalar_lea.vmem [#allocation0], 120
    %89 = vst [vmem:[%s88] sm:%s4] %v87
    %s90 = smul.addr 4, 14
    %s91 = scalar_lea.vmem %s0, %s90
    %v92 = vld [vmem:[%s91] sm:%s4]
    %s93 = scalar_lea.vmem [#allocation0], 112
    %94 = vst [vmem:[%s93] sm:%s4] %v92
    %s95 = smul.addr 4, 13
    %s96 = scalar_lea.vmem %s0, %s95
    %v97 = vld [vmem:[%s96] sm:%s4]
    %s98 = scalar_lea.vmem [#allocation0], 104
    %99 = vst [vmem:[%s98] sm:%s4] %v97
    %s100 = smul.addr 4, 12
    %s101 = scalar_lea.vmem %s0, %s100
    %v102 = vld [vmem:[%s101] sm:%s4]
    %s103 = scalar_lea.vmem [#allocation0], 96
    %104 = vst [vmem:[%s103] sm:%s4] %v102
    %s105 = smul.addr 4, 11
    %s106 = scalar_lea.vmem %s0, %s105
    %v107 = vld [vmem:[%s106] sm:%s4]
    %s108 = scalar_lea.vmem [#allocation0], 88
    %109 = vst [vmem:[%s108] sm:%s4] %v107
    %s110 = smul.addr 4, 10
    %s111 = scalar_lea.vmem %s0, %s110
    %v112 = vld [vmem:[%s111] sm:%s4]
    %s113 = scalar_lea.vmem [#allocation0], 80
    %114 = vst [vmem:[%s113] sm:%s4] %v112
    %s115 = smul.addr 4, 9
    %s116 = scalar_lea.vmem %s0, %s115
    %v117 = vld [vmem:[%s116] sm:%s4]
    %s118 = scalar_lea.vmem [#allocation0], 72
    %119 = vst [vmem:[%s118] sm:%s4] %v117
    %s120 = smul.addr 4, 8
    %s121 = scalar_lea.vmem %s0, %s120
    %v122 = vld [vmem:[%s121] sm:%s4]
    %s123 = scalar_lea.vmem [#allocation0], 64
    %124 = vst [vmem:[%s123] sm:%s4] %v122
    %s125 = smul.addr 4, 7
    %s126 = scalar_lea.vmem %s0, %s125
    %v127 = vld [vmem:[%s126] sm:%s4]
    %s128 = scalar_lea.vmem [#allocation0], 56
    %129 = vst [vmem:[%s128] sm:%s4] %v127
    %s130 = smul.addr 4, 6
    %s131 = scalar_lea.vmem %s0, %s130
    %v132 = vld [vmem:[%s131] sm:%s4]
    %s133 = scalar_lea.vmem [#allocation0], 48
    %134 = vst [vmem:[%s133] sm:%s4] %v132
    %s135 = smul.addr 4, 5
    %s136 = scalar_lea.vmem %s0, %s135
    %v137 = vld [vmem:[%s136] sm:%s4]
    %s138 = scalar_lea.vmem [#allocation0], 40
    %139 = vst [vmem:[%s138] sm:%s4] %v137
    %s140 = smul.addr 4, 4
    %s141 = scalar_lea.vmem %s0, %s140
    %v142 = vld [vmem:[%s141] sm:%s4]
    %s143 = scalar_lea.vmem [#allocation0], 32
    %144 = vst [vmem:[%s143] sm:%s4] %v142
    %s145 = smul.addr 4, 3
    %s146 = scalar_lea.vmem %s0, %s145
    %v147 = vld [vmem:[%s146] sm:%s4]
    %s148 = scalar_lea.vmem [#allocation0], 24
    %149 = vst [vmem:[%s148] sm:%s4] %v147
    %s150 = smul.addr 4, 2
    %s151 = scalar_lea.vmem %s0, %s150
    %v152 = vld [vmem:[%s151] sm:%s4]
    %s153 = scalar_lea.vmem [#allocation0], 16
    %154 = vst [vmem:[%s153] sm:%s4] %v152
    %s155 = scalar_lea.vmem %s0, 4
    %v156 = vld [vmem:[%s155] sm:%s4]
    %s157 = scalar_lea.vmem [#allocation0], 8
    %158 = vst [vmem:[%s157] sm:%s4] %v156
    %v159 = vld [vmem:[%s0] sm:%s4]
    %160 = vst [vmem:[#allocation0] sm:%s4] %v159
    %v161 = vld [vmem:[#allocation0] ss:$8 sm:$0xf]
    %v162 = vld [vmem:[#allocation0] ss:$8 sm:$0xf0]
    %vm163 = vcmask 1047556
    %v164 = vsel %vm163, %v162, %v161
    %vm165 = vcmask 64512
    %166 = vst.msk [vmem:[%s1] sm:$0xff] %vm165, %v164
    %s167 = scalar_lea.vmem [#allocation0], 64
    %v168 = vld [vmem:[%s167] ss:$8 sm:$0xf]
    %s169 = scalar_lea.vmem [#allocation0], 64
    %v170 = vld [vmem:[%s169] ss:$8 sm:$0xf0]
    %vm171 = vcmask 1047556
    %v172 = vsel %vm171, %v170, %v168
    %vm173 = vcmask 64512
    %s174 = scalar_lea.vmem %s1, 8
    %175 = vst.msk [vmem:[%s174] sm:$0xff] %vm173, %v172
    %s176 = scalar_lea.vmem [#allocation0], 128
    %v177 = vld [vmem:[%s176] ss:$8 sm:$0xf]
    %s178 = scalar_lea.vmem [#allocation0], 128
    %v179 = vld [vmem:[%s178] ss:$8 sm:$0xf0]
    %vm180 = vcmask 1047556
    %v181 = vsel %vm180, %v179, %v177
    %vm182 = vcmask 64512
    %s183 = scalar_lea.vmem %s1, 16
    %184 = vst.msk [vmem:[%s183] sm:$0xff] %vm182, %v181
    %s185 = scalar_lea.vmem [#allocation0], 192
    %v186 = vld [vmem:[%s185] ss:$8 sm:$0xf]
    %s187 = scalar_lea.vmem [#allocation0], 192
    %v188 = vld [vmem:[%s187] ss:$8 sm:$0xf0]
    %vm189 = vcmask 1047556
    %v190 = vsel %vm189, %v188, %v186
    %vm191 = vcmask 64512
    %s192 = scalar_lea.vmem %s1, 24
    %193 = vst.msk [vmem:[%s192] sm:$0xff] %vm191, %v190
    %s194 = scalar_lea.vmem [#allocation0], 3
    %v195 = vld [vmem:[%s194] ss:$8 sm:$0xf]
    %s196 = scalar_lea.vmem [#allocation0], 3
    %v197 = vld [vmem:[%s196] ss:$8 sm:$0xf0]
    %vm198 = vcmask 1047556
    %v199 = vsel %vm198, %v197, %v195
    %200 = vrot.lane.b32.xlu0 %v199, 24
    %v201 = vpop.permute.xlu0 %200
    %vm202 = vcmask 261312
    %203 = vst.msk [vmem:[%s1] sm:$0xff] %vm202, %v201
    %s204 = scalar_lea.vmem [#allocation0], 67
    %v205 = vld [vmem:[%s204] ss:$8 sm:$0xf]
    %s206 = scalar_lea.vmem [#allocation0], 67
    %v207 = vld [vmem:[%s206] ss:$8 sm:$0xf0]
    %vm208 = vcmask 1047556
    %v209 = vsel %vm208, %v207, %v205
    %210 = vrot.lane.b32.xlu0 %v209, 24
    %v211 = vpop.permute.xlu0 %210
    %vm212 = vcmask 261312
    %s213 = scalar_lea.vmem %s1, 8
    %214 = vst.msk [vmem:[%s213] sm:$0xff] %vm212, %v211
    %s215 = scalar_lea.vmem [#allocation0], 131
    %v216 = vld [vmem:[%s215] ss:$8 sm:$0xf]
    %s217 = scalar_lea.vmem [#allocation0], 131
    %v218 = vld [vmem:[%s217] ss:$8 sm:$0xf0]
    %vm219 = vcmask 1047556
    %v220 = vsel %vm219, %v218, %v216
    %221 = vrot.lane.b32.xlu0 %v220, 24
    %v222 = vpop.permute.xlu0 %221
    %vm223 = vcmask 261312
    %s224 = scalar_lea.vmem %s1, 16
    %225 = vst.msk [vmem:[%s224] sm:$0xff] %vm223, %v222
    %s226 = scalar_lea.vmem [#allocation0], 195
    %v227 = vld [vmem:[%s226] ss:$8 sm:$0xf]
    %s228 = scalar_lea.vmem [#allocation0], 195
    %v229 = vld [vmem:[%s228] ss:$8 sm:$0xf0]
    %vm230 = vcmask 1047556
    %v231 = vsel %vm230, %v229, %v227
    %232 = vrot.lane.b32.xlu0 %v231, 24
    %v233 = vpop.permute.xlu0 %232
    %vm234 = vcmask 261312
    %s235 = scalar_lea.vmem %s1, 24
    %236 = vst.msk [vmem:[%s235] sm:$0xff] %vm234, %v233
    %s237 = scalar_lea.vmem [#allocation0], 2
    %v238 = vld [vmem:[%s237] ss:$8 sm:$0xf]
    %s239 = scalar_lea.vmem [#allocation0], 2
    %v240 = vld [vmem:[%s239] ss:$8 sm:$0xf0]
    %vm241 = vcmask 1047556
    %v242 = vsel %vm241, %v240, %v238
    %243 = vrot.lane.b32.xlu0 %v242, 16
    %v244 = vpop.permute.xlu0 %243
    %vm245 = vcmask 195712
    %246 = vst.msk [vmem:[%s1] sm:$0xff] %vm245, %v244
    %s247 = scalar_lea.vmem [#allocation0], 66
    %v248 = vld [vmem:[%s247] ss:$8 sm:$0xf]
    %s249 = scalar_lea.vmem [#allocation0], 66
    %v250 = vld [vmem:[%s249] ss:$8 sm:$0xf0]
    %vm251 = vcmask 1047556
    %v252 = vsel %vm251, %v250, %v248
    %253 = vrot.lane.b32.xlu0 %v252, 16
    %v254 = vpop.permute.xlu0 %253
    %vm255 = vcmask 195712
    %s256 = scalar_lea.vmem %s1, 8
    %257 = vst.msk [vmem:[%s256] sm:$0xff] %vm255, %v254
    %s258 = scalar_lea.vmem [#allocation0], 130
    %v259 = vld [vmem:[%s258] ss:$8 sm:$0xf]
    %s260 = scalar_lea.vmem [#allocation0], 130
    %v261 = vld [vmem:[%s260] ss:$8 sm:$0xf0]
    %vm262 = vcmask 1047556
    %v263 = vsel %vm262, %v261, %v259
    %264 = vrot.lane.b32.xlu0 %v263, 16
    %v265 = vpop.permute.xlu0 %264
    %vm266 = vcmask 195712
    %s267 = scalar_lea.vmem %s1, 16
    %268 = vst.msk [vmem:[%s267] sm:$0xff] %vm266, %v265
    %s269 = scalar_lea.vmem [#allocation0], 194
    %v270 = vld [vmem:[%s269] ss:$8 sm:$0xf]
    %s271 = scalar_lea.vmem [#allocation0], 194
    %v272 = vld [vmem:[%s271] ss:$8 sm:$0xf0]
    %vm273 = vcmask 1047556
    %v274 = vsel %vm273, %v272, %v270
    %275 = vrot.lane.b32.xlu0 %v274, 16
    %v276 = vpop.permute.xlu0 %275
    %vm277 = vcmask 195712
    %s278 = scalar_lea.vmem %s1, 24
    %279 = vst.msk [vmem:[%s278] sm:$0xff] %vm277, %v276
    %s280 = scalar_lea.vmem [#allocation0], 1
    %v281 = vld [vmem:[%s280] ss:$8 sm:$0xf]
    %s282 = scalar_lea.vmem [#allocation0], 1
    %v283 = vld [vmem:[%s282] ss:$8 sm:$0xf0]
    %vm284 = vcmask 1047556
    %v285 = vsel %vm284, %v283, %v281
    %286 = vrot.lane.b32.xlu0 %v285, 8
    %v287 = vpop.permute.xlu0 %286
    %vm288 = vcmask 130112
    %289 = vst.msk [vmem:[%s1] sm:$0xff] %vm288, %v287
    %s290 = scalar_lea.vmem [#allocation0], 65
    %v291 = vld [vmem:[%s290] ss:$8 sm:$0xf]
    %s292 = scalar_lea.vmem [#allocation0], 65
    %v293 = vld [vmem:[%s292] ss:$8 sm:$0xf0]
    %vm294 = vcmask 1047556
    %v295 = vsel %vm294, %v293, %v291
    %296 = vrot.lane.b32.xlu0 %v295, 8
    %v297 = vpop.permute.xlu0 %296
    %vm298 = vcmask 130112
    %s299 = scalar_lea.vmem %s1, 8
    %300 = vst.msk [vmem:[%s299] sm:$0xff] %vm298, %v297
    %s301 = scalar_lea.vmem [#allocation0], 129
    %v302 = vld [vmem:[%s301] ss:$8 sm:$0xf]
    %s303 = scalar_lea.vmem [#allocation0], 129
    %v304 = vld [vmem:[%s303] ss:$8 sm:$0xf0]
    %vm305 = vcmask 1047556
    %v306 = vsel %vm305, %v304, %v302
    %307 = vrot.lane.b32.xlu0 %v306, 8
    %v308 = vpop.permute.xlu0 %307
    %vm309 = vcmask 130112
    %s310 = scalar_lea.vmem %s1, 16
    %311 = vst.msk [vmem:[%s310] sm:$0xff] %vm309, %v308
    %s312 = scalar_lea.vmem [#allocation0], 193
    %v313 = vld [vmem:[%s312] ss:$8 sm:$0xf]
    %s314 = scalar_lea.vmem [#allocation0], 193
    %v315 = vld [vmem:[%s314] ss:$8 sm:$0xf0]
    %vm316 = vcmask 1047556
    %v317 = vsel %vm316, %v315, %v313
    %318 = vrot.lane.b32.xlu0 %v317, 8
    %v319 = vpop.permute.xlu0 %318
    %vm320 = vcmask 130112
    %s321 = scalar_lea.vmem %s1, 24
    %322 = vst.msk [vmem:[%s321] sm:$0xff] %vm320, %v319

// kernel: unet_forward.9
$region0: #{unet_forward.9}
  #allocation0 [shape = 'u32[]', space=smem, size = 0x4, offset = 0x4, fixed_abs, tag = 'smem constant byte address 0x4 - core index']
  #allocation1 [shape = 'u32[144,128]{1,0:T(1,128)}', space=vmem, size = 0x12000, scoped, tag = 'internal scratch']
  %s0 = inlined_call_operand.vmem [shape: bf16[128,128], index: 0, kind: input, shape index: {}]
  %s1 = inlined_call_operand.vmem [shape: bf16[128,128], index: 1, kind: input, shape index: {}]
  %s2 = inlined_call_operand.vmem [shape: f32[128,128], index: 2, kind: input, shape index: {}]
  %s3 = inlined_call_operand.vmem [shape: f32[1,128], index: 3, kind: input, shape index: {}]
  %s4 = inlined_call_operand.vmem [shape: f32[1,128], index: 4, kind: input, shape index: {}]
  %s5 = inlined_call_operand.vmem [shape: f32[128,128], index: 5, kind: output, shape index: {}]
  %s6 = sld [smem:[#allocation0]]
  $region30: #{unet_forward.9} parent=0
    _
  %s8 = ssub.s32 1, %s6
  %s9 = scalar_select 0, %s8, %s6
  // Predicated region
  $region2: #{unet_forward.9} parent=0 // pred_check
    _
  $region3: #{unet_forward.9} parent=0 // pred_check_branch
    %11 = sbr.rel (0) target = $region5
  $region4: #{unet_forward.9} parent=0 // pred_region
    _
  $region5: #{unet_forward.9} parent=0 // pred_fallthru
    _
  // Predicated region
  $region6: #{unet_forward.9} parent=0 // pred_check
    _
  $region7: #{unet_forward.9} parent=0 // pred_check_branch
    %13 = sbr.rel (0) target = $region9
  $region8: #{unet_forward.9} parent=0 // pred_region
    _
  $region9: #{unet_forward.9} parent=0 // pred_fallthru
    _
  // Predicated region
  $region10: #{unet_forward.9} parent=0 // pred_check
    _
  $region11: #{unet_forward.9} parent=0 // pred_check_branch
    %15 = sbr.rel (0) target = $region13
  $region12: #{unet_forward.9} parent=0 // pred_region
    _
  $region13: #{unet_forward.9} parent=0 // pred_fallthru
    _
  // Predicated region
  $region14: #{unet_forward.9} parent=0 // pred_check
    _
  $region15: #{unet_forward.9} parent=0 // pred_check_branch
    %17 = sbr.rel (0) target = $region17
  $region16: #{unet_forward.9} parent=0 // pred_region
    _
  $region17: #{unet_forward.9} parent=0 // pred_fallthru
    _
  // Predicated region
  $region18: #{unet_forward.9} parent=0 // pred_check
    _
  $region19: #{unet_forward.9} parent=0 // pred_check_branch
    %19 = sbr.rel (0) target = $region21
  $region20: #{unet_forward.9} parent=0 // pred_region
    _
  $region21: #{unet_forward.9} parent=0 // pred_fallthru
    _
  %v21 = vld [vmem:[%s0] sm:$0xf]
  %v22 = vld [vmem:[%s0 + $0x4] sm:$0xf]
  %v23 = vld [vmem:[%s0 + $0x8] sm:$0xf]
  %v24 = vld [vmem:[%s0 + $0xc] sm:$0xf]
  %v25 = vld [vmem:[%s0 + $0x10] sm:$0xf]
  %v26 = vld [vmem:[%s0 + $0x14] sm:$0xf]
  %v27 = vld [vmem:[%s0 + $0x18] sm:$0xf]
  %v28 = vld [vmem:[%s0 + $0x1c] sm:$0xf]
  %v29 = vld [vmem:[%s0 + $0x20] sm:$0xf]
  %v30 = vld [vmem:[%s0 + $0x24] sm:$0xf]
  %v31 = vld [vmem:[%s0 + $0x28] sm:$0xf]
  %v32 = vld [vmem:[%s0 + $0x2c] sm:$0xf]
  %v33 = vld [vmem:[%s0 + $0x30] sm:$0xf]
  %v34 = vld [vmem:[%s0 + $0x34] sm:$0xf]
  %v35 = vld [vmem:[%s0 + $0x38] sm:$0xf]
  %v36 = vld [vmem:[%s0 + $0x3c] sm:$0xf]
  %v37 = vld [vmem:[%s1] sm:$0xf]
  %v38 = vld [vmem:[%s1 + $0x4] sm:$0xf]
  %v39 = vld [vmem:[%s1 + $0x8] sm:$0xf]
  %v40 = vld [vmem:[%s1 + $0xc] sm:$0xf]
  %v41 = vld [vmem:[%s1 + $0x10] sm:$0xf]
  %v42 = vld [vmem:[%s1 + $0x14] sm:$0xf]
  %v43 = vld [vmem:[%s1 + $0x18] sm:$0xf]
  %v44 = vld [vmem:[%s1 + $0x1c] sm:$0xf]
  %v45 = vld [vmem:[%s1 + $0x20] sm:$0xf]
  %v46 = vld [vmem:[%s1 + $0x24] sm:$0xf]
  %v47 = vld [vmem:[%s1 + $0x28] sm:$0xf]
  %v48 = vld [vmem:[%s1 + $0x2c] sm:$0xf]
  %v49 = vld [vmem:[%s1 + $0x30] sm:$0xf]
  %v50 = vld [vmem:[%s1 + $0x34] sm:$0xf]
  %v51 = vld [vmem:[%s1 + $0x38] sm:$0xf]
  %v52 = vld [vmem:[%s1 + $0x3c] sm:$0xf]
  %v69 = vunpack.c.l.b16 %v21
  %v70 = vunpack.c.l.b16 %v22
  %v71 = vunpack.c.l.b16 %v23
  %v72 = vunpack.c.l.b16 %v24
  %v73 = vunpack.c.l.b16 %v25
  %v74 = vunpack.c.l.b16 %v26
  %v75 = vunpack.c.l.b16 %v27
  %v76 = vunpack.c.l.b16 %v28
  %v77 = vunpack.c.l.b16 %v29
  %v78 = vunpack.c.l.b16 %v30
  %v79 = vunpack.c.l.b16 %v31
  %v80 = vunpack.c.l.b16 %v32
  %v81 = vunpack.c.l.b16 %v33
  %v82 = vunpack.c.l.b16 %v34
  %v83 = vunpack.c.l.b16 %v35
  %v84 = vunpack.c.l.b16 %v36
  %v85 = vpack.c.b16 %v70, %v69
  %v86 = vpack.c.b16 %v72, %v71
  %v87 = vpack.c.b16 %v74, %v73
  %v88 = vpack.c.b16 %v76, %v75
  %v89 = vpack.c.b16 %v78, %v77
  %v90 = vpack.c.b16 %v80, %v79
  %v91 = vpack.c.b16 %v82, %v81
  %v92 = vpack.c.b16 %v84, %v83
  %v117 = vunpack.c.l.b16 %v37
  %v118 = vunpack.c.l.b16 %v38
  %v119 = vunpack.c.l.b16 %v39
  %v120 = vunpack.c.l.b16 %v40
  %v121 = vunpack.c.l.b16 %v41
  %v122 = vunpack.c.l.b16 %v42
  %v123 = vunpack.c.l.b16 %v43
  %v124 = vunpack.c.l.b16 %v44
  %v125 = vunpack.c.l.b16 %v45
  %v126 = vunpack.c.l.b16 %v46
  %v127 = vunpack.c.l.b16 %v47
  %v128 = vunpack.c.l.b16 %v48
  %v129 = vunpack.c.l.b16 %v49
  %v130 = vunpack.c.l.b16 %v50
  %v131 = vunpack.c.l.b16 %v51
  %v132 = vunpack.c.l.b16 %v52
  %v133 = vpack.c.b16 %v118, %v117
  %v134 = vpack.c.b16 %v120, %v119
  %v135 = vpack.c.b16 %v122, %v121
  %v136 = vpack.c.b16 %v124, %v123
  %v137 = vpack.c.b16 %v126, %v125
  %v138 = vpack.c.b16 %v128, %v127
  %v139 = vpack.c.b16 %v130, %v129
  %v140 = vpack.c.b16 %v132, %v131
  %149 = vmatprep.subr.bf16.mxu0 0
  %150 = vmatpush1.bf16.msra.mxu0 %v140
  %151 = vmatprep.subr.bf16.mxu0 0
  %152 = vmatpush1.bf16.msra.mxu0 %v139
  %153 = vmatprep.subr.bf16.mxu0 0
  %154 = vmatpush1.bf16.msra.mxu0 %v138
  %155 = vmatprep.subr.bf16.mxu0 0
  %156 = vmatpush1.bf16.msra.mxu0 %v137
  %157 = vmatprep.subr.bf16.mxu0 0
  %158 = vmatpush1.bf16.msra.mxu0 %v136
  %159 = vmatprep.subr.bf16.mxu0 0
  %160 = vmatpush1.bf16.msra.mxu0 %v135
  %161 = vmatprep.subr.bf16.mxu0 0
  %162 = vmatpush1.bf16.msra.mxu0 %v134
  %163 = vmatprep.subr.bf16.mxu0 0
  %164 = vmatpush1.bf16.msra.mxu0 %v133
  %165 = vmatprep.subr.bf16.mxu0 0
  %166 = vmatpush2.bf16.msra.mxu0 0
  %167 = vmatprep.subr.bf16.mxu0 0
  %168 = vmatpush2.bf16.msra.mxu0 0
  %169 = vmatprep.subr.bf16.mxu0 0
  %170 = vmatpush2.bf16.msra.mxu0 0
  %171 = vmatprep.subr.bf16.mxu0 0
  %172 = vmatpush2.bf16.msra.mxu0 0
  %173 = vmatprep.subr.bf16.mxu0 0
  %174 = vmatpush2.bf16.msra.mxu0 0
  %175 = vmatprep.subr.bf16.mxu0 0
  %176 = vmatpush2.bf16.msra.mxu0 0
  %177 = vmatprep.subr.bf16.mxu0 0
  %178 = vmatpush2.bf16.msra.mxu0 0
  %179 = vmatprep.subr.bf16.mxu0 0
  %180 = vmatpush2.bf16.msra.mxu0 0
  %181 = vmatprep.mubr.bf16.mxu0 0
  %182 = vmatmul.mubr.bf16.gmra.mxu0 %v85
  %v183 = vpop.f32.mrf.mxu0
  %v184 = vadd.f32 0.0, %v183
  %v185 = vpop.f32.mrf.mxu0
  %v186 = vpop.f32.mrf.mxu0
  %v187 = vadd.f32 0.0, %v186
  %v188 = vpop.f32.mrf.mxu0
  %189 = vmatprep.mubr.bf16.mxu0 0
  %190 = vmatmul.mubr.bf16.gmra.mxu0 %v86
  %v191 = vpop.f32.mrf.mxu0
  %v192 = vadd.f32 0.0, %v191
  %v193 = vpop.f32.mrf.mxu0
  %v194 = vpop.f32.mrf.mxu0
  %v195 = vadd.f32 0.0, %v194
  %v196 = vpop.f32.mrf.mxu0
  %197 = vmatprep.mubr.bf16.mxu0 0
  %198 = vmatmul.mubr.bf16.gmra.mxu0 %v87
  %v199 = vpop.f32.mrf.mxu0
  %v200 = vadd.f32 0.0, %v199
  %v201 = vpop.f32.mrf.mxu0
  %v202 = vpop.f32.mrf.mxu0
  %v203 = vadd.f32 0.0, %v202
  %v204 = vpop.f32.mrf.mxu0
  %205 = vmatprep.mubr.bf16.mxu0 0
  %206 = vmatmul.mubr.bf16.gmra.mxu0 %v88
  %v207 = vpop.f32.mrf.mxu0
  %v208 = vadd.f32 0.0, %v207
  %v209 = vpop.f32.mrf.mxu0
  %v210 = vpop.f32.mrf.mxu0
  %v211 = vadd.f32 0.0, %v210
  %v212 = vpop.f32.mrf.mxu0
  %213 = vmatprep.mubr.bf16.mxu0 0
  %214 = vmatmul.mubr.bf16.gmra.mxu0 %v89
  %v215 = vpop.f32.mrf.mxu0
  %v216 = vadd.f32 0.0, %v215
  %v217 = vpop.f32.mrf.mxu0
  %v218 = vpop.f32.mrf.mxu0
  %v219 = vadd.f32 0.0, %v218
  %v220 = vpop.f32.mrf.mxu0
  %221 = vmatprep.mubr.bf16.mxu0 0
  %222 = vmatmul.mubr.bf16.gmra.mxu0 %v90
  %v223 = vpop.f32.mrf.mxu0
  %v224 = vadd.f32 0.0, %v223
  %v225 = vpop.f32.mrf.mxu0
  %v226 = vpop.f32.mrf.mxu0
  %v227 = vadd.f32 0.0, %v226
  %v228 = vpop.f32.mrf.mxu0
  %229 = vmatprep.mubr.bf16.mxu0 0
  %230 = vmatmul.mubr.bf16.gmra.mxu0 %v91
  %v231 = vpop.f32.mrf.mxu0
  %v232 = vadd.f32 0.0, %v231
  %v233 = vpop.f32.mrf.mxu0
  %v234 = vpop.f32.mrf.mxu0
  %v235 = vadd.f32 0.0, %v234
  %v236 = vpop.f32.mrf.mxu0
  %237 = vmatprep.mubr.bf16.mxu0 0
  %238 = vmatmul.mubr.bf16.gmra.mxu0 %v92
  %v239 = vpop.f32.mrf.mxu0
  %v240 = vadd.f32 0.0, %v239
  %v241 = vpop.f32.mrf.mxu0
  %v242 = vpop.f32.mrf.mxu0
  %v243 = vadd.f32 0.0, %v242
  %v244 = vpop.f32.mrf.mxu0
  %245 = vdwg.mxu0
  %v246 = vld [vmem:[%s2] sm:$0xff]
  %v247 = vld [vmem:[%s2 + $0x8] sm:$0xff]
  %v248 = vld [vmem:[%s2 + $0x10] sm:$0xff]
  %v249 = vld [vmem:[%s2 + $0x18] sm:$0xff]
  %v250 = vld [vmem:[%s2 + $0x20] sm:$0xff]
  %v251 = vld [vmem:[%s2 + $0x28] sm:$0xff]
  %v252 = vld [vmem:[%s2 + $0x30] sm:$0xff]
  %v253 = vld [vmem:[%s2 + $0x38] sm:$0xff]
  %v254 = vld [vmem:[%s2 + $0x40] sm:$0xff]
  %v255 = vld [vmem:[%s2 + $0x48] sm:$0xff]
  %v256 = vld [vmem:[%s2 + $0x50] sm:$0xff]
  %v257 = vld [vmem:[%s2 + $0x58] sm:$0xff]
  %v258 = vld [vmem:[%s2 + $0x60] sm:$0xff]
  %v259 = vld [vmem:[%s2 + $0x68] sm:$0xff]
  %v260 = vld [vmem:[%s2 + $0x70] sm:$0xff]
  %v261 = vld [vmem:[%s2 + $0x78] sm:$0xff]
  %262 = vmatprep.subr.mxu0 0.0
  %263 = vmatpush1.msra.mxu0 %v261
  %264 = vmatprep.subr.mxu0 0.0
  %265 = vmatpush1.msra.mxu0 %v260
  %266 = vmatprep.subr.mxu0 0.0
  %267 = vmatpush1.msra.mxu0 %v259
  %268 = vmatprep.subr.mxu0 0.0
  %269 = vmatpush1.msra.mxu0 %v258
  %270 = vmatprep.subr.mxu0 0.0
  %271 = vmatpush1.msra.mxu0 %v257
  %272 = vmatprep.subr.mxu0 0.0
  %273 = vmatpush1.msra.mxu0 %v256
  %274 = vmatprep.subr.mxu0 0.0
  %275 = vmatpush1.msra.mxu0 %v255
  %276 = vmatprep.subr.mxu0 0.0
  %277 = vmatpush1.msra.mxu0 %v254
  %278 = vmatprep.subr.mxu0 0.0
  %279 = vmatpush1.msra.mxu0 %v253
  %280 = vmatprep.subr.mxu0 0.0
  %281 = vmatpush1.msra.mxu0 %v252
  %282 = vmatprep.subr.mxu0 0.0
  %283 = vmatpush1.msra.mxu0 %v251
  %284 = vmatprep.subr.mxu0 0.0
  %285 = vmatpush1.msra.mxu0 %v250
  %286 = vmatprep.subr.mxu0 0.0
  %287 = vmatpush1.msra.mxu0 %v249
  %288 = vmatprep.subr.mxu0 0.0
  %289 = vmatpush1.msra.mxu0 %v248
  %290 = vmatprep.subr.mxu0 0.0
  %291 = vmatpush1.msra.mxu0 %v247
  %292 = vmatprep.subr.mxu0 0.0
  %293 = vmatpush1.msra.mxu0 %v246
  %294 = vmatprep.subr.mxu0 0.0
  %295 = vmatpush2.msra.mxu0 0.0
  %296 = vmatprep.subr.mxu0 0.0
  %297 = vmatpush2.msra.mxu0 0.0
  %298 = vmatprep.subr.mxu0 0.0
  %299 = vmatpush2.msra.mxu0 0.0
  %300 = vmatprep.subr.mxu0 0.0
  %301 = vmatpush2.msra.mxu0 0.0
  %302 = vmatprep.subr.mxu0 0.0
  %303 = vmatpush2.msra.mxu0 0.0
  %304 = vmatprep.subr.mxu0 0.0
  %305 = vmatpush2.msra.mxu0 0.0
  %306 = vmatprep.subr.mxu0 0.0
  %307 = vmatpush2.msra.mxu0 0.0
  %308 = vmatprep.subr.mxu0 0.0
  %309 = vmatpush2.msra.mxu0 0.0
  %310 = vmatprep.subr.mxu0 0.0
  %311 = vmatpush2.msra.mxu0 0.0
  %312 = vmatprep.subr.mxu0 0.0
  %313 = vmatpush2.msra.mxu0 0.0
  %314 = vmatprep.subr.mxu0 0.0
  %315 = vmatpush2.msra.mxu0 0.0
  %316 = vmatprep.subr.mxu0 0.0
  %317 = vmatpush2.msra.mxu0 0.0
  %318 = vmatprep.subr.mxu0 0.0
  %319 = vmatpush2.msra.mxu0 0.0
  %320 = vmatprep.subr.mxu0 0.0
  %321 = vmatpush2.msra.mxu0 0.0
  %322 = vmatprep.subr.mxu0 0.0
  %323 = vmatpush2.msra.mxu0 0.0
  %324 = vmatprep.subr.mxu0 0.0
  %325 = vmatpush2.msra.mxu0 0.0
  %326 = vmatprep.mubr.f32.mxu0 0.0
  %327 = vmatmul.mubr.f32.gmra.mxu0 %v184
  %v328 = vpop.f32.mrf.mxu0
  %v329 = vadd.f32 0.0, %v328
  %v330 = vpop.f32.mrf.mxu0
  %331 = vmatprep.mubr.f32.mxu0 0.0
  %332 = vmatmul.mubr.f32.gmra.mxu0 %v187
  %v333 = vpop.f32.mrf.mxu0
  %v334 = vadd.f32 0.0, %v333
  %v335 = vpop.f32.mrf.mxu0
  %336 = vmatprep.mubr.f32.mxu0 0.0
  %337 = vmatmul.mubr.f32.gmra.mxu0 %v192
  %v338 = vpop.f32.mrf.mxu0
  %v339 = vadd.f32 0.0, %v338
  %v340 = vpop.f32.mrf.mxu0
  %341 = vmatprep.mubr.f32.mxu0 0.0
  %342 = vmatmul.mubr.f32.gmra.mxu0 %v195
  %v343 = vpop.f32.mrf.mxu0
  %v344 = vadd.f32 0.0, %v343
  %v345 = vpop.f32.mrf.mxu0
  %346 = vmatprep.mubr.f32.mxu0 0.0
  %347 = vmatmul.mubr.f32.gmra.mxu0 %v200
  %v348 = vpop.f32.mrf.mxu0
  %v349 = vadd.f32 0.0, %v348
  %v350 = vpop.f32.mrf.mxu0
  %351 = vmatprep.mubr.f32.mxu0 0.0
  %352 = vmatmul.mubr.f32.gmra.mxu0 %v203
  %v353 = vpop.f32.mrf.mxu0
  %v354 = vadd.f32 0.0, %v353
  %v355 = vpop.f32.mrf.mxu0
  %356 = vmatprep.mubr.f32.mxu0 0.0
  %357 = vmatmul.mubr.f32.gmra.mxu0 %v208
  %v358 = vpop.f32.mrf.mxu0
  %v359 = vadd.f32 0.0, %v358
  %v360 = vpop.f32.mrf.mxu0
  %361 = vmatprep.mubr.f32.mxu0 0.0
  %362 = vmatmul.mubr.f32.gmra.mxu0 %v211
  %v363 = vpop.f32.mrf.mxu0
  %v364 = vadd.f32 0.0, %v363
  %v365 = vpop.f32.mrf.mxu0
  %366 = vmatprep.mubr.f32.mxu0 0.0
  %367 = vmatmul.mubr.f32.gmra.mxu0 %v216
  %v368 = vpop.f32.mrf.mxu0
  %v369 = vadd.f32 0.0, %v368
  %v370 = vpop.f32.mrf.mxu0
  %371 = vmatprep.mubr.f32.mxu0 0.0
  %372 = vmatmul.mubr.f32.gmra.mxu0 %v219
  %v373 = vpop.f32.mrf.mxu0
  %v374 = vadd.f32 0.0, %v373
  %v375 = vpop.f32.mrf.mxu0
  %376 = vmatprep.mubr.f32.mxu0 0.0
  %377 = vmatmul.mubr.f32.gmra.mxu0 %v224
  %v378 = vpop.f32.mrf.mxu0
  %v379 = vadd.f32 0.0, %v378
  %v380 = vpop.f32.mrf.mxu0
  %381 = vmatprep.mubr.f32.mxu0 0.0
  %382 = vmatmul.mubr.f32.gmra.mxu0 %v227
  %v383 = vpop.f32.mrf.mxu0
  %v384 = vadd.f32 0.0, %v383
  %v385 = vpop.f32.mrf.mxu0
  %386 = vmatprep.mubr.f32.mxu0 0.0
  %387 = vmatmul.mubr.f32.gmra.mxu0 %v232
  %v388 = vpop.f32.mrf.mxu0
  %v389 = vadd.f32 0.0, %v388
  %v390 = vpop.f32.mrf.mxu0
  %391 = vmatprep.mubr.f32.mxu0 0.0
  %392 = vmatmul.mubr.f32.gmra.mxu0 %v235
  %v393 = vpop.f32.mrf.mxu0
  %v394 = vadd.f32 0.0, %v393
  %v395 = vpop.f32.mrf.mxu0
  %396 = vmatprep.mubr.f32.mxu0 0.0
  %397 = vmatmul.mubr.f32.gmra.mxu0 %v240
  %v398 = vpop.f32.mrf.mxu0
  %v399 = vadd.f32 0.0, %v398
  %v400 = vpop.f32.mrf.mxu0
  %401 = vmatprep.mubr.f32.mxu0 0.0
  %402 = vmatmul.mubr.f32.gmra.mxu0 %v243
  %v403 = vpop.f32.mrf.mxu0
  %v404 = vadd.f32 0.0, %v403
  %v405 = vpop.f32.mrf.mxu0
  %406 = vdwg.mxu0
  %v407 = vmul.f32 %v184, %v184
  %v408 = vmul.f32 %v187, %v187
  %v409 = vmul.f32 %v192, %v192
  %v410 = vmul.f32 %v195, %v195
  %v411 = vmul.f32 %v200, %v200
  %v412 = vmul.f32 %v203, %v203
  %v413 = vmul.f32 %v208, %v208
  %v414 = vmul.f32 %v211, %v211
  %v415 = vmul.f32 %v216, %v216
  %v416 = vmul.f32 %v219, %v219
  %v417 = vmul.f32 %v224, %v224
  %v418 = vmul.f32 %v227, %v227
  %v419 = vmul.f32 %v232, %v232
  %v420 = vmul.f32 %v235, %v235
  %v421 = vmul.f32 %v240, %v240
  %v422 = vmul.f32 %v243, %v243
  %423 = vmatprep.subr.mxu0 0.0
  %424 = vmatpush1.msra.mxu0 %v261
  %425 = vmatprep.subr.mxu0 0.0
  %426 = vmatpush1.msra.mxu0 %v260
  %427 = vmatprep.subr.mxu0 0.0
  %428 = vmatpush1.msra.mxu0 %v259
  %429 = vmatprep.subr.mxu0 0.0
  %430 = vmatpush1.msra.mxu0 %v258
  %431 = vmatprep.subr.mxu0 0.0
  %432 = vmatpush1.msra.mxu0 %v257
  %433 = vmatprep.subr.mxu0 0.0
  %434 = vmatpush1.msra.mxu0 %v256
  %435 = vmatprep.subr.mxu0 0.0
  %436 = vmatpush1.msra.mxu0 %v255
  %437 = vmatprep.subr.mxu0 0.0
  %438 = vmatpush1.msra.mxu0 %v254
  %439 = vmatprep.subr.mxu0 0.0
  %440 = vmatpush1.msra.mxu0 %v253
  %441 = vmatprep.subr.mxu0 0.0
  %442 = vmatpush1.msra.mxu0 %v252
  %443 = vmatprep.subr.mxu0 0.0
  %444 = vmatpush1.msra.mxu0 %v251
  %445 = vmatprep.subr.mxu0 0.0
  %446 = vmatpush1.msra.mxu0 %v250
  %447 = vmatprep.subr.mxu0 0.0
  %448 = vmatpush1.msra.mxu0 %v249
  %449 = vmatprep.subr.mxu0 0.0
  %450 = vmatpush1.msra.mxu0 %v248
  %451 = vmatprep.subr.mxu0 0.0
  %452 = vmatpush1.msra.mxu0 %v247
  %453 = vmatprep.subr.mxu0 0.0
  %454 = vmatpush1.msra.mxu0 %v246
  %455 = vmatprep.subr.mxu0 0.0
  %456 = vmatpush2.msra.mxu0 0.0
  %457 = vmatprep.subr.mxu0 0.0
  %458 = vmatpush2.msra.mxu0 0.0
  %459 = vmatprep.subr.mxu0 0.0
  %460 = vmatpush2.msra.mxu0 0.0
  %461 = vmatprep.subr.mxu0 0.0
  %462 = vmatpush2.msra.mxu0 0.0
  %463 = vmatprep.subr.mxu0 0.0
  %464 = vmatpush2.msra.mxu0 0.0
  %465 = vmatprep.subr.mxu0 0.0
  %466 = vmatpush2.msra.mxu0 0.0
  %467 = vmatprep.subr.mxu0 0.0
  %468 = vmatpush2.msra.mxu0 0.0
  %469 = vmatprep.subr.mxu0 0.0
  %470 = vmatpush2.msra.mxu0 0.0
  %471 = vmatprep.subr.mxu0 0.0
  %472 = vmatpush2.msra.mxu0 0.0
  %473 = vmatprep.subr.mxu0 0.0
  %474 = vmatpush2.msra.mxu0 0.0
  %475 = vmatprep.subr.mxu0 0.0
  %476 = vmatpush2.msra.mxu0 0.0
  %477 = vmatprep.subr.mxu0 0.0
  %478 = vmatpush2.msra.mxu0 0.0
  %479 = vmatprep.subr.mxu0 0.0
  %480 = vmatpush2.msra.mxu0 0.0
  %481 = vmatprep.subr.mxu0 0.0
  %482 = vmatpush2.msra.mxu0 0.0
  %483 = vmatprep.subr.mxu0 0.0
  %484 = vmatpush2.msra.mxu0 0.0
  %485 = vmatprep.subr.mxu0 0.0
  %486 = vmatpush2.msra.mxu0 0.0
  %487 = vmatprep.mubr.f32.mxu0 0.0
  %488 = vmatmul.mubr.f32.gmra.mxu0 %v407
  %v489 = vpop.f32.mrf.mxu0
  %v490 = vadd.f32 0.0, %v489
  %v491 = vpop.f32.mrf.mxu0
  %492 = vmatprep.mubr.f32.mxu0 0.0
  %493 = vmatmul.mubr.f32.gmra.mxu0 %v408
  %v494 = vpop.f32.mrf.mxu0
  %v495 = vadd.f32 0.0, %v494
  %v496 = vpop.f32.mrf.mxu0
  %497 = vmatprep.mubr.f32.mxu0 0.0
  %498 = vmatmul.mubr.f32.gmra.mxu0 %v409
  %v499 = vpop.f32.mrf.mxu0
  %v500 = vadd.f32 0.0, %v499
  %v501 = vpop.f32.mrf.mxu0
  %502 = vmatprep.mubr.f32.mxu0 0.0
  %503 = vmatmul.mubr.f32.gmra.mxu0 %v410
  %v504 = vpop.f32.mrf.mxu0
  %v505 = vadd.f32 0.0, %v504
  %v506 = vpop.f32.mrf.mxu0
  %507 = vmatprep.mubr.f32.mxu0 0.0
  %508 = vmatmul.mubr.f32.gmra.mxu0 %v411
  %v509 = vpop.f32.mrf.mxu0
  %v510 = vadd.f32 0.0, %v509
  %v511 = vpop.f32.mrf.mxu0
  %512 = vmatprep.mubr.f32.mxu0 0.0
  %513 = vmatmul.mubr.f32.gmra.mxu0 %v412
  %v514 = vpop.f32.mrf.mxu0
  %v515 = vadd.f32 0.0, %v514
  %v516 = vpop.f32.mrf.mxu0
  %517 = vmatprep.mubr.f32.mxu0 0.0
  %518 = vmatmul.mubr.f32.gmra.mxu0 %v413
  %v519 = vpop.f32.mrf.mxu0
  %v520 = vadd.f32 0.0, %v519
  %v521 = vpop.f32.mrf.mxu0
  %522 = vmatprep.mubr.f32.mxu0 0.0
  %523 = vmatmul.mubr.f32.gmra.mxu0 %v414
  %v524 = vpop.f32.mrf.mxu0
  %v525 = vadd.f32 0.0, %v524
  %v526 = vpop.f32.mrf.mxu0
  %527 = vmatprep.mubr.f32.mxu0 0.0
  %528 = vmatmul.mubr.f32.gmra.mxu0 %v415
  %v529 = vpop.f32.mrf.mxu0
  %v530 = vadd.f32 0.0, %v529
  %v531 = vpop.f32.mrf.mxu0
  %532 = vmatprep.mubr.f32.mxu0 0.0
  %533 = vmatmul.mubr.f32.gmra.mxu0 %v416
  %v534 = vpop.f32.mrf.mxu0
  %v535 = vadd.f32 0.0, %v534
  %v536 = vpop.f32.mrf.mxu0
  %537 = vmatprep.mubr.f32.mxu0 0.0
  %538 = vmatmul.mubr.f32.gmra.mxu0 %v417
  %v539 = vpop.f32.mrf.mxu0
  %v540 = vadd.f32 0.0, %v539
  %v541 = vpop.f32.mrf.mxu0
  %542 = vmatprep.mubr.f32.mxu0 0.0
  %543 = vmatmul.mubr.f32.gmra.mxu0 %v418
  %v544 = vpop.f32.mrf.mxu0
  %v545 = vadd.f32 0.0, %v544
  %v546 = vpop.f32.mrf.mxu0
  %547 = vmatprep.mubr.f32.mxu0 0.0
  %548 = vmatmul.mubr.f32.gmra.mxu0 %v419
  %v549 = vpop.f32.mrf.mxu0
  %v550 = vadd.f32 0.0, %v549
  %v551 = vpop.f32.mrf.mxu0
  %552 = vmatprep.mubr.f32.mxu0 0.0
  %553 = vmatmul.mubr.f32.gmra.mxu0 %v420
  %v554 = vpop.f32.mrf.mxu0
  %v555 = vadd.f32 0.0, %v554
  %v556 = vpop.f32.mrf.mxu0
  %557 = vmatprep.mubr.f32.mxu0 0.0
  %558 = vmatmul.mubr.f32.gmra.mxu0 %v421
  %v559 = vpop.f32.mrf.mxu0
  %v560 = vadd.f32 0.0, %v559
  %v561 = vpop.f32.mrf.mxu0
  %562 = vmatprep.mubr.f32.mxu0 0.0
  %563 = vmatmul.mubr.f32.gmra.mxu0 %v422
  %v564 = vpop.f32.mrf.mxu0
  %v565 = vadd.f32 0.0, %v564
  %v566 = vpop.f32.mrf.mxu0
  %567 = vdwg.mxu0
  %v568 = vadd.f32 %v329, %v334
  %v569 = vadd.f32 %v568, %v339
  %v570 = vadd.f32 %v569, %v344
  %v571 = vadd.f32 %v570, %v349
  %v572 = vadd.f32 %v571, %v354
  %v573 = vadd.f32 %v572, %v359
  %v574 = vadd.f32 %v573, %v364
  %v575 = vadd.f32 %v574, %v369
  %v576 = vadd.f32 %v575, %v374
  %v577 = vadd.f32 %v576, %v379
  %v578 = vadd.f32 %v577, %v384
  %v579 = vadd.f32 %v578, %v389
  %v580 = vadd.f32 %v579, %v394
  %v581 = vadd.f32 %v580, %v399
  %v582 = vadd.f32 %v581, %v404
  %v583 = vrot.slane %v582, 4
  %v584 = vadd.f32 %v582, %v583
  %v585 = vrot.slane %v584, 2
  %v586 = vadd.f32 %v584, %v585
  %v587 = vrot.slane %v586, 1
  %v588 = vadd.f32 %v586, %v587
  %v589 = vmul.f32 %v588, 0.001953125
  %v590 = vadd.f32 %v490, %v495
  %v591 = vadd.f32 %v590, %v500
  %v592 = vadd.f32 %v591, %v505
  %v593 = vadd.f32 %v592, %v510
  %v594 = vadd.f32 %v593, %v515
  %v595 = vadd.f32 %v594, %v520
  %v596 = vadd.f32 %v595, %v525
  %v597 = vadd.f32 %v596, %v530
  %v598 = vadd.f32 %v597, %v535
  %v599 = vadd.f32 %v598, %v540
  %v600 = vadd.f32 %v599, %v545
  %v601 = vadd.f32 %v600, %v550
  %v602 = vadd.f32 %v601, %v555
  %v603 = vadd.f32 %v602, %v560
  %v604 = vadd.f32 %v603, %v565
  %v605 = vrot.slane %v604, 4
  %v606 = vadd.f32 %v604, %v605
  %v607 = vrot.slane %v606, 2
  %v608 = vadd.f32 %v606, %v607
  %v609 = vrot.slane %v608, 1
  %v610 = vadd.f32 %v608, %v609
  %v611 = vmul.f32 %v610, 0.001953125
  %v612 = vmul.f32 %v589, %v589
  %v613 = vsub.f32 %v611, %v612
  %v614 = vld [vmem:[%s3] sm:$0x1]
  %v615 = vadd.f32 %v613, 1e-05
  %v616 = vrsqrt.pop %v615
  %v617 = vmul.f32 %v614, %v616
  %v618 = vld [vmem:[%s4] sm:$0x1]
  %v619 = vmul.f32 %v589, %v617
  %v620 = vsub.f32 %v618, %v619
  %v622 = vlaneseq
  %v623 = vshrl.u32 %v622, 7
  %v624 = vsub.s32 0, %v623
  %v625 = vrot.slane %v617, %v624
  %v627 = vmul.f32 %v184, %v625
  %v628 = vmul.f32 %v187, %v625
  %v629 = vmul.f32 %v192, %v625
  %v630 = vmul.f32 %v195, %v625
  %v631 = vmul.f32 %v200, %v625
  %v632 = vmul.f32 %v203, %v625
  %v633 = vmul.f32 %v208, %v625
  %v634 = vmul.f32 %v211, %v625
  %v635 = vmul.f32 %v216, %v625
  %v636 = vmul.f32 %v219, %v625
  %v637 = vmul.f32 %v224, %v625
  %v638 = vmul.f32 %v227, %v625
  %v639 = vmul.f32 %v232, %v625
  %v640 = vmul.f32 %v235, %v625
  %v641 = vmul.f32 %v240, %v625
  %v642 = vmul.f32 %v243, %v625
  %v644 = vlaneseq
  %v645 = vshrl.u32 %v644, 7
  %v646 = vsub.s32 0, %v645
  %v647 = vrot.slane %v620, %v646
  %v649 = vadd.f32 %v627, %v647
  %v650 = vadd.f32 %v628, %v647
  %v651 = vadd.f32 %v629, %v647
  %v652 = vadd.f32 %v630, %v647
  %v653 = vadd.f32 %v631, %v647
  %v654 = vadd.f32 %v632, %v647
  %v655 = vadd.f32 %v633, %v647
  %v656 = vadd.f32 %v634, %v647
  %v657 = vadd.f32 %v635, %v647
  %v658 = vadd.f32 %v636, %v647
  %v659 = vadd.f32 %v637, %v647
  %v660 = vadd.f32 %v638, %v647
  %v661 = vadd.f32 %v639, %v647
  %v662 = vadd.f32 %v640, %v647
  %v663 = vadd.f32 %v641, %v647
  %v664 = vadd.f32 %v642, %v647
  %v665 = vmax.f32 %v649, 0.0
  %v666 = vmax.f32 %v650, 0.0
  %v667 = vmax.f32 %v651, 0.0
  %v668 = vmax.f32 %v652, 0.0
  %v669 = vmax.f32 %v653, 0.0
  %v670 = vmax.f32 %v654, 0.0
  %v671 = vmax.f32 %v655, 0.0
  %v672 = vmax.f32 %v656, 0.0
  %v673 = vmax.f32 %v657, 0.0
  %v674 = vmax.f32 %v658, 0.0
  %v675 = vmax.f32 %v659, 0.0
  %v676 = vmax.f32 %v660, 0.0
  %v677 = vmax.f32 %v661, 0.0
  %v678 = vmax.f32 %v662, 0.0
  %v679 = vmax.f32 %v663, 0.0
  %v680 = vmax.f32 %v664, 0.0
  %681 = vst [vmem:[%s5] sm:$0xff] %v665
  %682 = vst [vmem:[%s5 + $0x8] sm:$0xff] %v666
  %683 = vst [vmem:[%s5 + $0x10] sm:$0xff] %v667
  %684 = vst [vmem:[%s5 + $0x18] sm:$0xff] %v668
  %685 = vst [vmem:[%s5 + $0x20] sm:$0xff] %v669
  %686 = vst [vmem:[%s5 + $0x28] sm:$0xff] %v670
  %687 = vst [vmem:[%s5 + $0x30] sm:$0xff] %v671
  %688 = vst [vmem:[%s5 + $0x38] sm:$0xff] %v672
  %689 = vst [vmem:[%s5 + $0x40] sm:$0xff] %v673
  %690 = vst [vmem:[%s5 + $0x48] sm:$0xff] %v674
  %691 = vst [vmem:[%s5 + $0x50] sm:$0xff] %v675
  %692 = vst [vmem:[%s5 + $0x58] sm:$0xff] %v676
  %693 = vst [vmem:[%s5 + $0x60] sm:$0xff] %v677
  %694 = vst [vmem:[%s5 + $0x68] sm:$0xff] %v678
  %695 = vst [vmem:[%s5 + $0x70] sm:$0xff] %v679
  %696 = vst [vmem:[%s5 + $0x78] sm:$0xff] %v680
  // Predicated region
  $region22: #{unet_forward.9} parent=0 // pred_check
    _
  $region23: #{unet_forward.9} parent=0 // pred_check_branch
    %698 = sbr.rel (0) target = $region25
  $region24: #{unet_forward.9} parent=0 // pred_region
    _
  $region25: #{unet_forward.9} parent=0 // pred_fallthru
    _
  // Predicated region
  $region26: #{unet_forward.9} parent=0 // pred_check
    _
  $region27: #{unet_forward.9} parent=0 // pred_check_branch
    %700 = sbr.rel (0) target = $region29
  $region28: #{unet_forward.9} parent=0 // pred_region
    _
  $region29: #{unet_forward.9} parent=0 // pred_fallthru
    _

</llo_original>
